<compile_context>
chip_gen: v7x
topology: tpu7x:2x2x1
jax: 0.10.0
libtpu: 0.0.40
codegen_flags: <defaults>
</compile_context>

<pallas_src>
import functools

import jax
import jax.numpy as jnp
from jax import lax
from jax.experimental import pallas as pl
from jax.experimental.pallas import tpu as pltpu

T_IN = 750            # time samples (forced by Linear(736, 2): 32 * 23 = 736)
H_IN = 2              # EEG electrode rows
K1 = 51               # firstconv temporal kernel
K3 = 15               # separableConv temporal kernel
PAD1 = 25             # firstconv time padding
PAD3 = 7              # separableConv time padding
NTAP = K1 + 1         # 52: taps padded to an even count (tap 51 has zero weight)
T_P1 = 187            # floor(750 / 4)  after AvgPool(1,4)
T_P2 = 23             # floor(187 / 8)  after AvgPool(1,8)
BN_EPS = 1e-5
TOL = 2e-2            # bf16 MXU operands, f32 accumulate, vs pure-f32 reference


# ----------------------------------------------------------------------------
# Pallas kernel: forward pass for a block of `bsz` samples.
# ----------------------------------------------------------------------------
def eeg_elu_kernel(xcol_ref, wfd_ref, bfd_ref, p1_ref, w3k_ref, b3_ref,
                   p2_ref, w4r_ref, b4_ref, out_ref,
                   y2_ref, x3_ref, y3_ref, *, bsz):
    wfd = wfd_ref[...]               # (32, 104) bf16  fused conv1*BN1*dw*BN2
    bfd = bfd_ref[...]               # (32, 1)   f32   fused BN shift
    w3k = w3k_ref[...]               # (15, 32, 32) bf16  sepconv taps (BN3 scale folded)
    b3 = b3_ref[...]                 # (32, 1)   f32   BN3 shift

    def elu(v):
        # ELU(alpha=1); the min() clamp keeps the untaken exp branch finite.
        return jnp.where(v > 0, v, jnp.exp(jnp.minimum(v, 0.0)) - 1.0)

    # ---- firstconv + BN1 + depthwiseConv + BN2 + ELU ------------------------
    # One (32,104)@(104,750) MXU dot per sample against the host-built im2col.
    def conv1_body(b, carry):
        row = pl.multiple_of(b * 32, 32)
        acc = jnp.dot(wfd, xcol_ref[b], preferred_element_type=jnp.float32)
        y2_ref[pl.ds(row, 32), :] = elu(acc + bfd).astype(y2_ref.dtype)
        return carry
    lax.fori_loop(0, bsz, conv1_body, 0)
    # Dropout(p=0.25): identity at inference.

    # ---- AvgPool(1,4) (+7-zero halo for separableConv) as one block matmul --
    # (32*bsz, 750) @ (750, 201)
    x3_ref[...] = jnp.dot(y2_ref[...], p1_ref[...],
                          preferred_element_type=jnp.float32).astype(x3_ref.dtype)

    # ---- separableConv (1,15) + BN3 + ELU -----------------------------------
    # 15 accumulating (32,32)@(32,187) dots per sample (no im2col scratch).
    def sep_body(b, carry):
        row = pl.multiple_of(b * 32, 32)
        x3b = x3_ref[pl.ds(row, 32), :]                       # (32, 201) bf16
        acc = jnp.dot(w3k[0], x3b[:, 0:T_P1],
                      preferred_element_type=jnp.float32)
        for k in range(1, K3):
            acc = acc + jnp.dot(w3k[k], x3b[:, k:k + T_P1],
                                preferred_element_type=jnp.float32)
        y3_ref[pl.ds(row, 32), :] = elu(acc + b3).astype(y3_ref.dtype)
        return carry
    lax.fori_loop(0, bsz, sep_body, 0, unroll=2)
    # Dropout(p=0.25): identity at inference.

    # ---- AvgPool(1,8) as matmul, then Linear(736, 2) over the whole block ---
    z = jnp.dot(y3_ref[...], p2_ref[...],
                preferred_element_type=jnp.float32)           # (32*bsz, 23) f32
    zb = z.reshape(bsz, 32, T_P2)
    w4 = w4r_ref[...]                                         # (2, 32, 23) f32
    l0 = jnp.sum(jnp.sum(zb * w4[0][None, :, :], axis=2, keepdims=True),
                 axis=1, keepdims=True).reshape(bsz, 1)
    l1 = jnp.sum(jnp.sum(zb * w4[1][None, :, :], axis=2, keepdims=True),
                 axis=1, keepdims=True).reshape(bsz, 1)
    out_ref[...] = jnp.concatenate([l0, l1], axis=1) + b4_ref[...]


# ----------------------------------------------------------------------------
# Wrapper: host-side folding / im2col, hot path in the kernel.
# ----------------------------------------------------------------------------
def _pick_block(n, block_b):
    if n > block_b:
        return block_b
    if n >= 16:
        # Split small-but-not-tiny batches into two grid steps so v7x's two
        # TensorCores both get work under dimension_semantics=("parallel",).
        return min(block_b, (((n + 1) // 2) + 7) // 8 * 8)
    return n


@functools.partial(jax.jit, static_argnames=("block_b",))
def eeg_elu_forward(x, kp, block_b=32):
    n = x.shape[0]
    bsz = _pick_block(n, block_b)
    n_pad = -(-n // bsz) * bsz

    # Host-side im2col for the fused firstconv/depthwise stage:
    #   xcol[b, 2*k + h, t] = xpad[b, h, t + k],  k in [0, 52), tap 51 zero-weighted.
    xpad = jnp.pad(x[:, 0], ((0, n_pad - n), (0, 0), (PAD1, PAD1 + 1)))
    xcol = jnp.stack([xpad[:, :, k:k + T_IN] for k in range(NTAP)], axis=1)
    xcol = xcol.reshape(n_pad, 2 * NTAP, T_IN).astype(jnp.bfloat16)

    kernel = functools.partial(eeg_elu_kernel, bsz=bsz)
    c2 = lambda i: (0, 0)
    c3 = lambda i: (0, 0, 0)

    out = pl.pallas_call(
        kernel,
        out_shape=jax.ShapeDtypeStruct((n_pad, 2), jnp.float32),
        grid_spec=pltpu.PrefetchScalarGridSpec(
            num_scalar_prefetch=0,
            grid=(n_pad // bsz,),
            in_specs=[
                pl.BlockSpec((bsz, 2 * NTAP, T_IN), lambda i: (i, 0, 0)),  # im2col (bf16)
                pl.BlockSpec((32, 2 * NTAP), c2),                          # fused W (32,104)
                pl.BlockSpec((32, 1), c2),                                 # fused bias
                pl.BlockSpec((T_IN, T_P1 + 2 * PAD3), c2),                 # pool(1,4)+halo
                pl.BlockSpec((K3, 32, 32), c3),                            # sepconv taps
                pl.BlockSpec((32, 1), c2),                                 # BN3 shift
                pl.BlockSpec((T_P1, T_P2), c2),                            # pool(1,8)
                pl.BlockSpec((2, 32, T_P2), c3),                           # W4 reshaped
                pl.BlockSpec((1, 2), c2),                                  # b4
            ],
            out_specs=pl.BlockSpec((bsz, 2), lambda i: (i, 0)),
            scratch_shapes=[
                pltpu.VMEM((bsz * 32, T_IN), jnp.bfloat16),              # y2
                pltpu.VMEM((bsz * 32, T_P1 + 2 * PAD3), jnp.bfloat16),   # x3 (+halo)
                pltpu.VMEM((bsz * 32, T_P1), jnp.bfloat16),              # y3
            ],
        ),
        compiler_params=pltpu.CompilerParams(
            dimension_semantics=("parallel",),
            vmem_limit_bytes=32 * 1024 * 1024,
        ),
    )(xcol, kp["wfd"], kp["bfd"], kp["p1"], kp["w3k"], kp["b3"], kp["p2"],
      kp["w4r"], kp["b4"])
    return out[:n]


# ----------------------------------------------------------------------------
# Deterministic "PyTorch-shaped" parameters.
# ----------------------------------------------------------------------------
def init_params(key):
    ks = jax.random.split(key, 17)
    f32 = jnp.float32
    p = {}
    p["W1"] = 0.1 * jax.random.normal(ks[0], (16, 1, 1, K1), f32)
    p["g1"] = 1.0 + 0.1 * jax.random.normal(ks[1], (16,), f32)
    p["be1"] = 0.1 * jax.random.normal(ks[2], (16,), f32)
    p["m1"] = 0.1 * jax.random.normal(ks[3], (16,), f32)
    p["v1"] = jax.random.uniform(ks[4], (16,), f32, 0.5, 1.5)
    p["W2"] = 0.1 * jax.random.normal(ks[5], (32, 1, 2, 1), f32)
    p["g2"] = 1.0 + 0.1 * jax.random.normal(ks[6], (32,), f32)
    p["be2"] = 0.1 * jax.random.normal(ks[7], (32,), f32)
    p["m2"] = 0.1 * jax.random.normal(ks[8], (32,), f32)
    p["v2"] = jax.random.uniform(ks[9], (32,), f32, 0.5, 1.5)
    p["W3"] = 0.1 * jax.random.normal(ks[10], (32, 32, 1, K3), f32)
    p["g3"] = 1.0 + 0.1 * jax.random.normal(ks[11], (32,), f32)
    p["be3"] = 0.1 * jax.random.normal(ks[12], (32,), f32)
    p["m3"] = 0.1 * jax.random.normal(ks[13], (32,), f32)
    p["v3"] = jax.random.uniform(ks[14], (32,), f32, 0.5, 1.5)
    p["W4"] = 0.05 * jax.random.normal(ks[15], (2, 736), f32)
    p["b4"] = 0.1 * jax.random.normal(ks[16], (2,), f32)
    # Fold BatchNorm (inference) into per-channel scale/shift.
    for i in ("1", "2", "3"):
        s = p["g" + i] / jnp.sqrt(p["v" + i] + BN_EPS)
        p["s" + i] = s
        p["b" + i] = p["be" + i] - p["m" + i] * s
    return p


def prepare_kernel_params(p):
    kp = {}
    w1 = p["W1"][:, 0, 0, :]               # (16, 51)
    w2 = p["W2"][:, 0, :, 0]               # (32, 2)
    grp = jnp.arange(32) // 2
    s1, b1 = p["s1"], p["b1"]
    s2, b2 = p["s2"], p["b2"]
    # Fused conv1 * BN1-scale * depthwise * BN2-scale weight, indexed [c, k, h].
    wf = (s2[:, None, None] * w2[:, None, :]
          * s1[grp][:, None, None] * w1[grp][:, :, None])          # (32, 51, 2)
    wf = jnp.pad(wf, ((0, 0), (0, 1), (0, 0)))                     # (32, 52, 2)
    # Flattened column index = 2*k + h, matching the host im2col row order.
    kp["wfd"] = wf.reshape(32, 2 * NTAP).astype(jnp.bfloat16)      # (32, 104)
    kp["bfd"] = (s2 * (w2[:, 0] + w2[:, 1]) * b1[grp] + b2)[:, None]  # (32, 1) f32
    # AvgPool(1,4) matrix with a 7-zero halo (= separableConv padding) per side.
    kp["p1"] = jnp.zeros((T_IN, T_P1 + 2 * PAD3), jnp.float32).at[
        jnp.arange(T_P1 * 4), PAD3 + jnp.repeat(jnp.arange(T_P1), 4)
    ].set(0.25).astype(jnp.bfloat16)
    # separableConv taps with BN3 scale folded; w3k[k, co, ci].
    w3 = p["W3"][:, :, 0, :]                                        # (32, 32, 15)
    kp["w3k"] = jnp.transpose(p["s3"][:, None, None] * w3,
                              (2, 0, 1)).astype(jnp.bfloat16)       # (15, 32, 32)
    kp["b3"] = p["b3"][:, None]                                     # (32, 1) f32
    # AvgPool(1,8) matrix.
    kp["p2"] = jnp.zeros((T_P1, T_P2), jnp.float32).at[
        jnp.arange(T_P2 * 8), jnp.repeat(jnp.arange(T_P2), 8)
    ].set(0.125).astype(jnp.bfloat16)
    kp["w4r"] = p["W4"].reshape(2, 32, T_P2)    # flatten order is c*23 + t
    kp["b4"] = p["b4"][None, :]                 # (1, 2)
    return kp


# ----------------------------------------------------------------------------
# Pure-JAX f32 reference (mirrors the PyTorch forward, inference mode).
# ----------------------------------------------------------------------------
def reference_forward(x, p):
    dn = ("NCHW", "OIHW", "NCHW")
    y = lax.conv_general_dilated(x, p["W1"], (1, 1), ((0, 0), (PAD1, PAD1)),
                                 dimension_numbers=dn)
    y = y * p["s1"][None, :, None, None] + p["b1"][None, :, None, None]
    y = lax.conv_general_dilated(y, p["W2"], (1, 1), ((0, 0), (0, 0)),
                                 dimension_numbers=dn, feature_group_count=16)
    y = y * p["s2"][None, :, None, None] + p["b2"][None, :, None, None]
    y = jnp.where(y > 0, y, jnp.exp(y) - 1.0)
    n = y.shape[0]
    y = y[..., :T_P1 * 4].reshape(n, 32, 1, T_P1, 4).mean(-1)
    y = lax.conv_general_dilated(y, p["W3"], (1, 1), ((0, 0), (PAD3, PAD3)),
                                 dimension_numbers=dn)
    y = y * p["s3"][None, :, None, None] + p["b3"][None, :, None, None]
    y = jnp.where(y > 0, y, jnp.exp(y) - 1.0)
    y = y[..., :T_P2 * 8].reshape(n, 32, 1, T_P2, 8).mean(-1)
    y = y.reshape(n, -1)
    return y @ p["W4"].T + p["b4"]


def _check(x, params, kparams):
    out = jax.block_until_ready(eeg_elu_forward(x, kparams))
    ref = reference_forward(x, params)
    err = float(jnp.max(jnp.abs(out - ref)))
    ok = (out.shape == (x.shape[0], 2)
          and bool(jnp.all(jnp.isfinite(out))) and err < TOL)
    return ok, err, out.shape


if __name__ == "__main__":
    key = jax.random.PRNGKey(0)
    kx, kparam = jax.random.split(key)
    params = init_params(kparam)
    kparams = prepare_kernel_params(params)

    # Height=2 and time=750 are dictated by the (2,1) depthwise kernel and
    # Linear(736, 2).  Three batch sizes exercise: a tiny single-block grid,
    # the split-into-two-blocks path, and the bsz=32 multi-step padded path.
    results = []
    for i, n in enumerate((2, 24, 40)):
        xi = jax.random.normal(jax.random.fold_in(kx, i), (n, 1, H_IN, T_IN),
                               jnp.float32)
        results.append(_check(xi, params, kparams))

    if not all(r[0] for r in results):
        raise SystemExit("FAILED: " + "; ".join(
            f"shape={r[2]} err={r[1]:.4f}" for r in results))
    print("KERNEL_OK")
</pallas_src>

<mosaic_0001>
module attributes {stable_mosaic.version = 11 : i64} {
  func.func @eeg_elu_kernel(%arg0: i32, %arg1: memref<2x104x750xbf16, #tpu.memory_space<vmem>>, %arg2: memref<32x104xbf16, #tpu.memory_space<vmem>>, %arg3: memref<32x1xf32, #tpu.memory_space<vmem>>, %arg4: memref<750x201xbf16, #tpu.memory_space<vmem>>, %arg5: memref<15x32x32xbf16, #tpu.memory_space<vmem>>, %arg6: memref<32x1xf32, #tpu.memory_space<vmem>>, %arg7: memref<187x23xbf16, #tpu.memory_space<vmem>>, %arg8: memref<2x32x23xf32, #tpu.memory_space<vmem>>, %arg9: memref<1x2xf32, #tpu.memory_space<vmem>>, %arg10: memref<2x2xf32, #tpu.memory_space<vmem>>, %arg11: memref<64x750xbf16, #tpu.memory_space<vmem>>, %arg12: memref<64x201xbf16, #tpu.memory_space<vmem>>, %arg13: memref<64x187xbf16, #tpu.memory_space<vmem>>) attributes {dimension_semantics = [#tpu.dimension_semantics<parallel>], iteration_bounds = array<i64: 1>, scalar_prefetch = 0 : i64, scratch_operands = 3 : i64, tpu.core_type = #tpu.core_type<tc>, window_params = [{transform_indices = @transform_0, window_bounds = array<i64: 2, 104, 750>}, {pipeline_mode = #tpu.pipeline_mode<synchronous>, transform_indices = @transform_1, window_bounds = array<i64: 32, 104>}, {pipeline_mode = #tpu.pipeline_mode<synchronous>, transform_indices = @transform_2, window_bounds = array<i64: 32, 1>}, {pipeline_mode = #tpu.pipeline_mode<synchronous>, transform_indices = @transform_3, window_bounds = array<i64: 750, 201>}, {pipeline_mode = #tpu.pipeline_mode<synchronous>, transform_indices = @transform_4, window_bounds = array<i64: 15, 32, 32>}, {pipeline_mode = #tpu.pipeline_mode<synchronous>, transform_indices = @transform_5, window_bounds = array<i64: 32, 1>}, {pipeline_mode = #tpu.pipeline_mode<synchronous>, transform_indices = @transform_6, window_bounds = array<i64: 187, 23>}, {pipeline_mode = #tpu.pipeline_mode<synchronous>, transform_indices = @transform_7, window_bounds = array<i64: 2, 32, 23>}, {pipeline_mode = #tpu.pipeline_mode<synchronous>, transform_indices = @transform_8, window_bounds = array<i64: 1, 2>}, {transform_indices = @transform_9, window_bounds = array<i64: 2, 2>}]} {
    %c0 = arith.constant 0 : index
    %c0_0 = arith.constant 0 : index
    %0 = vector.load %arg2[%c0, %c0_0] : memref<32x104xbf16, #tpu.memory_space<vmem>>, vector<32x104xbf16>
    %c0_1 = arith.constant 0 : index
    %c0_2 = arith.constant 0 : index
    %1 = vector.load %arg3[%c0_1, %c0_2] : memref<32x1xf32, #tpu.memory_space<vmem>>, vector<32x1xf32>
    %c0_3 = arith.constant 0 : index
    %c0_4 = arith.constant 0 : index
    %c0_5 = arith.constant 0 : index
    %2 = vector.load %arg5[%c0_3, %c0_4, %c0_5] : memref<15x32x32xbf16, #tpu.memory_space<vmem>>, vector<15x32x32xbf16>
    %c0_6 = arith.constant 0 : index
    %c0_7 = arith.constant 0 : index
    %3 = vector.load %arg6[%c0_6, %c0_7] : memref<32x1xf32, #tpu.memory_space<vmem>>, vector<32x1xf32>
    %c0_i32 = arith.constant 0 : i32
    %c2_i32 = arith.constant 2 : i32
    %4 = arith.addi %c0_i32, %c2_i32 : i32
    %c1_i32 = arith.constant 1 : i32
    scf.for %arg14 = %c0_i32 to %4 step %c1_i32  : i32 {
      %c32_i32_75 = arith.constant 32 : i32
      %222 = arith.muli %arg14, %c32_i32_75 : i32
      %223 = tpu.assume_multiple %222, 32 : i32
      %224 = arith.index_cast %arg14 : i32 to index
      %c0_76 = arith.constant 0 : index
      %c0_77 = arith.constant 0 : index
      %225 = vector.load %arg1[%224, %c0_76, %c0_77] : memref<2x104x750xbf16, #tpu.memory_space<vmem>>, vector<1x104x750xbf16>
      %226 = vector.shape_cast %225 : vector<1x104x750xbf16> to vector<104x750xbf16>
      %cst_78 = arith.constant dense<0.000000e+00> : vector<32x750xf32>
      %227 = tpu.matmul %0, %226, %cst_78 {dimension_numbers = #tpu.dot_dimension_numbers<[1], [0], [0], [1], [0, 0, 1, 1], [], []>} : vector<32x104xbf16>, vector<104x750xbf16>, vector<32x750xf32> -> vector<32x750xf32>
      %228 = vector.broadcast %1 : vector<32x1xf32> to vector<32x750xf32>
      %229 = arith.addf %227, %228 : vector<32x750xf32>
      %cst_79 = arith.constant 0.000000e+00 : f32
      %230 = vector.broadcast %cst_79 : f32 to vector<32x750xf32>
      %231 = arith.cmpf ogt, %229, %230 : vector<32x750xf32>
      %cst_80 = arith.constant 0.000000e+00 : f32
      %232 = vector.broadcast %cst_80 : f32 to vector<32x750xf32>
      %233 = arith.minimumf %229, %232 : vector<32x750xf32>
      %234 = math.exp %233 : vector<32x750xf32>
      %cst_81 = arith.constant 1.000000e+00 : f32
      %235 = vector.broadcast %cst_81 : f32 to vector<32x750xf32>
      %236 = arith.subf %234, %235 : vector<32x750xf32>
      %237 = arith.select %231, %229, %236 : vector<32x750xi1>, vector<32x750xf32>
      %238 = arith.truncf %237 : vector<32x750xf32> to vector<32x750xbf16>
      %239 = arith.index_cast %223 : i32 to index
      %c0_82 = arith.constant 0 : index
      %240 = vector.load %arg11[%239, %c0_82] : memref<64x750xbf16, #tpu.memory_space<vmem>>, vector<32x750xbf16>
      tpu.vector_store %arg11[%239, %c0_82], %238 {strides = array<i32>} : memref<64x750xbf16, #tpu.memory_space<vmem>>, vector<32x750xbf16>,
    }
    %c2_i32_8 = arith.constant 2 : i32
    %c0_9 = arith.constant 0 : index
    %c0_10 = arith.constant 0 : index
    %5 = vector.load %arg11[%c0_9, %c0_10] : memref<64x750xbf16, #tpu.memory_space<vmem>>, vector<64x750xbf16>
    %c0_11 = arith.constant 0 : index
    %c0_12 = arith.constant 0 : index
    %6 = vector.load %arg4[%c0_11, %c0_12] : memref<750x201xbf16, #tpu.memory_space<vmem>>, vector<750x201xbf16>
    %cst = arith.constant dense<0.000000e+00> : vector<64x201xf32>
    %7 = tpu.matmul %5, %6, %cst {dimension_numbers = #tpu.dot_dimension_numbers<[1], [0], [0], [1], [0, 0, 1, 1], [], []>} : vector<64x750xbf16>, vector<750x201xbf16>, vector<64x201xf32> -> vector<64x201xf32>
    %8 = arith.truncf %7 : vector<64x201xf32> to vector<64x201xbf16>
    %c0_13 = arith.constant 0 : index
    %c0_14 = arith.constant 0 : index
    %9 = vector.load %arg12[%c0_13, %c0_14] : memref<64x201xbf16, #tpu.memory_space<vmem>>, vector<64x201xbf16>
    tpu.vector_store %arg12[%c0_13, %c0_14], %8 {strides = array<i32>} : memref<64x201xbf16, #tpu.memory_space<vmem>>, vector<64x201xbf16>,
    %c0_i32_15 = arith.constant 0 : i32
    %c32_i32 = arith.constant 32 : i32
    %10 = arith.muli %c0_i32_15, %c32_i32 : i32
    %11 = tpu.assume_multiple %10, 32 : i32
    %12 = arith.index_cast %11 : i32 to index
    %c0_16 = arith.constant 0 : index
    %13 = vector.load %arg12[%12, %c0_16] : memref<64x201xbf16, #tpu.memory_space<vmem>>, vector<32x201xbf16>
    %14 = vector.extract_strided_slice %2 {offsets = [0, 0, 0], sizes = [1, 32, 32], strides = [1, 1, 1]} : vector<15x32x32xbf16> to vector<1x32x32xbf16>
    %15 = vector.shape_cast %14 : vector<1x32x32xbf16> to vector<32x32xbf16>
    %16 = vector.extract_strided_slice %13 {offsets = [0, 0], sizes = [32, 187], strides = [1, 1]} : vector<32x201xbf16> to vector<32x187xbf16>
    %cst_17 = arith.constant dense<0.000000e+00> : vector<32x187xf32>
    %17 = tpu.matmul %15, %16, %cst_17 {dimension_numbers = #tpu.dot_dimension_numbers<[1], [0], [0], [1], [0, 0, 1, 1], [], []>} : vector<32x32xbf16>, vector<32x187xbf16>, vector<32x187xf32> -> vector<32x187xf32>
    %18 = vector.extract_strided_slice %2 {offsets = [1, 0, 0], sizes = [1, 32, 32], strides = [1, 1, 1]} : vector<15x32x32xbf16> to vector<1x32x32xbf16>
    %19 = vector.shape_cast %18 : vector<1x32x32xbf16> to vector<32x32xbf16>
    %20 = vector.extract_strided_slice %13 {offsets = [0, 1], sizes = [32, 187], strides = [1, 1]} : vector<32x201xbf16> to vector<32x187xbf16>
    %cst_18 = arith.constant dense<0.000000e+00> : vector<32x187xf32>
    %21 = tpu.matmul %19, %20, %cst_18 {dimension_numbers = #tpu.dot_dimension_numbers<[1], [0], [0], [1], [0, 0, 1, 1], [], []>} : vector<32x32xbf16>, vector<32x187xbf16>, vector<32x187xf32> -> vector<32x187xf32>
    %22 = arith.addf %17, %21 : vector<32x187xf32>
    %23 = vector.extract_strided_slice %2 {offsets = [2, 0, 0], sizes = [1, 32, 32], strides = [1, 1, 1]} : vector<15x32x32xbf16> to vector<1x32x32xbf16>
    %24 = vector.shape_cast %23 : vector<1x32x32xbf16> to vector<32x32xbf16>
    %25 = vector.extract_strided_slice %13 {offsets = [0, 2], sizes = [32, 187], strides = [1, 1]} : vector<32x201xbf16> to vector<32x187xbf16>
    %cst_19 = arith.constant dense<0.000000e+00> : vector<32x187xf32>
    %26 = tpu.matmul %24, %25, %cst_19 {dimension_numbers = #tpu.dot_dimension_numbers<[1], [0], [0], [1], [0, 0, 1, 1], [], []>} : vector<32x32xbf16>, vector<32x187xbf16>, vector<32x187xf32> -> vector<32x187xf32>
    %27 = arith.addf %22, %26 : vector<32x187xf32>
    %28 = vector.extract_strided_slice %2 {offsets = [3, 0, 0], sizes = [1, 32, 32], strides = [1, 1, 1]} : vector<15x32x32xbf16> to vector<1x32x32xbf16>
    %29 = vector.shape_cast %28 : vector<1x32x32xbf16> to vector<32x32xbf16>
    %30 = vector.extract_strided_slice %13 {offsets = [0, 3], sizes = [32, 187], strides = [1, 1]} : vector<32x201xbf16> to vector<32x187xbf16>
    %cst_20 = arith.constant dense<0.000000e+00> : vector<32x187xf32>
    %31 = tpu.matmul %29, %30, %cst_20 {dimension_numbers = #tpu.dot_dimension_numbers<[1], [0], [0], [1], [0, 0, 1, 1], [], []>} : vector<32x32xbf16>, vector<32x187xbf16>, vector<32x187xf32> -> vector<32x187xf32>
    %32 = arith.addf %27, %31 : vector<32x187xf32>
    %33 = vector.extract_strided_slice %2 {offsets = [4, 0, 0], sizes = [1, 32, 32], strides = [1, 1, 1]} : vector<15x32x32xbf16> to vector<1x32x32xbf16>
    %34 = vector.shape_cast %33 : vector<1x32x32xbf16> to vector<32x32xbf16>
    %35 = vector.extract_strided_slice %13 {offsets = [0, 4], sizes = [32, 187], strides = [1, 1]} : vector<32x201xbf16> to vector<32x187xbf16>
    %cst_21 = arith.constant dense<0.000000e+00> : vector<32x187xf32>
    %36 = tpu.matmul %34, %35, %cst_21 {dimension_numbers = #tpu.dot_dimension_numbers<[1], [0], [0], [1], [0, 0, 1, 1], [], []>} : vector<32x32xbf16>, vector<32x187xbf16>, vector<32x187xf32> -> vector<32x187xf32>
    %37 = arith.addf %32, %36 : vector<32x187xf32>
    %38 = vector.extract_strided_slice %2 {offsets = [5, 0, 0], sizes = [1, 32, 32], strides = [1, 1, 1]} : vector<15x32x32xbf16> to vector<1x32x32xbf16>
    %39 = vector.shape_cast %38 : vector<1x32x32xbf16> to vector<32x32xbf16>
    %40 = vector.extract_strided_slice %13 {offsets = [0, 5], sizes = [32, 187], strides = [1, 1]} : vector<32x201xbf16> to vector<32x187xbf16>
    %cst_22 = arith.constant dense<0.000000e+00> : vector<32x187xf32>
    %41 = tpu.matmul %39, %40, %cst_22 {dimension_numbers = #tpu.dot_dimension_numbers<[1], [0], [0], [1], [0, 0, 1, 1], [], []>} : vector<32x32xbf16>, vector<32x187xbf16>, vector<32x187xf32> -> vector<32x187xf32>
    %42 = arith.addf %37, %41 : vector<32x187xf32>
    %43 = vector.extract_strided_slice %2 {offsets = [6, 0, 0], sizes = [1, 32, 32], strides = [1, 1, 1]} : vector<15x32x32xbf16> to vector<1x32x32xbf16>
    %44 = vector.shape_cast %43 : vector<1x32x32xbf16> to vector<32x32xbf16>
    %45 = vector.extract_strided_slice %13 {offsets = [0, 6], sizes = [32, 187], strides = [1, 1]} : vector<32x201xbf16> to vector<32x187xbf16>
    %cst_23 = arith.constant dense<0.000000e+00> : vector<32x187xf32>
    %46 = tpu.matmul %44, %45, %cst_23 {dimension_numbers = #tpu.dot_dimension_numbers<[1], [0], [0], [1], [0, 0, 1, 1], [], []>} : vector<32x32xbf16>, vector<32x187xbf16>, vector<32x187xf32> -> vector<32x187xf32>
    %47 = arith.addf %42, %46 : vector<32x187xf32>
    %48 = vector.extract_strided_slice %2 {offsets = [7, 0, 0], sizes = [1, 32, 32], strides = [1, 1, 1]} : vector<15x32x32xbf16> to vector<1x32x32xbf16>
    %49 = vector.shape_cast %48 : vector<1x32x32xbf16> to vector<32x32xbf16>
    %50 = vector.extract_strided_slice %13 {offsets = [0, 7], sizes = [32, 187], strides = [1, 1]} : vector<32x201xbf16> to vector<32x187xbf16>
    %cst_24 = arith.constant dense<0.000000e+00> : vector<32x187xf32>
    %51 = tpu.matmul %49, %50, %cst_24 {dimension_numbers = #tpu.dot_dimension_numbers<[1], [0], [0], [1], [0, 0, 1, 1], [], []>} : vector<32x32xbf16>, vector<32x187xbf16>, vector<32x187xf32> -> vector<32x187xf32>
    %52 = arith.addf %47, %51 : vector<32x187xf32>
    %53 = vector.extract_strided_slice %2 {offsets = [8, 0, 0], sizes = [1, 32, 32], strides = [1, 1, 1]} : vector<15x32x32xbf16> to vector<1x32x32xbf16>
    %54 = vector.shape_cast %53 : vector<1x32x32xbf16> to vector<32x32xbf16>
    %55 = vector.extract_strided_slice %13 {offsets = [0, 8], sizes = [32, 187], strides = [1, 1]} : vector<32x201xbf16> to vector<32x187xbf16>
    %cst_25 = arith.constant dense<0.000000e+00> : vector<32x187xf32>
    %56 = tpu.matmul %54, %55, %cst_25 {dimension_numbers = #tpu.dot_dimension_numbers<[1], [0], [0], [1], [0, 0, 1, 1], [], []>} : vector<32x32xbf16>, vector<32x187xbf16>, vector<32x187xf32> -> vector<32x187xf32>
    %57 = arith.addf %52, %56 : vector<32x187xf32>
    %58 = vector.extract_strided_slice %2 {offsets = [9, 0, 0], sizes = [1, 32, 32], strides = [1, 1, 1]} : vector<15x32x32xbf16> to vector<1x32x32xbf16>
    %59 = vector.shape_cast %58 : vector<1x32x32xbf16> to vector<32x32xbf16>
    %60 = vector.extract_strided_slice %13 {offsets = [0, 9], sizes = [32, 187], strides = [1, 1]} : vector<32x201xbf16> to vector<32x187xbf16>
    %cst_26 = arith.constant dense<0.000000e+00> : vector<32x187xf32>
    %61 = tpu.matmul %59, %60, %cst_26 {dimension_numbers = #tpu.dot_dimension_numbers<[1], [0], [0], [1], [0, 0, 1, 1], [], []>} : vector<32x32xbf16>, vector<32x187xbf16>, vector<32x187xf32> -> vector<32x187xf32>
    %62 = arith.addf %57, %61 : vector<32x187xf32>
    %63 = vector.extract_strided_slice %2 {offsets = [10, 0, 0], sizes = [1, 32, 32], strides = [1, 1, 1]} : vector<15x32x32xbf16> to vector<1x32x32xbf16>
    %64 = vector.shape_cast %63 : vector<1x32x32xbf16> to vector<32x32xbf16>
    %65 = vector.extract_strided_slice %13 {offsets = [0, 10], sizes = [32, 187], strides = [1, 1]} : vector<32x201xbf16> to vector<32x187xbf16>
    %cst_27 = arith.constant dense<0.000000e+00> : vector<32x187xf32>
    %66 = tpu.matmul %64, %65, %cst_27 {dimension_numbers = #tpu.dot_dimension_numbers<[1], [0], [0], [1], [0, 0, 1, 1], [], []>} : vector<32x32xbf16>, vector<32x187xbf16>, vector<32x187xf32> -> vector<32x187xf32>
    %67 = arith.addf %62, %66 : vector<32x187xf32>
    %68 = vector.extract_strided_slice %2 {offsets = [11, 0, 0], sizes = [1, 32, 32], strides = [1, 1, 1]} : vector<15x32x32xbf16> to vector<1x32x32xbf16>
    %69 = vector.shape_cast %68 : vector<1x32x32xbf16> to vector<32x32xbf16>
    %70 = vector.extract_strided_slice %13 {offsets = [0, 11], sizes = [32, 187], strides = [1, 1]} : vector<32x201xbf16> to vector<32x187xbf16>
    %cst_28 = arith.constant dense<0.000000e+00> : vector<32x187xf32>
    %71 = tpu.matmul %69, %70, %cst_28 {dimension_numbers = #tpu.dot_dimension_numbers<[1], [0], [0], [1], [0, 0, 1, 1], [], []>} : vector<32x32xbf16>, vector<32x187xbf16>, vector<32x187xf32> -> vector<32x187xf32>
    %72 = arith.addf %67, %71 : vector<32x187xf32>
    %73 = vector.extract_strided_slice %2 {offsets = [12, 0, 0], sizes = [1, 32, 32], strides = [1, 1, 1]} : vector<15x32x32xbf16> to vector<1x32x32xbf16>
    %74 = vector.shape_cast %73 : vector<1x32x32xbf16> to vector<32x32xbf16>
    %75 = vector.extract_strided_slice %13 {offsets = [0, 12], sizes = [32, 187], strides = [1, 1]} : vector<32x201xbf16> to vector<32x187xbf16>
    %cst_29 = arith.constant dense<0.000000e+00> : vector<32x187xf32>
    %76 = tpu.matmul %74, %75, %cst_29 {dimension_numbers = #tpu.dot_dimension_numbers<[1], [0], [0], [1], [0, 0, 1, 1], [], []>} : vector<32x32xbf16>, vector<32x187xbf16>, vector<32x187xf32> -> vector<32x187xf32>
    %77 = arith.addf %72, %76 : vector<32x187xf32>
    %78 = vector.extract_strided_slice %2 {offsets = [13, 0, 0], sizes = [1, 32, 32], strides = [1, 1, 1]} : vector<15x32x32xbf16> to vector<1x32x32xbf16>
    %79 = vector.shape_cast %78 : vector<1x32x32xbf16> to vector<32x32xbf16>
    %80 = vector.extract_strided_slice %13 {offsets = [0, 13], sizes = [32, 187], strides = [1, 1]} : vector<32x201xbf16> to vector<32x187xbf16>
    %cst_30 = arith.constant dense<0.000000e+00> : vector<32x187xf32>
    %81 = tpu.matmul %79, %80, %cst_30 {dimension_numbers = #tpu.dot_dimension_numbers<[1], [0], [0], [1], [0, 0, 1, 1], [], []>} : vector<32x32xbf16>, vector<32x187xbf16>, vector<32x187xf32> -> vector<32x187xf32>
    %82 = arith.addf %77, %81 : vector<32x187xf32>
    %83 = vector.extract_strided_slice %2 {offsets = [14, 0, 0], sizes = [1, 32, 32], strides = [1, 1, 1]} : vector<15x32x32xbf16> to vector<1x32x32xbf16>
    %84 = vector.shape_cast %83 : vector<1x32x32xbf16> to vector<32x32xbf16>
    %85 = vector.extract_strided_slice %13 {offsets = [0, 14], sizes = [32, 187], strides = [1, 1]} : vector<32x201xbf16> to vector<32x187xbf16>
    %cst_31 = arith.constant dense<0.000000e+00> : vector<32x187xf32>
    %86 = tpu.matmul %84, %85, %cst_31 {dimension_numbers = #tpu.dot_dimension_numbers<[1], [0], [0], [1], [0, 0, 1, 1], [], []>} : vector<32x32xbf16>, vector<32x187xbf16>, vector<32x187xf32> -> vector<32x187xf32>
    %87 = arith.addf %82, %86 : vector<32x187xf32>
    %88 = vector.broadcast %3 : vector<32x1xf32> to vector<32x187xf32>
    %89 = arith.addf %87, %88 : vector<32x187xf32>
    %cst_32 = arith.constant 0.000000e+00 : f32
    %90 = vector.broadcast %cst_32 : f32 to vector<32x187xf32>
    %91 = arith.cmpf ogt, %89, %90 : vector<32x187xf32>
    %cst_33 = arith.constant 0.000000e+00 : f32
    %92 = vector.broadcast %cst_33 : f32 to vector<32x187xf32>
    %93 = arith.minimumf %89, %92 : vector<32x187xf32>
    %94 = math.exp %93 : vector<32x187xf32>
    %cst_34 = arith.constant 1.000000e+00 : f32
    %95 = vector.broadcast %cst_34 : f32 to vector<32x187xf32>
    %96 = arith.subf %94, %95 : vector<32x187xf32>
    %97 = arith.select %91, %89, %96 : vector<32x187xi1>, vector<32x187xf32>
    %98 = arith.truncf %97 : vector<32x187xf32> to vector<32x187xbf16>
    %99 = arith.index_cast %11 : i32 to index
    %c0_35 = arith.constant 0 : index
    %100 = vector.load %arg13[%99, %c0_35] : memref<64x187xbf16, #tpu.memory_space<vmem>>, vector<32x187xbf16>
    tpu.vector_store %arg13[%99, %c0_35], %98 {strides = array<i32>} : memref<64x187xbf16, #tpu.memory_space<vmem>>, vector<32x187xbf16>,
    %c1_i32_36 = arith.constant 1 : i32
    %c32_i32_37 = arith.constant 32 : i32
    %101 = arith.muli %c1_i32_36, %c32_i32_37 : i32
    %102 = tpu.assume_multiple %101, 32 : i32
    %103 = arith.index_cast %102 : i32 to index
    %c0_38 = arith.constant 0 : index
    %104 = vector.load %arg12[%103, %c0_38] : memref<64x201xbf16, #tpu.memory_space<vmem>>, vector<32x201xbf16>
    %105 = vector.extract_strided_slice %2 {offsets = [0, 0, 0], sizes = [1, 32, 32], strides = [1, 1, 1]} : vector<15x32x32xbf16> to vector<1x32x32xbf16>
    %106 = vector.shape_cast %105 : vector<1x32x32xbf16> to vector<32x32xbf16>
    %107 = vector.extract_strided_slice %104 {offsets = [0, 0], sizes = [32, 187], strides = [1, 1]} : vector<32x201xbf16> to vector<32x187xbf16>
    %cst_39 = arith.constant dense<0.000000e+00> : vector<32x187xf32>
    %108 = tpu.matmul %106, %107, %cst_39 {dimension_numbers = #tpu.dot_dimension_numbers<[1], [0], [0], [1], [0, 0, 1, 1], [], []>} : vector<32x32xbf16>, vector<32x187xbf16>, vector<32x187xf32> -> vector<32x187xf32>
    %109 = vector.extract_strided_slice %2 {offsets = [1, 0, 0], sizes = [1, 32, 32], strides = [1, 1, 1]} : vector<15x32x32xbf16> to vector<1x32x32xbf16>
    %110 = vector.shape_cast %109 : vector<1x32x32xbf16> to vector<32x32xbf16>
    %111 = vector.extract_strided_slice %104 {offsets = [0, 1], sizes = [32, 187], strides = [1, 1]} : vector<32x201xbf16> to vector<32x187xbf16>
    %cst_40 = arith.constant dense<0.000000e+00> : vector<32x187xf32>
    %112 = tpu.matmul %110, %111, %cst_40 {dimension_numbers = #tpu.dot_dimension_numbers<[1], [0], [0], [1], [0, 0, 1, 1], [], []>} : vector<32x32xbf16>, vector<32x187xbf16>, vector<32x187xf32> -> vector<32x187xf32>
    %113 = arith.addf %108, %112 : vector<32x187xf32>
    %114 = vector.extract_strided_slice %2 {offsets = [2, 0, 0], sizes = [1, 32, 32], strides = [1, 1, 1]} : vector<15x32x32xbf16> to vector<1x32x32xbf16>
    %115 = vector.shape_cast %114 : vector<1x32x32xbf16> to vector<32x32xbf16>
    %116 = vector.extract_strided_slice %104 {offsets = [0, 2], sizes = [32, 187], strides = [1, 1]} : vector<32x201xbf16> to vector<32x187xbf16>
    %cst_41 = arith.constant dense<0.000000e+00> : vector<32x187xf32>
    %117 = tpu.matmul %115, %116, %cst_41 {dimension_numbers = #tpu.dot_dimension_numbers<[1], [0], [0], [1], [0, 0, 1, 1], [], []>} : vector<32x32xbf16>, vector<32x187xbf16>, vector<32x187xf32> -> vector<32x187xf32>
    %118 = arith.addf %113, %117 : vector<32x187xf32>
    %119 = vector.extract_strided_slice %2 {offsets = [3, 0, 0], sizes = [1, 32, 32], strides = [1, 1, 1]} : vector<15x32x32xbf16> to vector<1x32x32xbf16>
    %120 = vector.shape_cast %119 : vector<1x32x32xbf16> to vector<32x32xbf16>
    %121 = vector.extract_strided_slice %104 {offsets = [0, 3], sizes = [32, 187], strides = [1, 1]} : vector<32x201xbf16> to vector<32x187xbf16>
    %cst_42 = arith.constant dense<0.000000e+00> : vector<32x187xf32>
    %122 = tpu.matmul %120, %121, %cst_42 {dimension_numbers = #tpu.dot_dimension_numbers<[1], [0], [0], [1], [0, 0, 1, 1], [], []>} : vector<32x32xbf16>, vector<32x187xbf16>, vector<32x187xf32> -> vector<32x187xf32>
    %123 = arith.addf %118, %122 : vector<32x187xf32>
    %124 = vector.extract_strided_slice %2 {offsets = [4, 0, 0], sizes = [1, 32, 32], strides = [1, 1, 1]} : vector<15x32x32xbf16> to vector<1x32x32xbf16>
    %125 = vector.shape_cast %124 : vector<1x32x32xbf16> to vector<32x32xbf16>
    %126 = vector.extract_strided_slice %104 {offsets = [0, 4], sizes = [32, 187], strides = [1, 1]} : vector<32x201xbf16> to vector<32x187xbf16>
    %cst_43 = arith.constant dense<0.000000e+00> : vector<32x187xf32>
    %127 = tpu.matmul %125, %126, %cst_43 {dimension_numbers = #tpu.dot_dimension_numbers<[1], [0], [0], [1], [0, 0, 1, 1], [], []>} : vector<32x32xbf16>, vector<32x187xbf16>, vector<32x187xf32> -> vector<32x187xf32>
    %128 = arith.addf %123, %127 : vector<32x187xf32>
    %129 = vector.extract_strided_slice %2 {offsets = [5, 0, 0], sizes = [1, 32, 32], strides = [1, 1, 1]} : vector<15x32x32xbf16> to vector<1x32x32xbf16>
    %130 = vector.shape_cast %129 : vector<1x32x32xbf16> to vector<32x32xbf16>
    %131 = vector.extract_strided_slice %104 {offsets = [0, 5], sizes = [32, 187], strides = [1, 1]} : vector<32x201xbf16> to vector<32x187xbf16>
    %cst_44 = arith.constant dense<0.000000e+00> : vector<32x187xf32>
    %132 = tpu.matmul %130, %131, %cst_44 {dimension_numbers = #tpu.dot_dimension_numbers<[1], [0], [0], [1], [0, 0, 1, 1], [], []>} : vector<32x32xbf16>, vector<32x187xbf16>, vector<32x187xf32> -> vector<32x187xf32>
    %133 = arith.addf %128, %132 : vector<32x187xf32>
    %134 = vector.extract_strided_slice %2 {offsets = [6, 0, 0], sizes = [1, 32, 32], strides = [1, 1, 1]} : vector<15x32x32xbf16> to vector<1x32x32xbf16>
    %135 = vector.shape_cast %134 : vector<1x32x32xbf16> to vector<32x32xbf16>
    %136 = vector.extract_strided_slice %104 {offsets = [0, 6], sizes = [32, 187], strides = [1, 1]} : vector<32x201xbf16> to vector<32x187xbf16>
    %cst_45 = arith.constant dense<0.000000e+00> : vector<32x187xf32>
    %137 = tpu.matmul %135, %136, %cst_45 {dimension_numbers = #tpu.dot_dimension_numbers<[1], [0], [0], [1], [0, 0, 1, 1], [], []>} : vector<32x32xbf16>, vector<32x187xbf16>, vector<32x187xf32> -> vector<32x187xf32>
    %138 = arith.addf %133, %137 : vector<32x187xf32>
    %139 = vector.extract_strided_slice %2 {offsets = [7, 0, 0], sizes = [1, 32, 32], strides = [1, 1, 1]} : vector<15x32x32xbf16> to vector<1x32x32xbf16>
    %140 = vector.shape_cast %139 : vector<1x32x32xbf16> to vector<32x32xbf16>
    %141 = vector.extract_strided_slice %104 {offsets = [0, 7], sizes = [32, 187], strides = [1, 1]} : vector<32x201xbf16> to vector<32x187xbf16>
    %cst_46 = arith.constant dense<0.000000e+00> : vector<32x187xf32>
    %142 = tpu.matmul %140, %141, %cst_46 {dimension_numbers = #tpu.dot_dimension_numbers<[1], [0], [0], [1], [0, 0, 1, 1], [], []>} : vector<32x32xbf16>, vector<32x187xbf16>, vector<32x187xf32> -> vector<32x187xf32>
    %143 = arith.addf %138, %142 : vector<32x187xf32>
    %144 = vector.extract_strided_slice %2 {offsets = [8, 0, 0], sizes = [1, 32, 32], strides = [1, 1, 1]} : vector<15x32x32xbf16> to vector<1x32x32xbf16>
    %145 = vector.shape_cast %144 : vector<1x32x32xbf16> to vector<32x32xbf16>
    %146 = vector.extract_strided_slice %104 {offsets = [0, 8], sizes = [32, 187], strides = [1, 1]} : vector<32x201xbf16> to vector<32x187xbf16>
    %cst_47 = arith.constant dense<0.000000e+00> : vector<32x187xf32>
    %147 = tpu.matmul %145, %146, %cst_47 {dimension_numbers = #tpu.dot_dimension_numbers<[1], [0], [0], [1], [0, 0, 1, 1], [], []>} : vector<32x32xbf16>, vector<32x187xbf16>, vector<32x187xf32> -> vector<32x187xf32>
    %148 = arith.addf %143, %147 : vector<32x187xf32>
    %149 = vector.extract_strided_slice %2 {offsets = [9, 0, 0], sizes = [1, 32, 32], strides = [1, 1, 1]} : vector<15x32x32xbf16> to vector<1x32x32xbf16>
    %150 = vector.shape_cast %149 : vector<1x32x32xbf16> to vector<32x32xbf16>
    %151 = vector.extract_strided_slice %104 {offsets = [0, 9], sizes = [32, 187], strides = [1, 1]} : vector<32x201xbf16> to vector<32x187xbf16>
    %cst_48 = arith.constant dense<0.000000e+00> : vector<32x187xf32>
    %152 = tpu.matmul %150, %151, %cst_48 {dimension_numbers = #tpu.dot_dimension_numbers<[1], [0], [0], [1], [0, 0, 1, 1], [], []>} : vector<32x32xbf16>, vector<32x187xbf16>, vector<32x187xf32> -> vector<32x187xf32>
    %153 = arith.addf %148, %152 : vector<32x187xf32>
    %154 = vector.extract_strided_slice %2 {offsets = [10, 0, 0], sizes = [1, 32, 32], strides = [1, 1, 1]} : vector<15x32x32xbf16> to vector<1x32x32xbf16>
    %155 = vector.shape_cast %154 : vector<1x32x32xbf16> to vector<32x32xbf16>
    %156 = vector.extract_strided_slice %104 {offsets = [0, 10], sizes = [32, 187], strides = [1, 1]} : vector<32x201xbf16> to vector<32x187xbf16>
    %cst_49 = arith.constant dense<0.000000e+00> : vector<32x187xf32>
    %157 = tpu.matmul %155, %156, %cst_49 {dimension_numbers = #tpu.dot_dimension_numbers<[1], [0], [0], [1], [0, 0, 1, 1], [], []>} : vector<32x32xbf16>, vector<32x187xbf16>, vector<32x187xf32> -> vector<32x187xf32>
    %158 = arith.addf %153, %157 : vector<32x187xf32>
    %159 = vector.extract_strided_slice %2 {offsets = [11, 0, 0], sizes = [1, 32, 32], strides = [1, 1, 1]} : vector<15x32x32xbf16> to vector<1x32x32xbf16>
    %160 = vector.shape_cast %159 : vector<1x32x32xbf16> to vector<32x32xbf16>
    %161 = vector.extract_strided_slice %104 {offsets = [0, 11], sizes = [32, 187], strides = [1, 1]} : vector<32x201xbf16> to vector<32x187xbf16>
    %cst_50 = arith.constant dense<0.000000e+00> : vector<32x187xf32>
    %162 = tpu.matmul %160, %161, %cst_50 {dimension_numbers = #tpu.dot_dimension_numbers<[1], [0], [0], [1], [0, 0, 1, 1], [], []>} : vector<32x32xbf16>, vector<32x187xbf16>, vector<32x187xf32> -> vector<32x187xf32>
    %163 = arith.addf %158, %162 : vector<32x187xf32>
    %164 = vector.extract_strided_slice %2 {offsets = [12, 0, 0], sizes = [1, 32, 32], strides = [1, 1, 1]} : vector<15x32x32xbf16> to vector<1x32x32xbf16>
    %165 = vector.shape_cast %164 : vector<1x32x32xbf16> to vector<32x32xbf16>
    %166 = vector.extract_strided_slice %104 {offsets = [0, 12], sizes = [32, 187], strides = [1, 1]} : vector<32x201xbf16> to vector<32x187xbf16>
    %cst_51 = arith.constant dense<0.000000e+00> : vector<32x187xf32>
    %167 = tpu.matmul %165, %166, %cst_51 {dimension_numbers = #tpu.dot_dimension_numbers<[1], [0], [0], [1], [0, 0, 1, 1], [], []>} : vector<32x32xbf16>, vector<32x187xbf16>, vector<32x187xf32> -> vector<32x187xf32>
    %168 = arith.addf %163, %167 : vector<32x187xf32>
    %169 = vector.extract_strided_slice %2 {offsets = [13, 0, 0], sizes = [1, 32, 32], strides = [1, 1, 1]} : vector<15x32x32xbf16> to vector<1x32x32xbf16>
    %170 = vector.shape_cast %169 : vector<1x32x32xbf16> to vector<32x32xbf16>
    %171 = vector.extract_strided_slice %104 {offsets = [0, 13], sizes = [32, 187], strides = [1, 1]} : vector<32x201xbf16> to vector<32x187xbf16>
    %cst_52 = arith.constant dense<0.000000e+00> : vector<32x187xf32>
    %172 = tpu.matmul %170, %171, %cst_52 {dimension_numbers = #tpu.dot_dimension_numbers<[1], [0], [0], [1], [0, 0, 1, 1], [], []>} : vector<32x32xbf16>, vector<32x187xbf16>, vector<32x187xf32> -> vector<32x187xf32>
    %173 = arith.addf %168, %172 : vector<32x187xf32>
    %174 = vector.extract_strided_slice %2 {offsets = [14, 0, 0], sizes = [1, 32, 32], strides = [1, 1, 1]} : vector<15x32x32xbf16> to vector<1x32x32xbf16>
    %175 = vector.shape_cast %174 : vector<1x32x32xbf16> to vector<32x32xbf16>
    %176 = vector.extract_strided_slice %104 {offsets = [0, 14], sizes = [32, 187], strides = [1, 1]} : vector<32x201xbf16> to vector<32x187xbf16>
    %cst_53 = arith.constant dense<0.000000e+00> : vector<32x187xf32>
    %177 = tpu.matmul %175, %176, %cst_53 {dimension_numbers = #tpu.dot_dimension_numbers<[1], [0], [0], [1], [0, 0, 1, 1], [], []>} : vector<32x32xbf16>, vector<32x187xbf16>, vector<32x187xf32> -> vector<32x187xf32>
    %178 = arith.addf %173, %177 : vector<32x187xf32>
    %179 = vector.broadcast %3 : vector<32x1xf32> to vector<32x187xf32>
    %180 = arith.addf %178, %179 : vector<32x187xf32>
    %cst_54 = arith.constant 0.000000e+00 : f32
    %181 = vector.broadcast %cst_54 : f32 to vector<32x187xf32>
    %182 = arith.cmpf ogt, %180, %181 : vector<32x187xf32>
    %cst_55 = arith.constant 0.000000e+00 : f32
    %183 = vector.broadcast %cst_55 : f32 to vector<32x187xf32>
    %184 = arith.minimumf %180, %183 : vector<32x187xf32>
    %185 = math.exp %184 : vector<32x187xf32>
    %cst_56 = arith.constant 1.000000e+00 : f32
    %186 = vector.broadcast %cst_56 : f32 to vector<32x187xf32>
    %187 = arith.subf %185, %186 : vector<32x187xf32>
    %188 = arith.select %182, %180, %187 : vector<32x187xi1>, vector<32x187xf32>
    %189 = arith.truncf %188 : vector<32x187xf32> to vector<32x187xbf16>
    %190 = arith.index_cast %102 : i32 to index
    %c0_57 = arith.constant 0 : index
    %191 = vector.load %arg13[%190, %c0_57] : memref<64x187xbf16, #tpu.memory_space<vmem>>, vector<32x187xbf16>
    tpu.vector_store %arg13[%190, %c0_57], %189 {strides = array<i32>} : memref<64x187xbf16, #tpu.memory_space<vmem>>, vector<32x187xbf16>,
    %c2_i32_58 = arith.constant 2 : i32
    %c0_59 = arith.constant 0 : index
    %c0_60 = arith.constant 0 : index
    %192 = vector.load %arg13[%c0_59, %c0_60] : memref<64x187xbf16, #tpu.memory_space<vmem>>, vector<64x187xbf16>
    %c0_61 = arith.constant 0 : index
    %c0_62 = arith.constant 0 : index
    %193 = vector.load %arg7[%c0_61, %c0_62] : memref<187x23xbf16, #tpu.memory_space<vmem>>, vector<187x23xbf16>
    %cst_63 = arith.constant dense<0.000000e+00> : vector<64x23xf32>
    %194 = tpu.matmul %192, %193, %cst_63 {dimension_numbers = #tpu.dot_dimension_numbers<[1], [0], [0], [1], [0, 0, 1, 1], [], []>} : vector<64x187xbf16>, vector<187x23xbf16>, vector<64x23xf32> -> vector<64x23xf32>
    %195 = vector.shape_cast %194 : vector<64x23xf32> to vector<2x32x23xf32>
    %c0_64 = arith.constant 0 : index
    %c0_65 = arith.constant 0 : index
    %c0_66 = arith.constant 0 : index
    %196 = vector.load %arg8[%c0_64, %c0_65, %c0_66] : memref<2x32x23xf32, #tpu.memory_space<vmem>>, vector<2x32x23xf32>
    %197 = vector.extract_strided_slice %196 {offsets = [0, 0, 0], sizes = [1, 32, 23], strides = [1, 1, 1]} : vector<2x32x23xf32> to vector<1x32x23xf32>
    %198 = vector.shape_cast %197 : vector<1x32x23xf32> to vector<32x23xf32>
    %199 = vector.shape_cast %198 : vector<32x23xf32> to vector<1x32x23xf32>
    %200 = vector.broadcast %199 : vector<1x32x23xf32> to vector<2x32x23xf32>
    %201 = arith.mulf %195, %200 : vector<2x32x23xf32>
    %cst_67 = arith.constant dense<0.000000e+00> : vector<2x32xf32>
    %202 = vector.multi_reduction <add>, %201, %cst_67 [2] : vector<2x32x23xf32> to vector<2x32xf32>
    %203 = vector.shape_cast %202 : vector<2x32xf32> to vector<2x32x1xf32>
    %cst_68 = arith.constant dense<0.000000e+00> : vector<2x1xf32>
    %204 = vector.multi_reduction <add>, %203, %cst_68 [1] : vector<2x32x1xf32> to vector<2x1xf32>
    %205 = vector.shape_cast %204 : vector<2x1xf32> to vector<2x1x1xf32>
    %206 = vector.shape_cast %205 : vector<2x1x1xf32> to vector<2x1xf32>
    %207 = vector.extract_strided_slice %196 {offsets = [1, 0, 0], sizes = [1, 32, 23], strides = [1, 1, 1]} : vector<2x32x23xf32> to vector<1x32x23xf32>
    %208 = vector.shape_cast %207 : vector<1x32x23xf32> to vector<32x23xf32>
    %209 = vector.shape_cast %208 : vector<32x23xf32> to vector<1x32x23xf32>
    %210 = vector.broadcast %209 : vector<1x32x23xf32> to vector<2x32x23xf32>
    %211 = arith.mulf %195, %210 : vector<2x32x23xf32>
    %cst_69 = arith.constant dense<0.000000e+00> : vector<2x32xf32>
    %212 = vector.multi_reduction <add>, %211, %cst_69 [2] : vector<2x32x23xf32> to vector<2x32xf32>
    %213 = vector.shape_cast %212 : vector<2x32xf32> to vector<2x32x1xf32>
    %cst_70 = arith.constant dense<0.000000e+00> : vector<2x1xf32>
    %214 = vector.multi_reduction <add>, %213, %cst_70 [1] : vector<2x32x1xf32> to vector<2x1xf32>
    %215 = vector.shape_cast %214 : vector<2x1xf32> to vector<2x1x1xf32>
    %216 = vector.shape_cast %215 : vector<2x1x1xf32> to vector<2x1xf32>
    %217 = tpu.concatenate %206, %216 in 1 : vector<2x1xf32>, vector<2x1xf32> -> vector<2x2xf32>
    %c0_71 = arith.constant 0 : index
    %c0_72 = arith.constant 0 : index
    %218 = vector.load %arg9[%c0_71, %c0_72] : memref<1x2xf32, #tpu.memory_space<vmem>>, vector<1x2xf32>
    %219 = vector.broadcast %218 : vector<1x2xf32> to vector<2x2xf32>
    %220 = arith.addf %217, %219 : vector<2x2xf32>
    %c0_73 = arith.constant 0 : index
    %c0_74 = arith.constant 0 : index
    %221 = vector.load %arg10[%c0_73, %c0_74] : memref<2x2xf32, #tpu.memory_space<vmem>>, vector<2x2xf32>
    tpu.vector_store %arg10[%c0_73, %c0_74], %220 {strides = array<i32>} : memref<2x2xf32, #tpu.memory_space<vmem>>, vector<2x2xf32>,
    return
  }
  func.func @transform_0(%arg0: i32) -> (i32, i32, i32) {
    %c0_i32 = arith.constant 0 : i32
    %c0_i32_0 = arith.constant 0 : i32
    %c0_i32_1 = arith.constant 0 : i32
    return %arg0, %c0_i32, %c0_i32_0 : i32, i32, i32
  }
  func.func @transform_1(%arg0: i32) -> (i32, i32) {
    %c0_i32 = arith.constant 0 : i32
    %c0_i32_0 = arith.constant 0 : i32
    %c0_i32_1 = arith.constant 0 : i32
    return %c0_i32, %c0_i32_0 : i32, i32
  }
  func.func @transform_2(%arg0: i32) -> (i32, i32) {
    %c0_i32 = arith.constant 0 : i32
    %c0_i32_0 = arith.constant 0 : i32
    %c0_i32_1 = arith.constant 0 : i32
    return %c0_i32, %c0_i32_0 : i32, i32
  }
  func.func @transform_3(%arg0: i32) -> (i32, i32) {
    %c0_i32 = arith.constant 0 : i32
    %c0_i32_0 = arith.constant 0 : i32
    %c0_i32_1 = arith.constant 0 : i32
    return %c0_i32, %c0_i32_0 : i32, i32
  }
  func.func @transform_4(%arg0: i32) -> (i32, i32, i32) {
    %c0_i32 = arith.constant 0 : i32
    %c0_i32_0 = arith.constant 0 : i32
    %c0_i32_1 = arith.constant 0 : i32
    %c0_i32_2 = arith.constant 0 : i32
    return %c0_i32, %c0_i32_0, %c0_i32_1 : i32, i32, i32
  }
  func.func @transform_5(%arg0: i32) -> (i32, i32) {
    %c0_i32 = arith.constant 0 : i32
    %c0_i32_0 = arith.constant 0 : i32
    %c0_i32_1 = arith.constant 0 : i32
    return %c0_i32, %c0_i32_0 : i32, i32
  }
  func.func @transform_6(%arg0: i32) -> (i32, i32) {
    %c0_i32 = arith.constant 0 : i32
    %c0_i32_0 = arith.constant 0 : i32
    %c0_i32_1 = arith.constant 0 : i32
    return %c0_i32, %c0_i32_0 : i32, i32
  }
  func.func @transform_7(%arg0: i32) -> (i32, i32, i32) {
    %c0_i32 = arith.constant 0 : i32
    %c0_i32_0 = arith.constant 0 : i32
    %c0_i32_1 = arith.constant 0 : i32
    %c0_i32_2 = arith.constant 0 : i32
    return %c0_i32, %c0_i32_0, %c0_i32_1 : i32, i32, i32
  }
  func.func @transform_8(%arg0: i32) -> (i32, i32) {
    %c0_i32 = arith.constant 0 : i32
    %c0_i32_0 = arith.constant 0 : i32
    %c0_i32_1 = arith.constant 0 : i32
    return %c0_i32, %c0_i32_0 : i32, i32
  }
  func.func @transform_9(%arg0: i32) -> (i32, i32) {
    %c0_i32 = arith.constant 0 : i32
    %c0_i32_0 = arith.constant 0 : i32
    return %arg0, %c0_i32 : i32, i32
  }
}

</mosaic_0001>

<llo_original>
// kernel: eeg_elu_forward.1
$region0: #{eeg_elu_forward.1}
  #allocation0 [shape = 'u32[]', space=smem, size = 0x4, offset = 0x4, fixed_abs, tag = 'smem constant byte address 0x4 - core index']
  #allocation1 [shape = 'u32[144,128]{1,0:T(1,128)}', space=vmem, size = 0x12000, scoped, tag = 'internal scratch']
  #allocation2 [shape = 'bf16[64,750]{1,0:T(16,128)(2,1)}', space=vmem, size = 0x18000, scoped, tag = 'scratch operand']
  #allocation3 [shape = 'bf16[64,201]{1,0:T(16,128)(2,1)}', space=vmem, size = 0x8000, scoped, tag = 'scratch operand']
  #allocation4 [shape = 'bf16[64,187]{1,0:T(16,128)(2,1)}', space=vmem, size = 0x8000, scoped, tag = 'scratch operand']
  %s0 = inlined_call_operand.vmem [shape: bf16[2,104,750], index: 0, kind: input, shape index: {}]
  %s1 = inlined_call_operand.vmem [shape: bf16[32,104], index: 1, kind: input, shape index: {}]
  %s2 = inlined_call_operand.vmem [shape: f32[32,1], index: 2, kind: input, shape index: {}]
  %s3 = inlined_call_operand.vmem [shape: bf16[750,201], index: 3, kind: input, shape index: {}]
  %s4 = inlined_call_operand.vmem [shape: bf16[15,32,32], index: 4, kind: input, shape index: {}]
  %s5 = inlined_call_operand.vmem [shape: f32[32,1], index: 5, kind: input, shape index: {}]
  %s6 = inlined_call_operand.vmem [shape: bf16[187,23], index: 6, kind: input, shape index: {}]
  %s7 = inlined_call_operand.vmem [shape: f32[2,32,23], index: 7, kind: input, shape index: {}]
  %s8 = inlined_call_operand.vmem [shape: f32[1,2], index: 8, kind: input, shape index: {}]
  %s9 = inlined_call_operand.hbm [shape: f32[2,2], index: 9, kind: output, shape index: {}]
  %s10 = sld [smem:[#allocation0]]
  $region53: #{eeg_elu_forward.1} parent=0
    _
  %s12 = ssub.s32 1, %s10
  %s13 = scalar_select 0, %s12, %s10
  $region1: #{eeg_elu_forward.1} parent=0
    #allocation5 [shape = 'u8[1024]{0}', space=vmem, size = 0x400, scoped, tag = 'output window, operand 0, single buffered']
    #allocation6 [shape = 's32[1]{0}', space=sflag, size = 0x4, scoped, tag = 'scoped memory for eeg_elu_forward.1']
    %14 = vsyncpa [#allocation6], 0
    // Predicated region
    $region2: #{eeg_elu_forward.1} parent=1 // pred_check
      _
    $region3: #{eeg_elu_forward.1} parent=1 // pred_check_branch
      %16 = sbr.rel (0) target = $region5
    $region4: #{eeg_elu_forward.1} parent=1 // pred_region
      _
    $region5: #{eeg_elu_forward.1} parent=1 // pred_fallthru
      _
    // Predicated region
    $region6: #{eeg_elu_forward.1} parent=1 // pred_check
      _
    $region7: #{eeg_elu_forward.1} parent=1 // pred_check_branch
      %18 = sbr.rel (0) target = $region9
    $region8: #{eeg_elu_forward.1} parent=1 // pred_region
      _
    $region9: #{eeg_elu_forward.1} parent=1 // pred_fallthru
      _
    // Predicated region
    $region10: #{eeg_elu_forward.1} parent=1 // pred_check
      _
    $region11: #{eeg_elu_forward.1} parent=1 // pred_check_branch
      %20 = sbr.rel (0) target = $region13
    $region12: #{eeg_elu_forward.1} parent=1 // pred_region
      _
    $region13: #{eeg_elu_forward.1} parent=1 // pred_fallthru
      _
    // Predicated region
    $region14: #{eeg_elu_forward.1} parent=1 // pred_check
      _
    $region15: #{eeg_elu_forward.1} parent=1 // pred_check_branch
      %22 = sbr.rel (0) target = $region17
    $region16: #{eeg_elu_forward.1} parent=1 // pred_region
      _
    $region17: #{eeg_elu_forward.1} parent=1 // pred_fallthru
      _
    // Predicated region
    $region18: #{eeg_elu_forward.1} parent=1 // pred_check
      _
    $region19: #{eeg_elu_forward.1} parent=1 // pred_check_branch
      %24 = sbr.rel (0) target = $region21
    $region20: #{eeg_elu_forward.1} parent=1 // pred_region
      _
    $region21: #{eeg_elu_forward.1} parent=1 // pred_fallthru
      _
    // Predicated region
    $region22: #{eeg_elu_forward.1} parent=1 // pred_check
      _
    $region23: #{eeg_elu_forward.1} parent=1 // pred_check_branch
      %26 = sbr.rel (0) target = $region25
    $region24: #{eeg_elu_forward.1} parent=1 // pred_region
      _
    $region25: #{eeg_elu_forward.1} parent=1 // pred_fallthru
      _
    // Predicated region
    $region26: #{eeg_elu_forward.1} parent=1 // pred_check
      _
    $region27: #{eeg_elu_forward.1} parent=1 // pred_check_branch
      %28 = sbr.rel (0) target = $region29
    $region28: #{eeg_elu_forward.1} parent=1 // pred_region
      _
    $region29: #{eeg_elu_forward.1} parent=1 // pred_fallthru
      _
    // Predicated region
    $region30: #{eeg_elu_forward.1} parent=1 // pred_check
      _
    $region31: #{eeg_elu_forward.1} parent=1 // pred_check_branch
      %30 = sbr.rel (0) target = $region33
    $region32: #{eeg_elu_forward.1} parent=1 // pred_region
      _
    $region33: #{eeg_elu_forward.1} parent=1 // pred_fallthru
      _
    // Predicated region
    $region34: #{eeg_elu_forward.1} parent=1 // pred_check
      _
    $region35: #{eeg_elu_forward.1} parent=1 // pred_check_branch
      %32 = sbr.rel (0) target = $region37
    $region36: #{eeg_elu_forward.1} parent=1 // pred_region
      _
    $region37: #{eeg_elu_forward.1} parent=1 // pred_fallthru
      _
    %v34 = vld [vmem:[%s1] sm:$0xf]
    %v35 = vld [vmem:[%s1 + $0x4] sm:$0xf]
    %v36 = vld [vmem:[%s1 + $0x8] sm:$0xf]
    %v37 = vld [vmem:[%s1 + $0xc] sm:$0xf]
    %v38 = vld [vmem:[%s2] sm:$0xff]
    %v39 = vld [vmem:[%s2 + $0x8] sm:$0xff]
    %v40 = vld [vmem:[%s2 + $0x10] sm:$0xff]
    %v41 = vld [vmem:[%s2 + $0x18] sm:$0xff]
    %v42 = vld [vmem:[%s4] sm:$0xf]
    %v43 = vld [vmem:[%s4 + $0x4] sm:$0xf]
    %v44 = vld [vmem:[%s4 + $0x8] sm:$0xf]
    %v45 = vld [vmem:[%s4 + $0xc] sm:$0xf]
    %v46 = vld [vmem:[%s4 + $0x10] sm:$0xf]
    %v47 = vld [vmem:[%s4 + $0x14] sm:$0xf]
    %v48 = vld [vmem:[%s4 + $0x18] sm:$0xf]
    %v49 = vld [vmem:[%s4 + $0x1c] sm:$0xf]
    %v50 = vld [vmem:[%s4 + $0x20] sm:$0xf]
    %v51 = vld [vmem:[%s4 + $0x24] sm:$0xf]
    %v52 = vld [vmem:[%s4 + $0x28] sm:$0xf]
    %v53 = vld [vmem:[%s4 + $0x2c] sm:$0xf]
    %v54 = vld [vmem:[%s4 + $0x30] sm:$0xf]
    %v55 = vld [vmem:[%s4 + $0x34] sm:$0xf]
    %v56 = vld [vmem:[%s4 + $0x38] sm:$0xf]
    %v57 = vld [vmem:[%s4 + $0x3c] sm:$0xf]
    %v58 = vld [vmem:[%s4 + $0x40] sm:$0xf]
    %v59 = vld [vmem:[%s4 + $0x44] sm:$0xf]
    %v60 = vld [vmem:[%s4 + $0x48] sm:$0xf]
    %v61 = vld [vmem:[%s4 + $0x4c] sm:$0xf]
    %v62 = vld [vmem:[%s4 + $0x50] sm:$0xf]
    %v63 = vld [vmem:[%s4 + $0x54] sm:$0xf]
    %v64 = vld [vmem:[%s4 + $0x58] sm:$0xf]
    %v65 = vld [vmem:[%s4 + $0x5c] sm:$0xf]
    %v66 = vld [vmem:[%s4 + $0x60] sm:$0xf]
    %v67 = vld [vmem:[%s4 + $0x64] sm:$0xf]
    %v68 = vld [vmem:[%s4 + $0x68] sm:$0xf]
    %v69 = vld [vmem:[%s4 + $0x6c] sm:$0xf]
    %v70 = vld [vmem:[%s4 + $0x70] sm:$0xf]
    %v71 = vld [vmem:[%s4 + $0x74] sm:$0xf]
    %v72 = vld [vmem:[%s4 + $0x78] sm:$0xf]
    %v73 = vld [vmem:[%s4 + $0x7c] sm:$0xf]
    %v74 = vld [vmem:[%s4 + $0x80] sm:$0xf]
    %v75 = vld [vmem:[%s4 + $0x84] sm:$0xf]
    %v76 = vld [vmem:[%s4 + $0x88] sm:$0xf]
    %v77 = vld [vmem:[%s4 + $0x8c] sm:$0xf]
    %v78 = vld [vmem:[%s4 + $0x90] sm:$0xf]
    %v79 = vld [vmem:[%s4 + $0x94] sm:$0xf]
    %v80 = vld [vmem:[%s4 + $0x98] sm:$0xf]
    %v81 = vld [vmem:[%s4 + $0x9c] sm:$0xf]
    %v82 = vld [vmem:[%s4 + $0xa0] sm:$0xf]
    %v83 = vld [vmem:[%s4 + $0xa4] sm:$0xf]
    %v84 = vld [vmem:[%s4 + $0xa8] sm:$0xf]
    %v85 = vld [vmem:[%s4 + $0xac] sm:$0xf]
    %v86 = vld [vmem:[%s4 + $0xb0] sm:$0xf]
    %v87 = vld [vmem:[%s4 + $0xb4] sm:$0xf]
    %v88 = vld [vmem:[%s4 + $0xb8] sm:$0xf]
    %v89 = vld [vmem:[%s4 + $0xbc] sm:$0xf]
    %v90 = vld [vmem:[%s4 + $0xc0] sm:$0xf]
    %v91 = vld [vmem:[%s4 + $0xc4] sm:$0xf]
    %v92 = vld [vmem:[%s4 + $0xc8] sm:$0xf]
    %v93 = vld [vmem:[%s4 + $0xcc] sm:$0xf]
    %v94 = vld [vmem:[%s4 + $0xd0] sm:$0xf]
    %v95 = vld [vmem:[%s4 + $0xd4] sm:$0xf]
    %v96 = vld [vmem:[%s4 + $0xd8] sm:$0xf]
    %v97 = vld [vmem:[%s4 + $0xdc] sm:$0xf]
    %v98 = vld [vmem:[%s4 + $0xe0] sm:$0xf]
    %v99 = vld [vmem:[%s4 + $0xe4] sm:$0xf]
    %v100 = vld [vmem:[%s4 + $0xe8] sm:$0xf]
    %v101 = vld [vmem:[%s4 + $0xec] sm:$0xf]
    %v102 = vld [vmem:[%s5] sm:$0xff]
    %v103 = vld [vmem:[%s5 + $0x8] sm:$0xff]
    %v104 = vld [vmem:[%s5 + $0x10] sm:$0xff]
    %v105 = vld [vmem:[%s5 + $0x18] sm:$0xff]
    loop: start=0, step=1, limit=2
    $region38: #{eeg_elu_forward.1} parent=1 // loop_pre_header
      _
    $region39: #{eeg_elu_forward.1} parent=1 // loop_header
      %s107 = sphi 0, %s111
      %p108 = scmp.ge.s32.totalorder %s107, 2
    $region40: #{eeg_elu_forward.1} parent=1 // loop_header_branch
      %110 = sbr.rel (%p108) target = $region44
    $region41: #{eeg_elu_forward.1} parent=1 // loop_body
      %s112 = smul.u32 %s107, 32
      %s113 = smul.u32 %s107, 78
      %s114 = smul.addr %s113, 4
      %s115 = scalar_lea.vmem %s0, %s114
      %v116 = vld [vmem:[%s115] sm:$0xff]
      %v117 = vld [vmem:[%s115 + $0x8] sm:$0xff]
      %v118 = vld [vmem:[%s115 + $0x10] sm:$0xff]
      %v119 = vld [vmem:[%s115 + $0x18] sm:$0xff]
      %v120 = vld [vmem:[%s115 + $0x20] sm:$0xff]
      %v121 = vld [vmem:[%s115 + $0x28] sm:$0xff]
      %v122 = vld [vmem:[%s115 + $0x30] sm:$0xff]
      %v123 = vld [vmem:[%s115 + $0x38] sm:$0xff]
      %v124 = vld [vmem:[%s115 + $0x40] sm:$0xff]
      %v125 = vld [vmem:[%s115 + $0x48] sm:$0xff]
      %v126 = vld [vmem:[%s115 + $0x50] sm:$0xff]
      %v127 = vld [vmem:[%s115 + $0x58] sm:$0xff]
      %v128 = vld [vmem:[%s115 + $0x60] sm:$0xff]
      %v129 = vld [vmem:[%s115 + $0x68] sm:$0xff]
      %v130 = vld [vmem:[%s115 + $0x70] sm:$0xff]
      %v131 = vld [vmem:[%s115 + $0x78] sm:$0xff]
      %v132 = vld [vmem:[%s115 + $0x80] sm:$0xff]
      %v133 = vld [vmem:[%s115 + $0x88] sm:$0xff]
      %v134 = vld [vmem:[%s115 + $0x90] sm:$0xff]
      %v135 = vld [vmem:[%s115 + $0x98] sm:$0xff]
      %v136 = vld [vmem:[%s115 + $0xa0] sm:$0xff]
      %v137 = vld [vmem:[%s115 + $0xa8] sm:$0xff]
      %v138 = vld [vmem:[%s115 + $0xb0] sm:$0xff]
      %v139 = vld [vmem:[%s115 + $0xb8] sm:$0xff]
      %v140 = vld [vmem:[%s115 + $0xc0] sm:$0xff]
      %v141 = vld [vmem:[%s115 + $0xc8] sm:$0xff]
      %v142 = vld [vmem:[%s115 + $0xd0] sm:$0xff]
      %v143 = vld [vmem:[%s115 + $0xd8] sm:$0xff]
      %v144 = vld [vmem:[%s115 + $0xe0] sm:$0xff]
      %v145 = vld [vmem:[%s115 + $0xe8] sm:$0xff]
      %v146 = vld [vmem:[%s115 + $0xf0] sm:$0xff]
      %v147 = vld [vmem:[%s115 + $0xf8] sm:$0xff]
      %v148 = vld [vmem:[%s115 + $0x100] sm:$0xff]
      %v149 = vld [vmem:[%s115 + $0x108] sm:$0xff]
      %v150 = vld [vmem:[%s115 + $0x110] sm:$0xff]
      %v151 = vld [vmem:[%s115 + $0x118] sm:$0xff]
      %v152 = vld [vmem:[%s115 + $0x120] sm:$0xff]
      %v153 = vld [vmem:[%s115 + $0x128] sm:$0xff]
      %v154 = vld [vmem:[%s115 + $0x130] sm:$0xff]
      %156 = vset.pattern.permute.xlu0 0
      %157 = vperm.xlu0 %156, %v38
      %v158 = vpop.permute.xlu0 %157
      %161 = vset.pattern.permute.xlu0 0
      %162 = vperm.xlu0 %161, %v39
      %v163 = vpop.permute.xlu0 %162
      %166 = vset.pattern.permute.xlu0 0
      %167 = vperm.xlu0 %166, %v40
      %v168 = vpop.permute.xlu0 %167
      %171 = vset.pattern.permute.xlu0 0
      %172 = vperm.xlu0 %171, %v41
      %v173 = vpop.permute.xlu0 %172
      %v179 = vunpack.c.l.b16 %v34
      %v180 = vunpack.c.l.b16 %v35
      %v181 = vunpack.c.l.b16 %v36
      %v182 = vunpack.c.l.b16 %v37
      %v183 = vpack.c.b16 %v180, %v179
      %v184 = vpack.c.b16 %v182, %v181
      %v224 = vunpack.c.l.b16 %v116
      %v225 = vunpack.c.h.b16 %v116
      %v226 = vunpack.c.l.b16 %v117
      %v227 = vunpack.c.h.b16 %v117
      %v228 = vunpack.c.l.b16 %v118
      %v229 = vunpack.c.h.b16 %v118
      %v230 = vunpack.c.l.b16 %v119
      %v231 = vunpack.c.h.b16 %v119
      %v232 = vunpack.c.l.b16 %v120
      %v233 = vunpack.c.h.b16 %v120
      %v234 = vunpack.c.l.b16 %v121
      %v235 = vunpack.c.h.b16 %v121
      %v236 = vunpack.c.l.b16 %v122
      %v237 = vunpack.c.h.b16 %v122
      %v238 = vunpack.c.l.b16 %v123
      %v239 = vunpack.c.h.b16 %v123
      %v240 = vunpack.c.l.b16 %v124
      %v241 = vunpack.c.h.b16 %v124
      %v242 = vunpack.c.l.b16 %v125
      %v243 = vunpack.c.h.b16 %v125
      %v244 = vunpack.c.l.b16 %v126
      %v245 = vunpack.c.h.b16 %v126
      %v246 = vunpack.c.l.b16 %v127
      %v247 = vunpack.c.h.b16 %v127
      %v248 = vunpack.c.l.b16 %v128
      %v249 = vunpack.c.h.b16 %v128
      %v250 = vunpack.c.l.b16 %v129
      %v251 = vunpack.c.h.b16 %v129
      %v252 = vunpack.c.l.b16 %v130
      %v253 = vunpack.c.h.b16 %v130
      %v254 = vunpack.c.l.b16 %v131
      %v255 = vunpack.c.h.b16 %v131
      %v256 = vunpack.c.l.b16 %v132
      %v257 = vunpack.c.h.b16 %v132
      %v258 = vunpack.c.l.b16 %v133
      %v259 = vunpack.c.h.b16 %v133
      %v260 = vunpack.c.l.b16 %v134
      %v261 = vunpack.c.h.b16 %v134
      %v262 = vunpack.c.l.b16 %v135
      %v263 = vunpack.c.h.b16 %v135
      %v264 = vunpack.c.l.b16 %v136
      %v265 = vunpack.c.h.b16 %v136
      %v266 = vunpack.c.l.b16 %v137
      %v267 = vunpack.c.h.b16 %v137
      %v268 = vunpack.c.l.b16 %v138
      %v269 = vunpack.c.h.b16 %v138
      %v270 = vunpack.c.l.b16 %v139
      %v271 = vunpack.c.h.b16 %v139
      %v272 = vunpack.c.l.b16 %v140
      %v273 = vunpack.c.h.b16 %v140
      %v274 = vunpack.c.l.b16 %v141
      %v275 = vunpack.c.h.b16 %v141
      %v276 = vunpack.c.l.b16 %v142
      %v277 = vunpack.c.h.b16 %v142
      %v278 = vunpack.c.l.b16 %v143
      %v279 = vunpack.c.h.b16 %v143
      %v280 = vunpack.c.l.b16 %v144
      %v281 = vunpack.c.h.b16 %v144
      %v282 = vunpack.c.l.b16 %v145
      %v283 = vunpack.c.h.b16 %v145
      %v284 = vunpack.c.l.b16 %v146
      %v285 = vunpack.c.h.b16 %v146
      %v286 = vunpack.c.l.b16 %v147
      %v287 = vunpack.c.h.b16 %v147
      %v288 = vunpack.c.l.b16 %v148
      %v289 = vunpack.c.h.b16 %v148
      %v290 = vunpack.c.l.b16 %v149
      %v291 = vunpack.c.h.b16 %v149
      %v292 = vunpack.c.l.b16 %v150
      %v293 = vunpack.c.h.b16 %v150
      %v294 = vunpack.c.l.b16 %v151
      %v295 = vunpack.c.h.b16 %v151
      %v296 = vunpack.c.l.b16 %v152
      %v297 = vunpack.c.h.b16 %v152
      %v298 = vunpack.c.l.b16 %v153
      %v299 = vunpack.c.h.b16 %v153
      %v300 = vunpack.c.l.b16 %v154
      %v301 = vunpack.c.h.b16 %v154
      %v302 = vpack.c.b16 %v230, %v224
      %v303 = vpack.c.b16 %v231, %v225
      %v304 = vpack.c.b16 %v232, %v226
      %v305 = vpack.c.b16 %v233, %v227
      %v306 = vpack.c.b16 %v234, %v228
      %v307 = vpack.c.b16 %v235, %v229
      %v308 = vpack.c.b16 %v242, %v236
      %v309 = vpack.c.b16 %v243, %v237
      %v310 = vpack.c.b16 %v244, %v238
      %v311 = vpack.c.b16 %v245, %v239
      %v312 = vpack.c.b16 %v246, %v240
      %v313 = vpack.c.b16 %v247, %v241
      %v314 = vpack.c.b16 %v254, %v248
      %v315 = vpack.c.b16 %v255, %v249
      %v316 = vpack.c.b16 %v256, %v250
      %v317 = vpack.c.b16 %v257, %v251
      %v318 = vpack.c.b16 %v258, %v252
      %v319 = vpack.c.b16 %v259, %v253
      %v320 = vpack.c.b16 %v266, %v260
      %v321 = vpack.c.b16 %v267, %v261
      %v322 = vpack.c.b16 %v268, %v262
      %v323 = vpack.c.b16 %v269, %v263
      %v324 = vpack.c.b16 %v270, %v264
      %v325 = vpack.c.b16 %v271, %v265
      %v326 = vpack.c.b16 %v278, %v272
      %v327 = vpack.c.b16 %v279, %v273
      %v328 = vpack.c.b16 %v280, %v274
      %v329 = vpack.c.b16 %v281, %v275
      %v330 = vpack.c.b16 %v282, %v276
      %v331 = vpack.c.b16 %v283, %v277
      %v332 = vpack.c.b16 %v290, %v284
      %v333 = vpack.c.b16 %v291, %v285
      %v334 = vpack.c.b16 %v292, %v286
      %v335 = vpack.c.b16 %v293, %v287
      %v336 = vpack.c.b16 %v294, %v288
      %v337 = vpack.c.b16 %v295, %v289
      %v338 = vpack.c.b16 %v296, %v296
      %v339 = vpack.c.b16 %v297, %v297
      %v340 = vpack.c.b16 %v298, %v298
      %v341 = vpack.c.b16 %v299, %v299
      %v342 = vpack.c.b16 %v300, %v300
      %v343 = vpack.c.b16 %v301, %v301
      %vm380 = vcmask 850944
      %v382 = vsel %vm380, %v183, 0
      %v385 = vsel %vm380, %v184, 0
      %vm387 = vcmask 1043456
      %v389 = vsel %vm387, %v338, 0
      %v392 = vsel %vm387, %v339, 0
      %v395 = vsel %vm387, %v340, 0
      %v398 = vsel %vm387, %v341, 0
      %v401 = vsel %vm387, %v342, 0
      %v404 = vsel %vm387, %v343, 0
      %406 = vmatprep.subr.bf16.mxu0 %v303
      %407 = vmatpush1.bf16.msra.mxu0 %v302
      %408 = vmatprep.subr.bf16.mxu0 %v309
      %409 = vmatpush1.bf16.msra.mxu0 %v308
      %410 = vmatprep.subr.bf16.mxu0 %v315
      %411 = vmatpush1.bf16.msra.mxu0 %v314
      %412 = vmatprep.subr.bf16.mxu0 %v321
      %413 = vmatpush1.bf16.msra.mxu0 %v320
      %414 = vmatprep.subr.bf16.mxu0 %v327
      %415 = vmatpush1.bf16.msra.mxu0 %v326
      %416 = vmatprep.subr.bf16.mxu0 %v333
      %417 = vmatpush1.bf16.msra.mxu0 %v332
      %418 = vmatprep.subr.bf16.mxu0 %v392
      %419 = vmatpush1.bf16.msra.mxu0 %v389
      %420 = vmatprep.subr.bf16.mxu0 0
      %421 = vmatpush1.bf16.msra.mxu0 0
      %422 = vmatprep.subr.bf16.mxu0 0
      %423 = vmatpush1.bf16.msra.mxu0 0
      %424 = vmatprep.subr.bf16.mxu0 0
      %425 = vmatpush1.bf16.msra.mxu0 0
      %426 = vmatprep.subr.bf16.mxu0 0
      %427 = vmatpush1.bf16.msra.mxu0 0
      %428 = vmatprep.subr.bf16.mxu0 0
      %429 = vmatpush1.bf16.msra.mxu0 0
      %430 = vmatprep.subr.bf16.mxu0 0
      %431 = vmatpush1.bf16.msra.mxu0 0
      %432 = vmatprep.subr.bf16.mxu0 0
      %433 = vmatpush1.bf16.msra.mxu0 0
      %434 = vmatprep.subr.bf16.mxu0 0
      %435 = vmatpush1.bf16.msra.mxu0 0
      %436 = vmatprep.subr.bf16.mxu0 0
      %437 = vmatpush1.bf16.msra.mxu0 0
      %438 = vmatprep.mubr.bf16.mxu0 0
      %439 = vmatmul.mubr.bf16.gmra.mrb[0].mxu0 %v382
      %v440 = vpop.f32.mrb[0].mxu0
      %v441 = vadd.f32 %v158, %v440
      %v442 = vpop.f32.mrb[0].mxu0
      %v443 = vadd.f32 %v158, %v442
      %v444 = vpop.f32.mrb[0].mxu0
      %v445 = vadd.f32 %v163, %v444
      %v446 = vpop.f32.mrb[0].mxu0
      %v447 = vadd.f32 %v163, %v446
      %448 = vmatprep.mubr.bf16.mxu0 0
      %449 = vmatmul.mubr.bf16.gmra.mrb[0].mxu0 %v385
      %v450 = vpop.f32.mrb[0].mxu0
      %v451 = vadd.f32 %v168, %v450
      %v452 = vpop.f32.mrb[0].mxu0
      %v453 = vadd.f32 %v168, %v452
      %v454 = vpop.f32.mrb[0].mxu0
      %v455 = vadd.f32 %v173, %v454
      %v456 = vpop.f32.mrb[0].mxu0
      %v457 = vadd.f32 %v173, %v456
      %458 = vdwg.mxu0
      %459 = vmatprep.subr.bf16.mxu0 %v305
      %460 = vmatpush1.bf16.msra.mxu0 %v304
      %461 = vmatprep.subr.bf16.mxu0 %v311
      %462 = vmatpush1.bf16.msra.mxu0 %v310
      %463 = vmatprep.subr.bf16.mxu0 %v317
      %464 = vmatpush1.bf16.msra.mxu0 %v316
      %465 = vmatprep.subr.bf16.mxu0 %v323
      %466 = vmatpush1.bf16.msra.mxu0 %v322
      %467 = vmatprep.subr.bf16.mxu0 %v329
      %468 = vmatpush1.bf16.msra.mxu0 %v328
      %469 = vmatprep.subr.bf16.mxu0 %v335
      %470 = vmatpush1.bf16.msra.mxu0 %v334
      %471 = vmatprep.subr.bf16.mxu0 %v398
      %472 = vmatpush1.bf16.msra.mxu0 %v395
      %473 = vmatprep.subr.bf16.mxu0 0
      %474 = vmatpush1.bf16.msra.mxu0 0
      %475 = vmatprep.subr.bf16.mxu0 0
      %476 = vmatpush1.bf16.msra.mxu0 0
      %477 = vmatprep.subr.bf16.mxu0 0
      %478 = vmatpush1.bf16.msra.mxu0 0
      %479 = vmatprep.subr.bf16.mxu0 0
      %480 = vmatpush1.bf16.msra.mxu0 0
      %481 = vmatprep.subr.bf16.mxu0 0
      %482 = vmatpush1.bf16.msra.mxu0 0
      %483 = vmatprep.subr.bf16.mxu0 0
      %484 = vmatpush1.bf16.msra.mxu0 0
      %485 = vmatprep.subr.bf16.mxu0 0
      %486 = vmatpush1.bf16.msra.mxu0 0
      %487 = vmatprep.subr.bf16.mxu0 0
      %488 = vmatpush1.bf16.msra.mxu0 0
      %489 = vmatprep.subr.bf16.mxu0 0
      %490 = vmatpush1.bf16.msra.mxu0 0
      %491 = vmatprep.mubr.bf16.mxu0 0
      %492 = vmatmul.mubr.bf16.gmra.mrb[0].mxu0 %v382
      %v493 = vpop.f32.mrb[0].mxu0
      %v494 = vadd.f32 %v158, %v493
      %v495 = vpop.f32.mrb[0].mxu0
      %v496 = vadd.f32 %v158, %v495
      %v497 = vpop.f32.mrb[0].mxu0
      %v498 = vadd.f32 %v163, %v497
      %v499 = vpop.f32.mrb[0].mxu0
      %v500 = vadd.f32 %v163, %v499
      %501 = vmatprep.mubr.bf16.mxu0 0
      %502 = vmatmul.mubr.bf16.gmra.mrb[0].mxu0 %v385
      %v503 = vpop.f32.mrb[0].mxu0
      %v504 = vadd.f32 %v168, %v503
      %v505 = vpop.f32.mrb[0].mxu0
      %v506 = vadd.f32 %v168, %v505
      %v507 = vpop.f32.mrb[0].mxu0
      %v508 = vadd.f32 %v173, %v507
      %v509 = vpop.f32.mrb[0].mxu0
      %v510 = vadd.f32 %v173, %v509
      %511 = vdwg.mxu0
      %512 = vmatprep.subr.bf16.mxu0 %v307
      %513 = vmatpush1.bf16.msra.mxu0 %v306
      %514 = vmatprep.subr.bf16.mxu0 %v313
      %515 = vmatpush1.bf16.msra.mxu0 %v312
      %516 = vmatprep.subr.bf16.mxu0 %v319
      %517 = vmatpush1.bf16.msra.mxu0 %v318
      %518 = vmatprep.subr.bf16.mxu0 %v325
      %519 = vmatpush1.bf16.msra.mxu0 %v324
      %520 = vmatprep.subr.bf16.mxu0 %v331
      %521 = vmatpush1.bf16.msra.mxu0 %v330
      %522 = vmatprep.subr.bf16.mxu0 %v337
      %523 = vmatpush1.bf16.msra.mxu0 %v336
      %524 = vmatprep.subr.bf16.mxu0 %v404
      %525 = vmatpush1.bf16.msra.mxu0 %v401
      %526 = vmatprep.subr.bf16.mxu0 0
      %527 = vmatpush1.bf16.msra.mxu0 0
      %528 = vmatprep.subr.bf16.mxu0 0
      %529 = vmatpush1.bf16.msra.mxu0 0
      %530 = vmatprep.subr.bf16.mxu0 0
      %531 = vmatpush1.bf16.msra.mxu0 0
      %532 = vmatprep.subr.bf16.mxu0 0
      %533 = vmatpush1.bf16.msra.mxu0 0
      %534 = vmatprep.subr.bf16.mxu0 0
      %535 = vmatpush1.bf16.msra.mxu0 0
      %536 = vmatprep.subr.bf16.mxu0 0
      %537 = vmatpush1.bf16.msra.mxu0 0
      %538 = vmatprep.subr.bf16.mxu0 0
      %539 = vmatpush1.bf16.msra.mxu0 0
      %540 = vmatprep.subr.bf16.mxu0 0
      %541 = vmatpush1.bf16.msra.mxu0 0
      %542 = vmatprep.subr.bf16.mxu0 0
      %543 = vmatpush1.bf16.msra.mxu0 0
      %544 = vmatprep.mubr.bf16.mxu0 0
      %545 = vmatmul.mubr.bf16.gmra.mrb[0].mxu0 %v382
      %v546 = vpop.f32.mrb[0].mxu0
      %v547 = vadd.f32 %v158, %v546
      %v548 = vpop.f32.mrb[0].mxu0
      %v549 = vadd.f32 %v158, %v548
      %v550 = vpop.f32.mrb[0].mxu0
      %v551 = vadd.f32 %v163, %v550
      %v552 = vpop.f32.mrb[0].mxu0
      %v553 = vadd.f32 %v163, %v552
      %554 = vmatprep.mubr.bf16.mxu0 0
      %555 = vmatmul.mubr.bf16.gmra.mrb[0].mxu0 %v385
      %v556 = vpop.f32.mrb[0].mxu0
      %v557 = vadd.f32 %v168, %v556
      %v558 = vpop.f32.mrb[0].mxu0
      %v559 = vadd.f32 %v168, %v558
      %v560 = vpop.f32.mrb[0].mxu0
      %v561 = vadd.f32 %v173, %v560
      %v562 = vpop.f32.mrb[0].mxu0
      %v563 = vadd.f32 %v173, %v562
      %564 = vdwg.mxu0
      %vm565 = vcmp.gt.f32.partialorder %v441, 0.0
      %vm566 = vcmp.gt.f32.partialorder %v443, 0.0
      %vm567 = vcmp.gt.f32.partialorder %v494, 0.0
      %vm568 = vcmp.gt.f32.partialorder %v496, 0.0
      %vm569 = vcmp.gt.f32.partialorder %v547, 0.0
      %vm570 = vcmp.gt.f32.partialorder %v549, 0.0
      %vm571 = vcmp.gt.f32.partialorder %v445, 0.0
      %vm572 = vcmp.gt.f32.partialorder %v447, 0.0
      %vm573 = vcmp.gt.f32.partialorder %v498, 0.0
      %vm574 = vcmp.gt.f32.partialorder %v500, 0.0
      %vm575 = vcmp.gt.f32.partialorder %v551, 0.0
      %vm576 = vcmp.gt.f32.partialorder %v553, 0.0
      %vm577 = vcmp.gt.f32.partialorder %v451, 0.0
      %vm578 = vcmp.gt.f32.partialorder %v453, 0.0
      %vm579 = vcmp.gt.f32.partialorder %v504, 0.0
      %vm580 = vcmp.gt.f32.partialorder %v506, 0.0
      %vm581 = vcmp.gt.f32.partialorder %v557, 0.0
      %vm582 = vcmp.gt.f32.partialorder %v559, 0.0
      %vm583 = vcmp.gt.f32.partialorder %v455, 0.0
      %vm584 = vcmp.gt.f32.partialorder %v457, 0.0
      %vm585 = vcmp.gt.f32.partialorder %v508, 0.0
      %vm586 = vcmp.gt.f32.partialorder %v510, 0.0
      %vm587 = vcmp.gt.f32.partialorder %v561, 0.0
      %vm588 = vcmp.gt.f32.partialorder %v563, 0.0
      %v589 = vmin.f32 %v441, 0.0
      %v590 = vmin.f32 %v443, 0.0
      %v591 = vmin.f32 %v494, 0.0
      %v592 = vmin.f32 %v496, 0.0
      %v593 = vmin.f32 %v547, 0.0
      %v594 = vmin.f32 %v549, 0.0
      %v595 = vmin.f32 %v445, 0.0
      %v596 = vmin.f32 %v447, 0.0
      %v597 = vmin.f32 %v498, 0.0
      %v598 = vmin.f32 %v500, 0.0
      %v599 = vmin.f32 %v551, 0.0
      %v600 = vmin.f32 %v553, 0.0
      %v601 = vmin.f32 %v451, 0.0
      %v602 = vmin.f32 %v453, 0.0
      %v603 = vmin.f32 %v504, 0.0
      %v604 = vmin.f32 %v506, 0.0
      %v605 = vmin.f32 %v557, 0.0
      %v606 = vmin.f32 %v559, 0.0
      %v607 = vmin.f32 %v455, 0.0
      %v608 = vmin.f32 %v457, 0.0
      %v609 = vmin.f32 %v508, 0.0
      %v610 = vmin.f32 %v510, 0.0
      %v611 = vmin.f32 %v561, 0.0
      %v612 = vmin.f32 %v563, 0.0
      %v613 = vmul.f32 %v589, 1.442695
      %v614 = vpow.pop %v613
      %v615 = vmul.f32 %v590, 1.442695
      %v616 = vpow.pop %v615
      %v617 = vmul.f32 %v591, 1.442695
      %v618 = vpow.pop %v617
      %v619 = vmul.f32 %v592, 1.442695
      %v620 = vpow.pop %v619
      %v621 = vmul.f32 %v593, 1.442695
      %v622 = vpow.pop %v621
      %v623 = vmul.f32 %v594, 1.442695
      %v624 = vpow.pop %v623
      %v625 = vmul.f32 %v595, 1.442695
      %v626 = vpow.pop %v625
      %v627 = vmul.f32 %v596, 1.442695
      %v628 = vpow.pop %v627
      %v629 = vmul.f32 %v597, 1.442695
      %v630 = vpow.pop %v629
      %v631 = vmul.f32 %v598, 1.442695
      %v632 = vpow.pop %v631
      %v633 = vmul.f32 %v599, 1.442695
      %v634 = vpow.pop %v633
      %v635 = vmul.f32 %v600, 1.442695
      %v636 = vpow.pop %v635
      %v637 = vmul.f32 %v601, 1.442695
      %v638 = vpow.pop %v637
      %v639 = vmul.f32 %v602, 1.442695
      %v640 = vpow.pop %v639
      %v641 = vmul.f32 %v603, 1.442695
      %v642 = vpow.pop %v641
      %v643 = vmul.f32 %v604, 1.442695
      %v644 = vpow.pop %v643
      %v645 = vmul.f32 %v605, 1.442695
      %v646 = vpow.pop %v645
      %v647 = vmul.f32 %v606, 1.442695
      %v648 = vpow.pop %v647
      %v649 = vmul.f32 %v607, 1.442695
      %v650 = vpow.pop %v649
      %v651 = vmul.f32 %v608, 1.442695
      %v652 = vpow.pop %v651
      %v653 = vmul.f32 %v609, 1.442695
      %v654 = vpow.pop %v653
      %v655 = vmul.f32 %v610, 1.442695
      %v656 = vpow.pop %v655
      %v657 = vmul.f32 %v611, 1.442695
      %v658 = vpow.pop %v657
      %v659 = vmul.f32 %v612, 1.442695
      %v660 = vpow.pop %v659
      %v661 = vsub.f32 %v614, 1.0
      %v662 = vsub.f32 %v616, 1.0
      %v663 = vsub.f32 %v618, 1.0
      %v664 = vsub.f32 %v620, 1.0
      %v665 = vsub.f32 %v622, 1.0
      %v666 = vsub.f32 %v624, 1.0
      %v667 = vsub.f32 %v626, 1.0
      %v668 = vsub.f32 %v628, 1.0
      %v669 = vsub.f32 %v630, 1.0
      %v670 = vsub.f32 %v632, 1.0
      %v671 = vsub.f32 %v634, 1.0
      %v672 = vsub.f32 %v636, 1.0
      %v673 = vsub.f32 %v638, 1.0
      %v674 = vsub.f32 %v640, 1.0
      %v675 = vsub.f32 %v642, 1.0
      %v676 = vsub.f32 %v644, 1.0
      %v677 = vsub.f32 %v646, 1.0
      %v678 = vsub.f32 %v648, 1.0
      %v679 = vsub.f32 %v650, 1.0
      %v680 = vsub.f32 %v652, 1.0
      %v681 = vsub.f32 %v654, 1.0
      %v682 = vsub.f32 %v656, 1.0
      %v683 = vsub.f32 %v658, 1.0
      %v684 = vsub.f32 %v660, 1.0
      %v685 = vsel %vm565, %v441, %v661
      %v686 = vsel %vm566, %v443, %v662
      %v687 = vsel %vm567, %v494, %v663
      %v688 = vsel %vm568, %v496, %v664
      %v689 = vsel %vm569, %v547, %v665
      %v690 = vsel %vm570, %v549, %v666
      %v691 = vsel %vm571, %v445, %v667
      %v692 = vsel %vm572, %v447, %v668
      %v693 = vsel %vm573, %v498, %v669
      %v694 = vsel %vm574, %v500, %v670
      %v695 = vsel %vm575, %v551, %v671
      %v696 = vsel %vm576, %v553, %v672
      %v697 = vsel %vm577, %v451, %v673
      %v698 = vsel %vm578, %v453, %v674
      %v699 = vsel %vm579, %v504, %v675
      %v700 = vsel %vm580, %v506, %v676
      %v701 = vsel %vm581, %v557, %v677
      %v702 = vsel %vm582, %v559, %v678
      %v703 = vsel %vm583, %v455, %v679
      %v704 = vsel %vm584, %v457, %v680
      %v705 = vsel %vm585, %v508, %v681
      %v706 = vsel %vm586, %v510, %v682
      %v707 = vsel %vm587, %v561, %v683
      %v708 = vsel %vm588, %v563, %v684
      %v709 = vpack.c.bf16 %v691, %v685
      %v710 = vpack.c.bf16 %v692, %v686
      %v711 = vpack.c.bf16 %v693, %v687
      %v712 = vpack.c.bf16 %v694, %v688
      %v713 = vpack.c.bf16 %v695, %v689
      %v714 = vpack.c.bf16 %v696, %v690
      %v715 = vpack.c.bf16 %v703, %v697
      %v716 = vpack.c.bf16 %v704, %v698
      %v717 = vpack.c.bf16 %v705, %v699
      %v718 = vpack.c.bf16 %v706, %v700
      %v719 = vpack.c.bf16 %v707, %v701
      %v720 = vpack.c.bf16 %v708, %v702
      %s721 = sshra.s32 %s112, 4
      %s722 = sand.u32 %s112, 15
      %s723 = smul.u32 %s721, 6
      %s724 = smul.addr %s723, 8
      %s725 = scalar_lea.vmem [#allocation2], %s724
      %726 = vst [vmem:[%s725] sm:$0xff] %v709
      %727 = vst [vmem:[%s725 + $0x8] sm:$0xff] %v710
      %728 = vst [vmem:[%s725 + $0x10] sm:$0xff] %v711
      %729 = vst [vmem:[%s725 + $0x18] sm:$0xff] %v712
      %730 = vst [vmem:[%s725 + $0x20] sm:$0xff] %v713
      %vm731 = vcmask 900096
      %732 = vst.msk [vmem:[%s725 + $0x28] sm:$0xff] %vm731, %v714
      %733 = vst [vmem:[%s725 + $0x30] sm:$0xff] %v715
      %734 = vst [vmem:[%s725 + $0x38] sm:$0xff] %v716
      %735 = vst [vmem:[%s725 + $0x40] sm:$0xff] %v717
      %736 = vst [vmem:[%s725 + $0x48] sm:$0xff] %v718
      %737 = vst [vmem:[%s725 + $0x50] sm:$0xff] %v719
      %738 = vst.msk [vmem:[%s725 + $0x58] sm:$0xff] %vm731, %v720
    $region42: #{eeg_elu_forward.1} parent=1 // loop_footer
      %s111 = sadd.s32 1, %s107
    $region43: #{eeg_elu_forward.1} parent=1 // loop_footer_branch
      %106 = sbr.rel target = $region39
    $region44: #{eeg_elu_forward.1} parent=1 // loop_exit
      _
    %v739 = vld [vmem:[#allocation2] sm:$0xff]
    %v740 = vld [vmem:[#allocation2 + $0x8] sm:$0xff]
    %v741 = vld [vmem:[#allocation2 + $0x10] sm:$0xff]
    %v742 = vld [vmem:[#allocation2 + $0x18] sm:$0xff]
    %v743 = vld [vmem:[#allocation2 + $0x20] sm:$0xff]
    %v744 = vld [vmem:[#allocation2 + $0x28] sm:$0xff]
    %v745 = vld [vmem:[#allocation2 + $0x30] sm:$0xff]
    %v746 = vld [vmem:[#allocation2 + $0x38] sm:$0xff]
    %v747 = vld [vmem:[#allocation2 + $0x40] sm:$0xff]
    %v748 = vld [vmem:[#allocation2 + $0x48] sm:$0xff]
    %v749 = vld [vmem:[#allocation2 + $0x50] sm:$0xff]
    %v750 = vld [vmem:[#allocation2 + $0x58] sm:$0xff]
    %v751 = vld [vmem:[#allocation2 + $0x60] sm:$0xff]
    %v752 = vld [vmem:[#allocation2 + $0x68] sm:$0xff]
    %v753 = vld [vmem:[#allocation2 + $0x70] sm:$0xff]
    %v754 = vld [vmem:[#allocation2 + $0x78] sm:$0xff]
    %v755 = vld [vmem:[#allocation2 + $0x80] sm:$0xff]
    %v756 = vld [vmem:[#allocation2 + $0x88] sm:$0xff]
    %v757 = vld [vmem:[#allocation2 + $0x90] sm:$0xff]
    %v758 = vld [vmem:[#allocation2 + $0x98] sm:$0xff]
    %v759 = vld [vmem:[#allocation2 + $0xa0] sm:$0xff]
    %v760 = vld [vmem:[#allocation2 + $0xa8] sm:$0xff]
    %v761 = vld [vmem:[#allocation2 + $0xb0] sm:$0xff]
    %v762 = vld [vmem:[#allocation2 + $0xb8] sm:$0xff]
    %v763 = vld [vmem:[%s3] sm:$0xff]
    %v764 = vld [vmem:[%s3 + $0x8] sm:$0xff]
    %v765 = vld [vmem:[%s3 + $0x10] sm:$0xff]
    %v766 = vld [vmem:[%s3 + $0x18] sm:$0xff]
    %v767 = vld [vmem:[%s3 + $0x20] sm:$0xff]
    %v768 = vld [vmem:[%s3 + $0x28] sm:$0xff]
    %v769 = vld [vmem:[%s3 + $0x30] sm:$0xff]
    %v770 = vld [vmem:[%s3 + $0x38] sm:$0xff]
    %v771 = vld [vmem:[%s3 + $0x40] sm:$0xff]
    %v772 = vld [vmem:[%s3 + $0x48] sm:$0xff]
    %v773 = vld [vmem:[%s3 + $0x50] sm:$0xff]
    %v774 = vld [vmem:[%s3 + $0x58] sm:$0xff]
    %v775 = vld [vmem:[%s3 + $0x60] sm:$0xff]
    %v776 = vld [vmem:[%s3 + $0x68] sm:$0xff]
    %v777 = vld [vmem:[%s3 + $0x70] sm:$0xff]
    %v778 = vld [vmem:[%s3 + $0x78] sm:$0xff]
    %v779 = vld [vmem:[%s3 + $0x80] sm:$0xff]
    %v780 = vld [vmem:[%s3 + $0x88] sm:$0xff]
    %v781 = vld [vmem:[%s3 + $0x90] sm:$0xff]
    %v782 = vld [vmem:[%s3 + $0x98] sm:$0xff]
    %v783 = vld [vmem:[%s3 + $0xa0] sm:$0xff]
    %v784 = vld [vmem:[%s3 + $0xa8] sm:$0xff]
    %v785 = vld [vmem:[%s3 + $0xb0] sm:$0xff]
    %v786 = vld [vmem:[%s3 + $0xb8] sm:$0xff]
    %v787 = vld [vmem:[%s3 + $0xc0] sm:$0xff]
    %v788 = vld [vmem:[%s3 + $0xc8] sm:$0xff]
    %v789 = vld [vmem:[%s3 + $0xd0] sm:$0xff]
    %v790 = vld [vmem:[%s3 + $0xd8] sm:$0xff]
    %v791 = vld [vmem:[%s3 + $0xe0] sm:$0xff]
    %v792 = vld [vmem:[%s3 + $0xe8] sm:$0xff]
    %v793 = vld [vmem:[%s3 + $0xf0] sm:$0xff]
    %v794 = vld [vmem:[%s3 + $0xf8] sm:$0xff]
    %v795 = vld [vmem:[%s3 + $0x100] sm:$0xff]
    %v796 = vld [vmem:[%s3 + $0x108] sm:$0xff]
    %v797 = vld [vmem:[%s3 + $0x110] sm:$0xff]
    %v798 = vld [vmem:[%s3 + $0x118] sm:$0xff]
    %v799 = vld [vmem:[%s3 + $0x120] sm:$0xff]
    %v800 = vld [vmem:[%s3 + $0x128] sm:$0xff]
    %v801 = vld [vmem:[%s3 + $0x130] sm:$0xff]
    %v802 = vld [vmem:[%s3 + $0x138] sm:$0xff]
    %v803 = vld [vmem:[%s3 + $0x140] sm:$0xff]
    %v804 = vld [vmem:[%s3 + $0x148] sm:$0xff]
    %v805 = vld [vmem:[%s3 + $0x150] sm:$0xff]
    %v806 = vld [vmem:[%s3 + $0x158] sm:$0xff]
    %v807 = vld [vmem:[%s3 + $0x160] sm:$0xff]
    %v808 = vld [vmem:[%s3 + $0x168] sm:$0xff]
    %v809 = vld [vmem:[%s3 + $0x170] sm:$0xff]
    %v810 = vld [vmem:[%s3 + $0x178] sm:$0xff]
    %v811 = vld [vmem:[%s3 + $0x180] sm:$0xff]
    %v812 = vld [vmem:[%s3 + $0x188] sm:$0xff]
    %v813 = vld [vmem:[%s3 + $0x190] sm:$0xff]
    %v814 = vld [vmem:[%s3 + $0x198] sm:$0xff]
    %v815 = vld [vmem:[%s3 + $0x1a0] sm:$0xff]
    %v816 = vld [vmem:[%s3 + $0x1a8] sm:$0xff]
    %v817 = vld [vmem:[%s3 + $0x1b0] sm:$0xff]
    %v818 = vld [vmem:[%s3 + $0x1b8] sm:$0xff]
    %v819 = vld [vmem:[%s3 + $0x1c0] sm:$0xff]
    %v820 = vld [vmem:[%s3 + $0x1c8] sm:$0xff]
    %v821 = vld [vmem:[%s3 + $0x1d0] sm:$0xff]
    %v822 = vld [vmem:[%s3 + $0x1d8] sm:$0xff]
    %v823 = vld [vmem:[%s3 + $0x1e0] sm:$0xff]
    %v824 = vld [vmem:[%s3 + $0x1e8] sm:$0xff]
    %v825 = vld [vmem:[%s3 + $0x1f0] sm:$0xff]
    %v826 = vld [vmem:[%s3 + $0x1f8] sm:$0xff]
    %v827 = vld [vmem:[%s3 + $0x200] sm:$0xff]
    %v828 = vld [vmem:[%s3 + $0x208] sm:$0xff]
    %v829 = vld [vmem:[%s3 + $0x210] sm:$0xff]
    %v830 = vld [vmem:[%s3 + $0x218] sm:$0xff]
    %v831 = vld [vmem:[%s3 + $0x220] sm:$0xff]
    %v832 = vld [vmem:[%s3 + $0x228] sm:$0xff]
    %v833 = vld [vmem:[%s3 + $0x230] sm:$0xff]
    %v834 = vld [vmem:[%s3 + $0x238] sm:$0xff]
    %v835 = vld [vmem:[%s3 + $0x240] sm:$0xff]
    %v836 = vld [vmem:[%s3 + $0x248] sm:$0xff]
    %v837 = vld [vmem:[%s3 + $0x250] sm:$0xff]
    %v838 = vld [vmem:[%s3 + $0x258] sm:$0xff]
    %v839 = vld [vmem:[%s3 + $0x260] sm:$0xff]
    %v840 = vld [vmem:[%s3 + $0x268] sm:$0xff]
    %v841 = vld [vmem:[%s3 + $0x270] sm:$0xff]
    %v842 = vld [vmem:[%s3 + $0x278] sm:$0xff]
    %v843 = vld [vmem:[%s3 + $0x280] sm:$0xff]
    %v844 = vld [vmem:[%s3 + $0x288] sm:$0xff]
    %v845 = vld [vmem:[%s3 + $0x290] sm:$0xff]
    %v846 = vld [vmem:[%s3 + $0x298] sm:$0xff]
    %v847 = vld [vmem:[%s3 + $0x2a0] sm:$0xff]
    %v848 = vld [vmem:[%s3 + $0x2a8] sm:$0xff]
    %v849 = vld [vmem:[%s3 + $0x2b0] sm:$0xff]
    %v850 = vld [vmem:[%s3 + $0x2b8] sm:$0xff]
    %v851 = vld [vmem:[%s3 + $0x2c0] sm:$0xff]
    %v852 = vld [vmem:[%s3 + $0x2c8] sm:$0xff]
    %v853 = vld [vmem:[%s3 + $0x2d0] sm:$0xff]
    %v854 = vld [vmem:[%s3 + $0x2d8] sm:$0xff]
    %v855 = vld [vmem:[%s3 + $0x2e0] sm:$0xff]
    %v856 = vld [vmem:[%s3 + $0x2e8] sm:$0x77]
    %v951 = vunpack.c.l.b16 %v763
    %v952 = vunpack.c.h.b16 %v763
    %v953 = vunpack.c.l.b16 %v764
    %v954 = vunpack.c.h.b16 %v764
    %v955 = vunpack.c.l.b16 %v765
    %v956 = vunpack.c.h.b16 %v765
    %v957 = vunpack.c.l.b16 %v766
    %v958 = vunpack.c.h.b16 %v766
    %v959 = vunpack.c.l.b16 %v767
    %v960 = vunpack.c.h.b16 %v767
    %v961 = vunpack.c.l.b16 %v768
    %v962 = vunpack.c.h.b16 %v768
    %v963 = vunpack.c.l.b16 %v769
    %v964 = vunpack.c.h.b16 %v769
    %v965 = vunpack.c.l.b16 %v770
    %v966 = vunpack.c.h.b16 %v770
    %v967 = vunpack.c.l.b16 %v771
    %v968 = vunpack.c.h.b16 %v771
    %v969 = vunpack.c.l.b16 %v772
    %v970 = vunpack.c.h.b16 %v772
    %v971 = vunpack.c.l.b16 %v773
    %v972 = vunpack.c.h.b16 %v773
    %v973 = vunpack.c.l.b16 %v774
    %v974 = vunpack.c.h.b16 %v774
    %v975 = vunpack.c.l.b16 %v775
    %v976 = vunpack.c.h.b16 %v775
    %v977 = vunpack.c.l.b16 %v776
    %v978 = vunpack.c.h.b16 %v776
    %v979 = vunpack.c.l.b16 %v777
    %v980 = vunpack.c.h.b16 %v777
    %v981 = vunpack.c.l.b16 %v778
    %v982 = vunpack.c.h.b16 %v778
    %v983 = vunpack.c.l.b16 %v779
    %v984 = vunpack.c.h.b16 %v779
    %v985 = vunpack.c.l.b16 %v780
    %v986 = vunpack.c.h.b16 %v780
    %v987 = vunpack.c.l.b16 %v781
    %v988 = vunpack.c.h.b16 %v781
    %v989 = vunpack.c.l.b16 %v782
    %v990 = vunpack.c.h.b16 %v782
    %v991 = vunpack.c.l.b16 %v783
    %v992 = vunpack.c.h.b16 %v783
    %v993 = vunpack.c.l.b16 %v784
    %v994 = vunpack.c.h.b16 %v784
    %v995 = vunpack.c.l.b16 %v785
    %v996 = vunpack.c.h.b16 %v785
    %v997 = vunpack.c.l.b16 %v786
    %v998 = vunpack.c.h.b16 %v786
    %v999 = vunpack.c.l.b16 %v787
    %v1000 = vunpack.c.h.b16 %v787
    %v1001 = vunpack.c.l.b16 %v788
    %v1002 = vunpack.c.h.b16 %v788
    %v1003 = vunpack.c.l.b16 %v789
    %v1004 = vunpack.c.h.b16 %v789
    %v1005 = vunpack.c.l.b16 %v790
    %v1006 = vunpack.c.h.b16 %v790
    %v1007 = vunpack.c.l.b16 %v791
    %v1008 = vunpack.c.h.b16 %v791
    %v1009 = vunpack.c.l.b16 %v792
    %v1010 = vunpack.c.h.b16 %v792
    %v1011 = vunpack.c.l.b16 %v793
    %v1012 = vunpack.c.h.b16 %v793
    %v1013 = vunpack.c.l.b16 %v794
    %v1014 = vunpack.c.h.b16 %v794
    %v1015 = vunpack.c.l.b16 %v795
    %v1016 = vunpack.c.h.b16 %v795
    %v1017 = vunpack.c.l.b16 %v796
    %v1018 = vunpack.c.h.b16 %v796
    %v1019 = vunpack.c.l.b16 %v797
    %v1020 = vunpack.c.h.b16 %v797
    %v1021 = vunpack.c.l.b16 %v798
    %v1022 = vunpack.c.h.b16 %v798
    %v1023 = vunpack.c.l.b16 %v799
    %v1024 = vunpack.c.h.b16 %v799
    %v1025 = vunpack.c.l.b16 %v800
    %v1026 = vunpack.c.h.b16 %v800
    %v1027 = vunpack.c.l.b16 %v801
    %v1028 = vunpack.c.h.b16 %v801
    %v1029 = vunpack.c.l.b16 %v802
    %v1030 = vunpack.c.h.b16 %v802
    %v1031 = vunpack.c.l.b16 %v803
    %v1032 = vunpack.c.h.b16 %v803
    %v1033 = vunpack.c.l.b16 %v804
    %v1034 = vunpack.c.h.b16 %v804
    %v1035 = vunpack.c.l.b16 %v805
    %v1036 = vunpack.c.h.b16 %v805
    %v1037 = vunpack.c.l.b16 %v806
    %v1038 = vunpack.c.h.b16 %v806
    %v1039 = vunpack.c.l.b16 %v807
    %v1040 = vunpack.c.h.b16 %v807
    %v1041 = vunpack.c.l.b16 %v808
    %v1042 = vunpack.c.h.b16 %v808
    %v1043 = vunpack.c.l.b16 %v809
    %v1044 = vunpack.c.h.b16 %v809
    %v1045 = vunpack.c.l.b16 %v810
    %v1046 = vunpack.c.h.b16 %v810
    %v1047 = vunpack.c.l.b16 %v811
    %v1048 = vunpack.c.h.b16 %v811
    %v1049 = vunpack.c.l.b16 %v812
    %v1050 = vunpack.c.h.b16 %v812
    %v1051 = vunpack.c.l.b16 %v813
    %v1052 = vunpack.c.h.b16 %v813
    %v1053 = vunpack.c.l.b16 %v814
    %v1054 = vunpack.c.h.b16 %v814
    %v1055 = vunpack.c.l.b16 %v815
    %v1056 = vunpack.c.h.b16 %v815
    %v1057 = vunpack.c.l.b16 %v816
    %v1058 = vunpack.c.h.b16 %v816
    %v1059 = vunpack.c.l.b16 %v817
    %v1060 = vunpack.c.h.b16 %v817
    %v1061 = vunpack.c.l.b16 %v818
    %v1062 = vunpack.c.h.b16 %v818
    %v1063 = vunpack.c.l.b16 %v819
    %v1064 = vunpack.c.h.b16 %v819
    %v1065 = vunpack.c.l.b16 %v820
    %v1066 = vunpack.c.h.b16 %v820
    %v1067 = vunpack.c.l.b16 %v821
    %v1068 = vunpack.c.h.b16 %v821
    %v1069 = vunpack.c.l.b16 %v822
    %v1070 = vunpack.c.h.b16 %v822
    %v1071 = vunpack.c.l.b16 %v823
    %v1072 = vunpack.c.h.b16 %v823
    %v1073 = vunpack.c.l.b16 %v824
    %v1074 = vunpack.c.h.b16 %v824
    %v1075 = vunpack.c.l.b16 %v825
    %v1076 = vunpack.c.h.b16 %v825
    %v1077 = vunpack.c.l.b16 %v826
    %v1078 = vunpack.c.h.b16 %v826
    %v1079 = vunpack.c.l.b16 %v827
    %v1080 = vunpack.c.h.b16 %v827
    %v1081 = vunpack.c.l.b16 %v828
    %v1082 = vunpack.c.h.b16 %v828
    %v1083 = vunpack.c.l.b16 %v829
    %v1084 = vunpack.c.h.b16 %v829
    %v1085 = vunpack.c.l.b16 %v830
    %v1086 = vunpack.c.h.b16 %v830
    %v1087 = vunpack.c.l.b16 %v831
    %v1088 = vunpack.c.h.b16 %v831
    %v1089 = vunpack.c.l.b16 %v832
    %v1090 = vunpack.c.h.b16 %v832
    %v1091 = vunpack.c.l.b16 %v833
    %v1092 = vunpack.c.h.b16 %v833
    %v1093 = vunpack.c.l.b16 %v834
    %v1094 = vunpack.c.h.b16 %v834
    %v1095 = vunpack.c.l.b16 %v835
    %v1096 = vunpack.c.h.b16 %v835
    %v1097 = vunpack.c.l.b16 %v836
    %v1098 = vunpack.c.h.b16 %v836
    %v1099 = vunpack.c.l.b16 %v837
    %v1100 = vunpack.c.h.b16 %v837
    %v1101 = vunpack.c.l.b16 %v838
    %v1102 = vunpack.c.h.b16 %v838
    %v1103 = vunpack.c.l.b16 %v839
    %v1104 = vunpack.c.h.b16 %v839
    %v1105 = vunpack.c.l.b16 %v840
    %v1106 = vunpack.c.h.b16 %v840
    %v1107 = vunpack.c.l.b16 %v841
    %v1108 = vunpack.c.h.b16 %v841
    %v1109 = vunpack.c.l.b16 %v842
    %v1110 = vunpack.c.h.b16 %v842
    %v1111 = vunpack.c.l.b16 %v843
    %v1112 = vunpack.c.h.b16 %v843
    %v1113 = vunpack.c.l.b16 %v844
    %v1114 = vunpack.c.h.b16 %v844
    %v1115 = vunpack.c.l.b16 %v845
    %v1116 = vunpack.c.h.b16 %v845
    %v1117 = vunpack.c.l.b16 %v846
    %v1118 = vunpack.c.h.b16 %v846
    %v1119 = vunpack.c.l.b16 %v847
    %v1120 = vunpack.c.h.b16 %v847
    %v1121 = vunpack.c.l.b16 %v848
    %v1122 = vunpack.c.h.b16 %v848
    %v1123 = vunpack.c.l.b16 %v849
    %v1124 = vunpack.c.h.b16 %v849
    %v1125 = vunpack.c.l.b16 %v850
    %v1126 = vunpack.c.h.b16 %v850
    %v1127 = vunpack.c.l.b16 %v851
    %v1128 = vunpack.c.h.b16 %v851
    %v1129 = vunpack.c.l.b16 %v852
    %v1130 = vunpack.c.h.b16 %v852
    %v1131 = vunpack.c.l.b16 %v853
    %v1132 = vunpack.c.h.b16 %v853
    %v1133 = vunpack.c.l.b16 %v854
    %v1134 = vunpack.c.h.b16 %v854
    %v1135 = vunpack.c.l.b16 %v855
    %v1136 = vunpack.c.h.b16 %v855
    %v1137 = vunpack.c.l.b16 %v856
    %v1138 = vunpack.c.h.b16 %v856
    %v1139 = vpack.c.b16 %v953, %v951
    %v1140 = vpack.c.b16 %v954, %v952
    %v1141 = vpack.c.b16 %v957, %v955
    %v1142 = vpack.c.b16 %v958, %v956
    %v1143 = vpack.c.b16 %v961, %v959
    %v1144 = vpack.c.b16 %v962, %v960
    %v1145 = vpack.c.b16 %v965, %v963
    %v1146 = vpack.c.b16 %v966, %v964
    %v1147 = vpack.c.b16 %v969, %v967
    %v1148 = vpack.c.b16 %v970, %v968
    %v1149 = vpack.c.b16 %v973, %v971
    %v1150 = vpack.c.b16 %v974, %v972
    %v1151 = vpack.c.b16 %v977, %v975
    %v1152 = vpack.c.b16 %v978, %v976
    %v1153 = vpack.c.b16 %v981, %v979
    %v1154 = vpack.c.b16 %v982, %v980
    %v1155 = vpack.c.b16 %v985, %v983
    %v1156 = vpack.c.b16 %v986, %v984
    %v1157 = vpack.c.b16 %v989, %v987
    %v1158 = vpack.c.b16 %v990, %v988
    %v1159 = vpack.c.b16 %v993, %v991
    %v1160 = vpack.c.b16 %v994, %v992
    %v1161 = vpack.c.b16 %v997, %v995
    %v1162 = vpack.c.b16 %v998, %v996
    %v1163 = vpack.c.b16 %v1001, %v999
    %v1164 = vpack.c.b16 %v1002, %v1000
    %v1165 = vpack.c.b16 %v1005, %v1003
    %v1166 = vpack.c.b16 %v1006, %v1004
    %v1167 = vpack.c.b16 %v1009, %v1007
    %v1168 = vpack.c.b16 %v1010, %v1008
    %v1169 = vpack.c.b16 %v1013, %v1011
    %v1170 = vpack.c.b16 %v1014, %v1012
    %v1171 = vpack.c.b16 %v1017, %v1015
    %v1172 = vpack.c.b16 %v1018, %v1016
    %v1173 = vpack.c.b16 %v1021, %v1019
    %v1174 = vpack.c.b16 %v1022, %v1020
    %v1175 = vpack.c.b16 %v1025, %v1023
    %v1176 = vpack.c.b16 %v1026, %v1024
    %v1177 = vpack.c.b16 %v1029, %v1027
    %v1178 = vpack.c.b16 %v1030, %v1028
    %v1179 = vpack.c.b16 %v1033, %v1031
    %v1180 = vpack.c.b16 %v1034, %v1032
    %v1181 = vpack.c.b16 %v1037, %v1035
    %v1182 = vpack.c.b16 %v1038, %v1036
    %v1183 = vpack.c.b16 %v1041, %v1039
    %v1184 = vpack.c.b16 %v1042, %v1040
    %v1185 = vpack.c.b16 %v1045, %v1043
    %v1186 = vpack.c.b16 %v1046, %v1044
    %v1187 = vpack.c.b16 %v1049, %v1047
    %v1188 = vpack.c.b16 %v1050, %v1048
    %v1189 = vpack.c.b16 %v1053, %v1051
    %v1190 = vpack.c.b16 %v1054, %v1052
    %v1191 = vpack.c.b16 %v1057, %v1055
    %v1192 = vpack.c.b16 %v1058, %v1056
    %v1193 = vpack.c.b16 %v1061, %v1059
    %v1194 = vpack.c.b16 %v1062, %v1060
    %v1195 = vpack.c.b16 %v1065, %v1063
    %v1196 = vpack.c.b16 %v1066, %v1064
    %v1197 = vpack.c.b16 %v1069, %v1067
    %v1198 = vpack.c.b16 %v1070, %v1068
    %v1199 = vpack.c.b16 %v1073, %v1071
    %v1200 = vpack.c.b16 %v1074, %v1072
    %v1201 = vpack.c.b16 %v1077, %v1075
    %v1202 = vpack.c.b16 %v1078, %v1076
    %v1203 = vpack.c.b16 %v1081, %v1079
    %v1204 = vpack.c.b16 %v1082, %v1080
    %v1205 = vpack.c.b16 %v1085, %v1083
    %v1206 = vpack.c.b16 %v1086, %v1084
    %v1207 = vpack.c.b16 %v1089, %v1087
    %v1208 = vpack.c.b16 %v1090, %v1088
    %v1209 = vpack.c.b16 %v1093, %v1091
    %v1210 = vpack.c.b16 %v1094, %v1092
    %v1211 = vpack.c.b16 %v1097, %v1095
    %v1212 = vpack.c.b16 %v1098, %v1096
    %v1213 = vpack.c.b16 %v1101, %v1099
    %v1214 = vpack.c.b16 %v1102, %v1100
    %v1215 = vpack.c.b16 %v1105, %v1103
    %v1216 = vpack.c.b16 %v1106, %v1104
    %v1217 = vpack.c.b16 %v1109, %v1107
    %v1218 = vpack.c.b16 %v1110, %v1108
    %v1219 = vpack.c.b16 %v1113, %v1111
    %v1220 = vpack.c.b16 %v1114, %v1112
    %v1221 = vpack.c.b16 %v1117, %v1115
    %v1222 = vpack.c.b16 %v1118, %v1116
    %v1223 = vpack.c.b16 %v1121, %v1119
    %v1224 = vpack.c.b16 %v1122, %v1120
    %v1225 = vpack.c.b16 %v1125, %v1123
    %v1226 = vpack.c.b16 %v1126, %v1124
    %v1227 = vpack.c.b16 %v1129, %v1127
    %v1228 = vpack.c.b16 %v1130, %v1128
    %v1229 = vpack.c.b16 %v1133, %v1131
    %v1230 = vpack.c.b16 %v1134, %v1132
    %v1231 = vpack.c.b16 %v1137, %v1135
    %v1232 = vpack.c.b16 %v1138, %v1136
    %vm1325 = vcmask 900096
    %v1327 = vsel %vm1325, %v744, 0
    %v1330 = vsel %vm1325, %v750, 0
    %v1333 = vsel %vm1325, %v756, 0
    %v1336 = vsel %vm1325, %v762, 0
    %vm1338 = vcmask 1046528
    %v1340 = vsel %vm1338, %v1231, 0
    %v1343 = vsel %vm1338, %v1232, 0
    %1345 = vmatprep.subr.bf16.mxu0 %v1140
    %1346 = vmatpush1.bf16.msra.mxu0 %v1139
    %1347 = vmatprep.subr.bf16.mxu0 %v1142
    %1348 = vmatpush1.bf16.msra.mxu0 %v1141
    %1349 = vmatprep.subr.bf16.mxu0 %v1144
    %1350 = vmatpush1.bf16.msra.mxu0 %v1143
    %1351 = vmatprep.subr.bf16.mxu0 %v1146
    %1352 = vmatpush1.bf16.msra.mxu0 %v1145
    %1353 = vmatprep.subr.bf16.mxu0 %v1148
    %1354 = vmatpush1.bf16.msra.mxu0 %v1147
    %1355 = vmatprep.subr.bf16.mxu0 %v1150
    %1356 = vmatpush1.bf16.msra.mxu0 %v1149
    %1357 = vmatprep.subr.bf16.mxu0 %v1152
    %1358 = vmatpush1.bf16.msra.mxu0 %v1151
    %1359 = vmatprep.subr.bf16.mxu0 %v1154
    %1360 = vmatpush1.bf16.msra.mxu0 %v1153
    %1361 = vmatprep.subr.bf16.mxu0 %v1156
    %1362 = vmatpush1.bf16.msra.mxu0 %v1155
    %1363 = vmatprep.subr.bf16.mxu0 %v1158
    %1364 = vmatpush1.bf16.msra.mxu0 %v1157
    %1365 = vmatprep.subr.bf16.mxu0 %v1160
    %1366 = vmatpush1.bf16.msra.mxu0 %v1159
    %1367 = vmatprep.subr.bf16.mxu0 %v1162
    %1368 = vmatpush1.bf16.msra.mxu0 %v1161
    %1369 = vmatprep.subr.bf16.mxu0 %v1164
    %1370 = vmatpush1.bf16.msra.mxu0 %v1163
    %1371 = vmatprep.subr.bf16.mxu0 %v1166
    %1372 = vmatpush1.bf16.msra.mxu0 %v1165
    %1373 = vmatprep.subr.bf16.mxu0 %v1168
    %1374 = vmatpush1.bf16.msra.mxu0 %v1167
    %1375 = vmatprep.subr.bf16.mxu0 %v1170
    %1376 = vmatpush1.bf16.msra.mxu0 %v1169
    %1377 = vmatprep.mubr.bf16.mxu0 %v740
    %1378 = vmatmul.mubr.bf16.gmra.mrb[0].mxu0 %v739
    %v1379 = vpop.f32.mrb[0].mxu0
    %v1380 = vadd.f32 0.0, %v1379
    %v1381 = vpop.f32.mrb[0].mxu0
    %v1382 = vadd.f32 0.0, %v1381
    %v1383 = vpop.f32.mrb[0].mxu0
    %v1384 = vadd.f32 0.0, %v1383
    %v1385 = vpop.f32.mrb[0].mxu0
    %v1386 = vadd.f32 0.0, %v1385
    %1387 = vmatprep.mubr.bf16.mxu0 %v746
    %1388 = vmatmul.mubr.bf16.gmra.mrb[0].mxu0 %v745
    %v1389 = vpop.f32.mrb[0].mxu0
    %v1390 = vadd.f32 0.0, %v1389
    %v1391 = vpop.f32.mrb[0].mxu0
    %v1392 = vadd.f32 0.0, %v1391
    %v1393 = vpop.f32.mrb[0].mxu0
    %v1394 = vadd.f32 0.0, %v1393
    %v1395 = vpop.f32.mrb[0].mxu0
    %v1396 = vadd.f32 0.0, %v1395
    %1397 = vmatprep.mubr.bf16.mxu0 %v752
    %1398 = vmatmul.mubr.bf16.gmra.mrb[0].mxu0 %v751
    %v1399 = vpop.f32.mrb[0].mxu0
    %v1400 = vadd.f32 0.0, %v1399
    %v1401 = vpop.f32.mrb[0].mxu0
    %v1402 = vadd.f32 0.0, %v1401
    %v1403 = vpop.f32.mrb[0].mxu0
    %v1404 = vadd.f32 0.0, %v1403
    %v1405 = vpop.f32.mrb[0].mxu0
    %v1406 = vadd.f32 0.0, %v1405
    %1407 = vmatprep.mubr.bf16.mxu0 %v758
    %1408 = vmatmul.mubr.bf16.gmra.mrb[0].mxu0 %v757
    %v1409 = vpop.f32.mrb[0].mxu0
    %v1410 = vadd.f32 0.0, %v1409
    %v1411 = vpop.f32.mrb[0].mxu0
    %v1412 = vadd.f32 0.0, %v1411
    %v1413 = vpop.f32.mrb[0].mxu0
    %v1414 = vadd.f32 0.0, %v1413
    %v1415 = vpop.f32.mrb[0].mxu0
    %v1416 = vadd.f32 0.0, %v1415
    %1417 = vdwg.mxu0
    %1418 = vmatprep.subr.bf16.mxu0 %v1172
    %1419 = vmatpush1.bf16.msra.mxu0 %v1171
    %1420 = vmatprep.subr.bf16.mxu0 %v1174
    %1421 = vmatpush1.bf16.msra.mxu0 %v1173
    %1422 = vmatprep.subr.bf16.mxu0 %v1176
    %1423 = vmatpush1.bf16.msra.mxu0 %v1175
    %1424 = vmatprep.subr.bf16.mxu0 %v1178
    %1425 = vmatpush1.bf16.msra.mxu0 %v1177
    %1426 = vmatprep.subr.bf16.mxu0 %v1180
    %1427 = vmatpush1.bf16.msra.mxu0 %v1179
    %1428 = vmatprep.subr.bf16.mxu0 %v1182
    %1429 = vmatpush1.bf16.msra.mxu0 %v1181
    %1430 = vmatprep.subr.bf16.mxu0 %v1184
    %1431 = vmatpush1.bf16.msra.mxu0 %v1183
    %1432 = vmatprep.subr.bf16.mxu0 %v1186
    %1433 = vmatpush1.bf16.msra.mxu0 %v1185
    %1434 = vmatprep.subr.bf16.mxu0 %v1188
    %1435 = vmatpush1.bf16.msra.mxu0 %v1187
    %1436 = vmatprep.subr.bf16.mxu0 %v1190
    %1437 = vmatpush1.bf16.msra.mxu0 %v1189
    %1438 = vmatprep.subr.bf16.mxu0 %v1192
    %1439 = vmatpush1.bf16.msra.mxu0 %v1191
    %1440 = vmatprep.subr.bf16.mxu0 %v1194
    %1441 = vmatpush1.bf16.msra.mxu0 %v1193
    %1442 = vmatprep.subr.bf16.mxu0 %v1196
    %1443 = vmatpush1.bf16.msra.mxu0 %v1195
    %1444 = vmatprep.subr.bf16.mxu0 %v1198
    %1445 = vmatpush1.bf16.msra.mxu0 %v1197
    %1446 = vmatprep.subr.bf16.mxu0 %v1200
    %1447 = vmatpush1.bf16.msra.mxu0 %v1199
    %1448 = vmatprep.subr.bf16.mxu0 %v1202
    %1449 = vmatpush1.bf16.msra.mxu0 %v1201
    %1450 = vmatprep.mubr.bf16.mxu0 %v742
    %1451 = vmatmul.mubr.bf16.gmra.mrb[0].mxu0 %v741
    %v1452 = vpop.f32.mrb[0].mxu0
    %v1453 = vadd.f32 %v1380, %v1452
    %v1454 = vpop.f32.mrb[0].mxu0
    %v1455 = vadd.f32 %v1382, %v1454
    %v1456 = vpop.f32.mrb[0].mxu0
    %v1457 = vadd.f32 %v1384, %v1456
    %v1458 = vpop.f32.mrb[0].mxu0
    %v1459 = vadd.f32 %v1386, %v1458
    %1460 = vmatprep.mubr.bf16.mxu0 %v748
    %1461 = vmatmul.mubr.bf16.gmra.mrb[0].mxu0 %v747
    %v1462 = vpop.f32.mrb[0].mxu0
    %v1463 = vadd.f32 %v1390, %v1462
    %v1464 = vpop.f32.mrb[0].mxu0
    %v1465 = vadd.f32 %v1392, %v1464
    %v1466 = vpop.f32.mrb[0].mxu0
    %v1467 = vadd.f32 %v1394, %v1466
    %v1468 = vpop.f32.mrb[0].mxu0
    %v1469 = vadd.f32 %v1396, %v1468
    %1470 = vmatprep.mubr.bf16.mxu0 %v754
    %1471 = vmatmul.mubr.bf16.gmra.mrb[0].mxu0 %v753
    %v1472 = vpop.f32.mrb[0].mxu0
    %v1473 = vadd.f32 %v1400, %v1472
    %v1474 = vpop.f32.mrb[0].mxu0
    %v1475 = vadd.f32 %v1402, %v1474
    %v1476 = vpop.f32.mrb[0].mxu0
    %v1477 = vadd.f32 %v1404, %v1476
    %v1478 = vpop.f32.mrb[0].mxu0
    %v1479 = vadd.f32 %v1406, %v1478
    %1480 = vmatprep.mubr.bf16.mxu0 %v760
    %1481 = vmatmul.mubr.bf16.gmra.mrb[0].mxu0 %v759
    %v1482 = vpop.f32.mrb[0].mxu0
    %v1483 = vadd.f32 %v1410, %v1482
    %v1484 = vpop.f32.mrb[0].mxu0
    %v1485 = vadd.f32 %v1412, %v1484
    %v1486 = vpop.f32.mrb[0].mxu0
    %v1487 = vadd.f32 %v1414, %v1486
    %v1488 = vpop.f32.mrb[0].mxu0
    %v1489 = vadd.f32 %v1416, %v1488
    %1490 = vdwg.mxu0
    %1491 = vmatprep.subr.bf16.mxu0 %v1204
    %1492 = vmatpush1.bf16.msra.mxu0 %v1203
    %1493 = vmatprep.subr.bf16.mxu0 %v1206
    %1494 = vmatpush1.bf16.msra.mxu0 %v1205
    %1495 = vmatprep.subr.bf16.mxu0 %v1208
    %1496 = vmatpush1.bf16.msra.mxu0 %v1207
    %1497 = vmatprep.subr.bf16.mxu0 %v1210
    %1498 = vmatpush1.bf16.msra.mxu0 %v1209
    %1499 = vmatprep.subr.bf16.mxu0 %v1212
    %1500 = vmatpush1.bf16.msra.mxu0 %v1211
    %1501 = vmatprep.subr.bf16.mxu0 %v1214
    %1502 = vmatpush1.bf16.msra.mxu0 %v1213
    %1503 = vmatprep.subr.bf16.mxu0 %v1216
    %1504 = vmatpush1.bf16.msra.mxu0 %v1215
    %1505 = vmatprep.subr.bf16.mxu0 %v1218
    %1506 = vmatpush1.bf16.msra.mxu0 %v1217
    %1507 = vmatprep.subr.bf16.mxu0 %v1220
    %1508 = vmatpush1.bf16.msra.mxu0 %v1219
    %1509 = vmatprep.subr.bf16.mxu0 %v1222
    %1510 = vmatpush1.bf16.msra.mxu0 %v1221
    %1511 = vmatprep.subr.bf16.mxu0 %v1224
    %1512 = vmatpush1.bf16.msra.mxu0 %v1223
    %1513 = vmatprep.subr.bf16.mxu0 %v1226
    %1514 = vmatpush1.bf16.msra.mxu0 %v1225
    %1515 = vmatprep.subr.bf16.mxu0 %v1228
    %1516 = vmatpush1.bf16.msra.mxu0 %v1227
    %1517 = vmatprep.subr.bf16.mxu0 %v1230
    %1518 = vmatpush1.bf16.msra.mxu0 %v1229
    %1519 = vmatprep.subr.bf16.mxu0 %v1343
    %1520 = vmatpush1.bf16.msra.mxu0 %v1340
    %1521 = vmatprep.subr.bf16.mxu0 0
    %1522 = vmatpush1.bf16.msra.mxu0 0
    %1523 = vmatprep.mubr.bf16.mxu0 %v1327
    %1524 = vmatmul.mubr.bf16.gmra.mrb[0].mxu0 %v743
    %v1525 = vpop.f32.mrb[0].mxu0
    %v1526 = vadd.f32 %v1453, %v1525
    %v1527 = vpop.f32.mrb[0].mxu0
    %v1528 = vadd.f32 %v1455, %v1527
    %v1529 = vpop.f32.mrb[0].mxu0
    %v1530 = vadd.f32 %v1457, %v1529
    %v1531 = vpop.f32.mrb[0].mxu0
    %v1532 = vadd.f32 %v1459, %v1531
    %1533 = vmatprep.mubr.bf16.mxu0 %v1330
    %1534 = vmatmul.mubr.bf16.gmra.mrb[0].mxu0 %v749
    %v1535 = vpop.f32.mrb[0].mxu0
    %v1536 = vadd.f32 %v1463, %v1535
    %v1537 = vpop.f32.mrb[0].mxu0
    %v1538 = vadd.f32 %v1465, %v1537
    %v1539 = vpop.f32.mrb[0].mxu0
    %v1540 = vadd.f32 %v1467, %v1539
    %v1541 = vpop.f32.mrb[0].mxu0
    %v1542 = vadd.f32 %v1469, %v1541
    %1543 = vmatprep.mubr.bf16.mxu0 %v1333
    %1544 = vmatmul.mubr.bf16.gmra.mrb[0].mxu0 %v755
    %v1545 = vpop.f32.mrb[0].mxu0
    %v1546 = vadd.f32 %v1473, %v1545
    %v1547 = vpop.f32.mrb[0].mxu0
    %v1548 = vadd.f32 %v1475, %v1547
    %v1549 = vpop.f32.mrb[0].mxu0
    %v1550 = vadd.f32 %v1477, %v1549
    %v1551 = vpop.f32.mrb[0].mxu0
    %v1552 = vadd.f32 %v1479, %v1551
    %1553 = vmatprep.mubr.bf16.mxu0 %v1336
    %1554 = vmatmul.mubr.bf16.gmra.mrb[0].mxu0 %v761
    %v1555 = vpop.f32.mrb[0].mxu0
    %v1556 = vadd.f32 %v1483, %v1555
    %v1557 = vpop.f32.mrb[0].mxu0
    %v1558 = vadd.f32 %v1485, %v1557
    %v1559 = vpop.f32.mrb[0].mxu0
    %v1560 = vadd.f32 %v1487, %v1559
    %v1561 = vpop.f32.mrb[0].mxu0
    %v1562 = vadd.f32 %v1489, %v1561
    %1563 = vdwg.mxu0
    %v1564 = vpack.c.bf16 %v1530, %v1526
    %v1565 = vpack.c.bf16 %v1532, %v1528
    %v1566 = vpack.c.bf16 %v1540, %v1536
    %v1567 = vpack.c.bf16 %v1542, %v1538
    %v1568 = vpack.c.bf16 %v1550, %v1546
    %v1569 = vpack.c.bf16 %v1552, %v1548
    %v1570 = vpack.c.bf16 %v1560, %v1556
    %v1571 = vpack.c.bf16 %v1562, %v1558
    %1572 = vst [vmem:[#allocation3] sm:$0xff] %v1564
    %vm1573 = vcmask 596992
    %1574 = vst.msk [vmem:[#allocation3 + $0x8] sm:$0xff] %vm1573, %v1565
    %1575 = vst [vmem:[#allocation3 + $0x10] sm:$0xff] %v1566
    %1576 = vst.msk [vmem:[#allocation3 + $0x18] sm:$0xff] %vm1573, %v1567
    %1577 = vst [vmem:[#allocation3 + $0x20] sm:$0xff] %v1568
    %1578 = vst.msk [vmem:[#allocation3 + $0x28] sm:$0xff] %vm1573, %v1569
    %1579 = vst [vmem:[#allocation3 + $0x30] sm:$0xff] %v1570
    %1580 = vst.msk [vmem:[#allocation3 + $0x38] sm:$0xff] %vm1573, %v1571
    %s1581 = smul.u32 0, 2
    %s1582 = smul.addr %s1581, 8
    %s1583 = scalar_lea.vmem [#allocation3], %s1582
    %v1584 = vld [vmem:[%s1583] sm:$0xff]
    %v1585 = vld [vmem:[%s1583 + $0x8] sm:$0xff]
    %v1586 = vld [vmem:[%s1583 + $0x10] sm:$0xff]
    %v1587 = vld [vmem:[%s1583 + $0x18] sm:$0xff]
    %v1592 = vunpack.c.l.b16 %v46
    %v1593 = vunpack.c.l.b16 %v47
    %v1594 = vunpack.c.l.b16 %v48
    %v1595 = vunpack.c.l.b16 %v49
    %v1596 = vpack.c.b16 %v1593, %v1592
    %v1597 = vpack.c.b16 %v1595, %v1594
    %1602 = vrot.lane.b32.xlu0 %v1584, 127
    %v1603 = vpop.permute.xlu0 %1602
    %1604 = vrot.lane.b32.xlu0 %v1585, 127
    %v1605 = vpop.permute.xlu0 %1604
    %1606 = vrot.lane.b32.xlu0 %v1586, 127
    %v1607 = vpop.permute.xlu0 %1606
    %1608 = vrot.lane.b32.xlu0 %v1587, 127
    %v1609 = vpop.permute.xlu0 %1608
    %vm1610 = vcmask 1039360
    %v1611 = vsel %vm1610, %v1603, %v1605
    %v1612 = vsel %vm1610, %v1607, %v1609
    %vm1617 = vcmask 261120
    %v1619 = vsel %vm1617, %v1596, 0
    %v1622 = vsel %vm1617, %v1597, 0
    %1624 = vmatprep.subr.bf16.mxu0 %v1605
    %1625 = vmatpush1.bf16.msra.mxu0 %v1611
    %1626 = vmatprep.subr.bf16.mxu0 %v1609
    %1627 = vmatpush1.bf16.msra.mxu0 %v1612
    %1628 = vmatprep.subr.bf16.mxu0 0
    %1629 = vmatpush1.bf16.msra.mxu0 0
    %1630 = vmatprep.subr.bf16.mxu0 0
    %1631 = vmatpush1.bf16.msra.mxu0 0
    %1632 = vmatprep.subr.bf16.mxu0 0
    %1633 = vmatpush1.bf16.msra.mxu0 0
    %1634 = vmatprep.subr.bf16.mxu0 0
    %1635 = vmatpush1.bf16.msra.mxu0 0
    %1636 = vmatprep.subr.bf16.mxu0 0
    %1637 = vmatpush1.bf16.msra.mxu0 0
    %1638 = vmatprep.subr.bf16.mxu0 0
    %1639 = vmatpush1.bf16.msra.mxu0 0
    %1640 = vmatprep.subr.bf16.mxu0 0
    %1641 = vmatpush1.bf16.msra.mxu0 0
    %1642 = vmatprep.subr.bf16.mxu0 0
    %1643 = vmatpush1.bf16.msra.mxu0 0
    %1644 = vmatprep.subr.bf16.mxu0 0
    %1645 = vmatpush1.bf16.msra.mxu0 0
    %1646 = vmatprep.subr.bf16.mxu0 0
    %1647 = vmatpush1.bf16.msra.mxu0 0
    %1648 = vmatprep.subr.bf16.mxu0 0
    %1649 = vmatpush1.bf16.msra.mxu0 0
    %1650 = vmatprep.subr.bf16.mxu0 0
    %1651 = vmatpush1.bf16.msra.mxu0 0
    %1652 = vmatprep.subr.bf16.mxu0 0
    %1653 = vmatpush1.bf16.msra.mxu0 0
    %1654 = vmatprep.subr.bf16.mxu0 0
    %1655 = vmatpush1.bf16.msra.mxu0 0
    %1656 = vmatprep.mubr.bf16.mxu0 0
    %1657 = vmatmul.mubr.bf16.gmra.mrb[0].mxu0 %v1619
    %v1658 = vpop.f32.mrb[0].mxu0
    %v1659 = vadd.f32 0.0, %v1658
    %v1660 = vpop.f32.mrb[0].mxu0
    %v1661 = vadd.f32 0.0, %v1660
    %v1662 = vpop.f32.mrb[0].mxu0
    %v1663 = vadd.f32 0.0, %v1662
    %v1664 = vpop.f32.mrb[0].mxu0
    %v1665 = vadd.f32 0.0, %v1664
    %1666 = vmatprep.mubr.bf16.mxu0 0
    %1667 = vmatmul.mubr.bf16.gmra.mrb[0].mxu0 %v1622
    %v1668 = vpop.f32.mrb[0].mxu0
    %v1669 = vadd.f32 0.0, %v1668
    %v1670 = vpop.f32.mrb[0].mxu0
    %v1671 = vadd.f32 0.0, %v1670
    %v1672 = vpop.f32.mrb[0].mxu0
    %v1673 = vadd.f32 0.0, %v1672
    %v1674 = vpop.f32.mrb[0].mxu0
    %v1675 = vadd.f32 0.0, %v1674
    %1676 = vdwg.mxu0
    %v1681 = vunpack.c.l.b16 %v42
    %v1682 = vunpack.c.l.b16 %v43
    %v1683 = vunpack.c.l.b16 %v44
    %v1684 = vunpack.c.l.b16 %v45
    %v1685 = vpack.c.b16 %v1682, %v1681
    %v1686 = vpack.c.b16 %v1684, %v1683
    %v1688 = vsel %vm1617, %v1685, 0
    %v1691 = vsel %vm1617, %v1686, 0
    %1693 = vmatprep.subr.bf16.mxu0 %v1585
    %1694 = vmatpush1.bf16.msra.mxu0 %v1584
    %1695 = vmatprep.subr.bf16.mxu0 %v1587
    %1696 = vmatpush1.bf16.msra.mxu0 %v1586
    %1697 = vmatprep.subr.bf16.mxu0 0
    %1698 = vmatpush1.bf16.msra.mxu0 0
    %1699 = vmatprep.subr.bf16.mxu0 0
    %1700 = vmatpush1.bf16.msra.mxu0 0
    %1701 = vmatprep.subr.bf16.mxu0 0
    %1702 = vmatpush1.bf16.msra.mxu0 0
    %1703 = vmatprep.subr.bf16.mxu0 0
    %1704 = vmatpush1.bf16.msra.mxu0 0
    %1705 = vmatprep.subr.bf16.mxu0 0
    %1706 = vmatpush1.bf16.msra.mxu0 0
    %1707 = vmatprep.subr.bf16.mxu0 0
    %1708 = vmatpush1.bf16.msra.mxu0 0
    %1709 = vmatprep.subr.bf16.mxu0 0
    %1710 = vmatpush1.bf16.msra.mxu0 0
    %1711 = vmatprep.subr.bf16.mxu0 0
    %1712 = vmatpush1.bf16.msra.mxu0 0
    %1713 = vmatprep.subr.bf16.mxu0 0
    %1714 = vmatpush1.bf16.msra.mxu0 0
    %1715 = vmatprep.subr.bf16.mxu0 0
    %1716 = vmatpush1.bf16.msra.mxu0 0
    %1717 = vmatprep.subr.bf16.mxu0 0
    %1718 = vmatpush1.bf16.msra.mxu0 0
    %1719 = vmatprep.subr.bf16.mxu0 0
    %1720 = vmatpush1.bf16.msra.mxu0 0
    %1721 = vmatprep.subr.bf16.mxu0 0
    %1722 = vmatpush1.bf16.msra.mxu0 0
    %1723 = vmatprep.subr.bf16.mxu0 0
    %1724 = vmatpush1.bf16.msra.mxu0 0
    %1725 = vmatprep.mubr.bf16.mxu0 0
    %1726 = vmatmul.mubr.bf16.gmra.mrb[0].mxu0 %v1688
    %v1727 = vpop.f32.mrb[0].mxu0
    %v1728 = vadd.f32 %v1659, %v1727
    %v1729 = vpop.f32.mrb[0].mxu0
    %v1730 = vadd.f32 %v1661, %v1729
    %v1731 = vpop.f32.mrb[0].mxu0
    %v1732 = vadd.f32 %v1663, %v1731
    %v1733 = vpop.f32.mrb[0].mxu0
    %v1734 = vadd.f32 %v1665, %v1733
    %1735 = vmatprep.mubr.bf16.mxu0 0
    %1736 = vmatmul.mubr.bf16.gmra.mrb[0].mxu0 %v1691
    %v1737 = vpop.f32.mrb[0].mxu0
    %v1738 = vadd.f32 %v1669, %v1737
    %v1739 = vpop.f32.mrb[0].mxu0
    %v1740 = vadd.f32 %v1671, %v1739
    %v1741 = vpop.f32.mrb[0].mxu0
    %v1742 = vadd.f32 %v1673, %v1741
    %v1743 = vpop.f32.mrb[0].mxu0
    %v1744 = vadd.f32 %v1675, %v1743
    %1745 = vdwg.mxu0
    %v1750 = vunpack.c.l.b16 %v50
    %v1751 = vunpack.c.l.b16 %v51
    %v1752 = vunpack.c.l.b16 %v52
    %v1753 = vunpack.c.l.b16 %v53
    %v1754 = vpack.c.b16 %v1751, %v1750
    %v1755 = vpack.c.b16 %v1753, %v1752
    %1756 = vrot.lane.b32.xlu0 %v1584, 126
    %v1757 = vpop.permute.xlu0 %1756
    %1758 = vrot.lane.b32.xlu0 %v1585, 126
    %v1759 = vpop.permute.xlu0 %1758
    %1760 = vrot.lane.b32.xlu0 %v1586, 126
    %v1761 = vpop.permute.xlu0 %1760
    %1762 = vrot.lane.b32.xlu0 %v1587, 126
    %v1763 = vpop.permute.xlu0 %1762
    %vm1764 = vcmask 1031168
    %v1765 = vsel %vm1764, %v1757, %v1759
    %v1766 = vsel %vm1764, %v1761, %v1763
    %v1772 = vsel %vm1617, %v1754, 0
    %v1775 = vsel %vm1617, %v1755, 0
    %1777 = vmatprep.subr.bf16.mxu0 %v1759
    %1778 = vmatpush1.bf16.msra.mxu0 %v1765
    %1779 = vmatprep.subr.bf16.mxu0 %v1763
    %1780 = vmatpush1.bf16.msra.mxu0 %v1766
    %1781 = vmatprep.subr.bf16.mxu0 0
    %1782 = vmatpush1.bf16.msra.mxu0 0
    %1783 = vmatprep.subr.bf16.mxu0 0
    %1784 = vmatpush1.bf16.msra.mxu0 0
    %1785 = vmatprep.subr.bf16.mxu0 0
    %1786 = vmatpush1.bf16.msra.mxu0 0
    %1787 = vmatprep.subr.bf16.mxu0 0
    %1788 = vmatpush1.bf16.msra.mxu0 0
    %1789 = vmatprep.subr.bf16.mxu0 0
    %1790 = vmatpush1.bf16.msra.mxu0 0
    %1791 = vmatprep.subr.bf16.mxu0 0
    %1792 = vmatpush1.bf16.msra.mxu0 0
    %1793 = vmatprep.subr.bf16.mxu0 0
    %1794 = vmatpush1.bf16.msra.mxu0 0
    %1795 = vmatprep.subr.bf16.mxu0 0
    %1796 = vmatpush1.bf16.msra.mxu0 0
    %1797 = vmatprep.subr.bf16.mxu0 0
    %1798 = vmatpush1.bf16.msra.mxu0 0
    %1799 = vmatprep.subr.bf16.mxu0 0
    %1800 = vmatpush1.bf16.msra.mxu0 0
    %1801 = vmatprep.subr.bf16.mxu0 0
    %1802 = vmatpush1.bf16.msra.mxu0 0
    %1803 = vmatprep.subr.bf16.mxu0 0
    %1804 = vmatpush1.bf16.msra.mxu0 0
    %1805 = vmatprep.subr.bf16.mxu0 0
    %1806 = vmatpush1.bf16.msra.mxu0 0
    %1807 = vmatprep.subr.bf16.mxu0 0
    %1808 = vmatpush1.bf16.msra.mxu0 0
    %1809 = vmatprep.mubr.bf16.mxu0 0
    %1810 = vmatmul.mubr.bf16.gmra.mrb[0].mxu0 %v1772
    %v1811 = vpop.f32.mrb[0].mxu0
    %v1812 = vadd.f32 0.0, %v1811
    %v1813 = vpop.f32.mrb[0].mxu0
    %v1814 = vadd.f32 0.0, %v1813
    %v1815 = vpop.f32.mrb[0].mxu0
    %v1816 = vadd.f32 0.0, %v1815
    %v1817 = vpop.f32.mrb[0].mxu0
    %v1818 = vadd.f32 0.0, %v1817
    %1819 = vmatprep.mubr.bf16.mxu0 0
    %1820 = vmatmul.mubr.bf16.gmra.mrb[0].mxu0 %v1775
    %v1821 = vpop.f32.mrb[0].mxu0
    %v1822 = vadd.f32 0.0, %v1821
    %v1823 = vpop.f32.mrb[0].mxu0
    %v1824 = vadd.f32 0.0, %v1823
    %v1825 = vpop.f32.mrb[0].mxu0
    %v1826 = vadd.f32 0.0, %v1825
    %v1827 = vpop.f32.mrb[0].mxu0
    %v1828 = vadd.f32 0.0, %v1827
    %1829 = vdwg.mxu0
    %v1830 = vadd.f32 %v1728, %v1812
    %v1831 = vadd.f32 %v1730, %v1814
    %v1832 = vadd.f32 %v1732, %v1816
    %v1833 = vadd.f32 %v1734, %v1818
    %v1834 = vadd.f32 %v1738, %v1822
    %v1835 = vadd.f32 %v1740, %v1824
    %v1836 = vadd.f32 %v1742, %v1826
    %v1837 = vadd.f32 %v1744, %v1828
    %v1842 = vunpack.c.l.b16 %v54
    %v1843 = vunpack.c.l.b16 %v55
    %v1844 = vunpack.c.l.b16 %v56
    %v1845 = vunpack.c.l.b16 %v57
    %v1846 = vpack.c.b16 %v1843, %v1842
    %v1847 = vpack.c.b16 %v1845, %v1844
    %1848 = vrot.lane.b32.xlu0 %v1584, 125
    %v1849 = vpop.permute.xlu0 %1848
    %1850 = vrot.lane.b32.xlu0 %v1585, 125
    %v1851 = vpop.permute.xlu0 %1850
    %1852 = vrot.lane.b32.xlu0 %v1586, 125
    %v1853 = vpop.permute.xlu0 %1852
    %1854 = vrot.lane.b32.xlu0 %v1587, 125
    %v1855 = vpop.permute.xlu0 %1854
    %vm1856 = vcmask 1022976
    %v1857 = vsel %vm1856, %v1849, %v1851
    %v1858 = vsel %vm1856, %v1853, %v1855
    %v1864 = vsel %vm1617, %v1846, 0
    %v1867 = vsel %vm1617, %v1847, 0
    %1869 = vmatprep.subr.bf16.mxu0 %v1851
    %1870 = vmatpush1.bf16.msra.mxu0 %v1857
    %1871 = vmatprep.subr.bf16.mxu0 %v1855
    %1872 = vmatpush1.bf16.msra.mxu0 %v1858
    %1873 = vmatprep.subr.bf16.mxu0 0
    %1874 = vmatpush1.bf16.msra.mxu0 0
    %1875 = vmatprep.subr.bf16.mxu0 0
    %1876 = vmatpush1.bf16.msra.mxu0 0
    %1877 = vmatprep.subr.bf16.mxu0 0
    %1878 = vmatpush1.bf16.msra.mxu0 0
    %1879 = vmatprep.subr.bf16.mxu0 0
    %1880 = vmatpush1.bf16.msra.mxu0 0
    %1881 = vmatprep.subr.bf16.mxu0 0
    %1882 = vmatpush1.bf16.msra.mxu0 0
    %1883 = vmatprep.subr.bf16.mxu0 0
    %1884 = vmatpush1.bf16.msra.mxu0 0
    %1885 = vmatprep.subr.bf16.mxu0 0
    %1886 = vmatpush1.bf16.msra.mxu0 0
    %1887 = vmatprep.subr.bf16.mxu0 0
    %1888 = vmatpush1.bf16.msra.mxu0 0
    %1889 = vmatprep.subr.bf16.mxu0 0
    %1890 = vmatpush1.bf16.msra.mxu0 0
    %1891 = vmatprep.subr.bf16.mxu0 0
    %1892 = vmatpush1.bf16.msra.mxu0 0
    %1893 = vmatprep.subr.bf16.mxu0 0
    %1894 = vmatpush1.bf16.msra.mxu0 0
    %1895 = vmatprep.subr.bf16.mxu0 0
    %1896 = vmatpush1.bf16.msra.mxu0 0
    %1897 = vmatprep.subr.bf16.mxu0 0
    %1898 = vmatpush1.bf16.msra.mxu0 0
    %1899 = vmatprep.subr.bf16.mxu0 0
    %1900 = vmatpush1.bf16.msra.mxu0 0
    %1901 = vmatprep.mubr.bf16.mxu0 0
    %1902 = vmatmul.mubr.bf16.gmra.mrb[0].mxu0 %v1864
    %v1903 = vpop.f32.mrb[0].mxu0
    %v1904 = vadd.f32 0.0, %v1903
    %v1905 = vpop.f32.mrb[0].mxu0
    %v1906 = vadd.f32 0.0, %v1905
    %v1907 = vpop.f32.mrb[0].mxu0
    %v1908 = vadd.f32 0.0, %v1907
    %v1909 = vpop.f32.mrb[0].mxu0
    %v1910 = vadd.f32 0.0, %v1909
    %1911 = vmatprep.mubr.bf16.mxu0 0
    %1912 = vmatmul.mubr.bf16.gmra.mrb[0].mxu0 %v1867
    %v1913 = vpop.f32.mrb[0].mxu0
    %v1914 = vadd.f32 0.0, %v1913
    %v1915 = vpop.f32.mrb[0].mxu0
    %v1916 = vadd.f32 0.0, %v1915
    %v1917 = vpop.f32.mrb[0].mxu0
    %v1918 = vadd.f32 0.0, %v1917
    %v1919 = vpop.f32.mrb[0].mxu0
    %v1920 = vadd.f32 0.0, %v1919
    %1921 = vdwg.mxu0
    %v1922 = vadd.f32 %v1830, %v1904
    %v1923 = vadd.f32 %v1831, %v1906
    %v1924 = vadd.f32 %v1832, %v1908
    %v1925 = vadd.f32 %v1833, %v1910
    %v1926 = vadd.f32 %v1834, %v1914
    %v1927 = vadd.f32 %v1835, %v1916
    %v1928 = vadd.f32 %v1836, %v1918
    %v1929 = vadd.f32 %v1837, %v1920
    %v1934 = vunpack.c.l.b16 %v58
    %v1935 = vunpack.c.l.b16 %v59
    %v1936 = vunpack.c.l.b16 %v60
    %v1937 = vunpack.c.l.b16 %v61
    %v1938 = vpack.c.b16 %v1935, %v1934
    %v1939 = vpack.c.b16 %v1937, %v1936
    %1940 = vrot.lane.b32.xlu0 %v1584, 124
    %v1941 = vpop.permute.xlu0 %1940
    %1942 = vrot.lane.b32.xlu0 %v1585, 124
    %v1943 = vpop.permute.xlu0 %1942
    %1944 = vrot.lane.b32.xlu0 %v1586, 124
    %v1945 = vpop.permute.xlu0 %1944
    %1946 = vrot.lane.b32.xlu0 %v1587, 124
    %v1947 = vpop.permute.xlu0 %1946
    %vm1948 = vcmask 1014784
    %v1949 = vsel %vm1948, %v1941, %v1943
    %v1950 = vsel %vm1948, %v1945, %v1947
    %v1956 = vsel %vm1617, %v1938, 0
    %v1959 = vsel %vm1617, %v1939, 0
    %1961 = vmatprep.subr.bf16.mxu0 %v1943
    %1962 = vmatpush1.bf16.msra.mxu0 %v1949
    %1963 = vmatprep.subr.bf16.mxu0 %v1947
    %1964 = vmatpush1.bf16.msra.mxu0 %v1950
    %1965 = vmatprep.subr.bf16.mxu0 0
    %1966 = vmatpush1.bf16.msra.mxu0 0
    %1967 = vmatprep.subr.bf16.mxu0 0
    %1968 = vmatpush1.bf16.msra.mxu0 0
    %1969 = vmatprep.subr.bf16.mxu0 0
    %1970 = vmatpush1.bf16.msra.mxu0 0
    %1971 = vmatprep.subr.bf16.mxu0 0
    %1972 = vmatpush1.bf16.msra.mxu0 0
    %1973 = vmatprep.subr.bf16.mxu0 0
    %1974 = vmatpush1.bf16.msra.mxu0 0
    %1975 = vmatprep.subr.bf16.mxu0 0
    %1976 = vmatpush1.bf16.msra.mxu0 0
    %1977 = vmatprep.subr.bf16.mxu0 0
    %1978 = vmatpush1.bf16.msra.mxu0 0
    %1979 = vmatprep.subr.bf16.mxu0 0
    %1980 = vmatpush1.bf16.msra.mxu0 0
    %1981 = vmatprep.subr.bf16.mxu0 0
    %1982 = vmatpush1.bf16.msra.mxu0 0
    %1983 = vmatprep.subr.bf16.mxu0 0
    %1984 = vmatpush1.bf16.msra.mxu0 0
    %1985 = vmatprep.subr.bf16.mxu0 0
    %1986 = vmatpush1.bf16.msra.mxu0 0
    %1987 = vmatprep.subr.bf16.mxu0 0
    %1988 = vmatpush1.bf16.msra.mxu0 0
    %1989 = vmatprep.subr.bf16.mxu0 0
    %1990 = vmatpush1.bf16.msra.mxu0 0
    %1991 = vmatprep.subr.bf16.mxu0 0
    %1992 = vmatpush1.bf16.msra.mxu0 0
    %1993 = vmatprep.mubr.bf16.mxu0 0
    %1994 = vmatmul.mubr.bf16.gmra.mrb[0].mxu0 %v1956
    %v1995 = vpop.f32.mrb[0].mxu0
    %v1996 = vadd.f32 0.0, %v1995
    %v1997 = vpop.f32.mrb[0].mxu0
    %v1998 = vadd.f32 0.0, %v1997
    %v1999 = vpop.f32.mrb[0].mxu0
    %v2000 = vadd.f32 0.0, %v1999
    %v2001 = vpop.f32.mrb[0].mxu0
    %v2002 = vadd.f32 0.0, %v2001
    %2003 = vmatprep.mubr.bf16.mxu0 0
    %2004 = vmatmul.mubr.bf16.gmra.mrb[0].mxu0 %v1959
    %v2005 = vpop.f32.mrb[0].mxu0
    %v2006 = vadd.f32 0.0, %v2005
    %v2007 = vpop.f32.mrb[0].mxu0
    %v2008 = vadd.f32 0.0, %v2007
    %v2009 = vpop.f32.mrb[0].mxu0
    %v2010 = vadd.f32 0.0, %v2009
    %v2011 = vpop.f32.mrb[0].mxu0
    %v2012 = vadd.f32 0.0, %v2011
    %2013 = vdwg.mxu0
    %v2014 = vadd.f32 %v1922, %v1996
    %v2015 = vadd.f32 %v1923, %v1998
    %v2016 = vadd.f32 %v1924, %v2000
    %v2017 = vadd.f32 %v1925, %v2002
    %v2018 = vadd.f32 %v1926, %v2006
    %v2019 = vadd.f32 %v1927, %v2008
    %v2020 = vadd.f32 %v1928, %v2010
    %v2021 = vadd.f32 %v1929, %v2012
    %v2026 = vunpack.c.l.b16 %v62
    %v2027 = vunpack.c.l.b16 %v63
    %v2028 = vunpack.c.l.b16 %v64
    %v2029 = vunpack.c.l.b16 %v65
    %v2030 = vpack.c.b16 %v2027, %v2026
    %v2031 = vpack.c.b16 %v2029, %v2028
    %2032 = vrot.lane.b32.xlu0 %v1584, 123
    %v2033 = vpop.permute.xlu0 %2032
    %2034 = vrot.lane.b32.xlu0 %v1585, 123
    %v2035 = vpop.permute.xlu0 %2034
    %2036 = vrot.lane.b32.xlu0 %v1586, 123
    %v2037 = vpop.permute.xlu0 %2036
    %2038 = vrot.lane.b32.xlu0 %v1587, 123
    %v2039 = vpop.permute.xlu0 %2038
    %vm2040 = vcmask 1006592
    %v2041 = vsel %vm2040, %v2033, %v2035
    %v2042 = vsel %vm2040, %v2037, %v2039
    %v2048 = vsel %vm1617, %v2030, 0
    %v2051 = vsel %vm1617, %v2031, 0
    %2053 = vmatprep.subr.bf16.mxu0 %v2035
    %2054 = vmatpush1.bf16.msra.mxu0 %v2041
    %2055 = vmatprep.subr.bf16.mxu0 %v2039
    %2056 = vmatpush1.bf16.msra.mxu0 %v2042
    %2057 = vmatprep.subr.bf16.mxu0 0
    %2058 = vmatpush1.bf16.msra.mxu0 0
    %2059 = vmatprep.subr.bf16.mxu0 0
    %2060 = vmatpush1.bf16.msra.mxu0 0
    %2061 = vmatprep.subr.bf16.mxu0 0
    %2062 = vmatpush1.bf16.msra.mxu0 0
    %2063 = vmatprep.subr.bf16.mxu0 0
    %2064 = vmatpush1.bf16.msra.mxu0 0
    %2065 = vmatprep.subr.bf16.mxu0 0
    %2066 = vmatpush1.bf16.msra.mxu0 0
    %2067 = vmatprep.subr.bf16.mxu0 0
    %2068 = vmatpush1.bf16.msra.mxu0 0
    %2069 = vmatprep.subr.bf16.mxu0 0
    %2070 = vmatpush1.bf16.msra.mxu0 0
    %2071 = vmatprep.subr.bf16.mxu0 0
    %2072 = vmatpush1.bf16.msra.mxu0 0
    %2073 = vmatprep.subr.bf16.mxu0 0
    %2074 = vmatpush1.bf16.msra.mxu0 0
    %2075 = vmatprep.subr.bf16.mxu0 0
    %2076 = vmatpush1.bf16.msra.mxu0 0
    %2077 = vmatprep.subr.bf16.mxu0 0
    %2078 = vmatpush1.bf16.msra.mxu0 0
    %2079 = vmatprep.subr.bf16.mxu0 0
    %2080 = vmatpush1.bf16.msra.mxu0 0
    %2081 = vmatprep.subr.bf16.mxu0 0
    %2082 = vmatpush1.bf16.msra.mxu0 0
    %2083 = vmatprep.subr.bf16.mxu0 0
    %2084 = vmatpush1.bf16.msra.mxu0 0
    %2085 = vmatprep.mubr.bf16.mxu0 0
    %2086 = vmatmul.mubr.bf16.gmra.mrb[0].mxu0 %v2048
    %v2087 = vpop.f32.mrb[0].mxu0
    %v2088 = vadd.f32 0.0, %v2087
    %v2089 = vpop.f32.mrb[0].mxu0
    %v2090 = vadd.f32 0.0, %v2089
    %v2091 = vpop.f32.mrb[0].mxu0
    %v2092 = vadd.f32 0.0, %v2091
    %v2093 = vpop.f32.mrb[0].mxu0
    %v2094 = vadd.f32 0.0, %v2093
    %2095 = vmatprep.mubr.bf16.mxu0 0
    %2096 = vmatmul.mubr.bf16.gmra.mrb[0].mxu0 %v2051
    %v2097 = vpop.f32.mrb[0].mxu0
    %v2098 = vadd.f32 0.0, %v2097
    %v2099 = vpop.f32.mrb[0].mxu0
    %v2100 = vadd.f32 0.0, %v2099
    %v2101 = vpop.f32.mrb[0].mxu0
    %v2102 = vadd.f32 0.0, %v2101
    %v2103 = vpop.f32.mrb[0].mxu0
    %v2104 = vadd.f32 0.0, %v2103
    %2105 = vdwg.mxu0
    %v2106 = vadd.f32 %v2014, %v2088
    %v2107 = vadd.f32 %v2015, %v2090
    %v2108 = vadd.f32 %v2016, %v2092
    %v2109 = vadd.f32 %v2017, %v2094
    %v2110 = vadd.f32 %v2018, %v2098
    %v2111 = vadd.f32 %v2019, %v2100
    %v2112 = vadd.f32 %v2020, %v2102
    %v2113 = vadd.f32 %v2021, %v2104
    %v2118 = vunpack.c.l.b16 %v66
    %v2119 = vunpack.c.l.b16 %v67
    %v2120 = vunpack.c.l.b16 %v68
    %v2121 = vunpack.c.l.b16 %v69
    %v2122 = vpack.c.b16 %v2119, %v2118
    %v2123 = vpack.c.b16 %v2121, %v2120
    %2124 = vrot.lane.b32.xlu0 %v1584, 122
    %v2125 = vpop.permute.xlu0 %2124
    %2126 = vrot.lane.b32.xlu0 %v1585, 122
    %v2127 = vpop.permute.xlu0 %2126
    %2128 = vrot.lane.b32.xlu0 %v1586, 122
    %v2129 = vpop.permute.xlu0 %2128
    %2130 = vrot.lane.b32.xlu0 %v1587, 122
    %v2131 = vpop.permute.xlu0 %2130
    %vm2132 = vcmask 998400
    %v2133 = vsel %vm2132, %v2125, %v2127
    %v2134 = vsel %vm2132, %v2129, %v2131
    %v2140 = vsel %vm1617, %v2122, 0
    %v2143 = vsel %vm1617, %v2123, 0
    %2145 = vmatprep.subr.bf16.mxu0 %v2127
    %2146 = vmatpush1.bf16.msra.mxu0 %v2133
    %2147 = vmatprep.subr.bf16.mxu0 %v2131
    %2148 = vmatpush1.bf16.msra.mxu0 %v2134
    %2149 = vmatprep.subr.bf16.mxu0 0
    %2150 = vmatpush1.bf16.msra.mxu0 0
    %2151 = vmatprep.subr.bf16.mxu0 0
    %2152 = vmatpush1.bf16.msra.mxu0 0
    %2153 = vmatprep.subr.bf16.mxu0 0
    %2154 = vmatpush1.bf16.msra.mxu0 0
    %2155 = vmatprep.subr.bf16.mxu0 0
    %2156 = vmatpush1.bf16.msra.mxu0 0
    %2157 = vmatprep.subr.bf16.mxu0 0
    %2158 = vmatpush1.bf16.msra.mxu0 0
    %2159 = vmatprep.subr.bf16.mxu0 0
    %2160 = vmatpush1.bf16.msra.mxu0 0
    %2161 = vmatprep.subr.bf16.mxu0 0
    %2162 = vmatpush1.bf16.msra.mxu0 0
    %2163 = vmatprep.subr.bf16.mxu0 0
    %2164 = vmatpush1.bf16.msra.mxu0 0
    %2165 = vmatprep.subr.bf16.mxu0 0
    %2166 = vmatpush1.bf16.msra.mxu0 0
    %2167 = vmatprep.subr.bf16.mxu0 0
    %2168 = vmatpush1.bf16.msra.mxu0 0
    %2169 = vmatprep.subr.bf16.mxu0 0
    %2170 = vmatpush1.bf16.msra.mxu0 0
    %2171 = vmatprep.subr.bf16.mxu0 0
    %2172 = vmatpush1.bf16.msra.mxu0 0
    %2173 = vmatprep.subr.bf16.mxu0 0
    %2174 = vmatpush1.bf16.msra.mxu0 0
    %2175 = vmatprep.subr.bf16.mxu0 0
    %2176 = vmatpush1.bf16.msra.mxu0 0
    %2177 = vmatprep.mubr.bf16.mxu0 0
    %2178 = vmatmul.mubr.bf16.gmra.mrb[0].mxu0 %v2140
    %v2179 = vpop.f32.mrb[0].mxu0
    %v2180 = vadd.f32 0.0, %v2179
    %v2181 = vpop.f32.mrb[0].mxu0
    %v2182 = vadd.f32 0.0, %v2181
    %v2183 = vpop.f32.mrb[0].mxu0
    %v2184 = vadd.f32 0.0, %v2183
    %v2185 = vpop.f32.mrb[0].mxu0
    %v2186 = vadd.f32 0.0, %v2185
    %2187 = vmatprep.mubr.bf16.mxu0 0
    %2188 = vmatmul.mubr.bf16.gmra.mrb[0].mxu0 %v2143
    %v2189 = vpop.f32.mrb[0].mxu0
    %v2190 = vadd.f32 0.0, %v2189
    %v2191 = vpop.f32.mrb[0].mxu0
    %v2192 = vadd.f32 0.0, %v2191
    %v2193 = vpop.f32.mrb[0].mxu0
    %v2194 = vadd.f32 0.0, %v2193
    %v2195 = vpop.f32.mrb[0].mxu0
    %v2196 = vadd.f32 0.0, %v2195
    %2197 = vdwg.mxu0
    %v2198 = vadd.f32 %v2106, %v2180
    %v2199 = vadd.f32 %v2107, %v2182
    %v2200 = vadd.f32 %v2108, %v2184
    %v2201 = vadd.f32 %v2109, %v2186
    %v2202 = vadd.f32 %v2110, %v2190
    %v2203 = vadd.f32 %v2111, %v2192
    %v2204 = vadd.f32 %v2112, %v2194
    %v2205 = vadd.f32 %v2113, %v2196
    %v2210 = vunpack.c.l.b16 %v70
    %v2211 = vunpack.c.l.b16 %v71
    %v2212 = vunpack.c.l.b16 %v72
    %v2213 = vunpack.c.l.b16 %v73
    %v2214 = vpack.c.b16 %v2211, %v2210
    %v2215 = vpack.c.b16 %v2213, %v2212
    %2216 = vrot.lane.b32.xlu0 %v1584, 121
    %v2217 = vpop.permute.xlu0 %2216
    %2218 = vrot.lane.b32.xlu0 %v1585, 121
    %v2219 = vpop.permute.xlu0 %2218
    %2220 = vrot.lane.b32.xlu0 %v1586, 121
    %v2221 = vpop.permute.xlu0 %2220
    %2222 = vrot.lane.b32.xlu0 %v1587, 121
    %v2223 = vpop.permute.xlu0 %2222
    %vm2224 = vcmask 990208
    %v2225 = vsel %vm2224, %v2217, %v2219
    %v2226 = vsel %vm2224, %v2221, %v2223
    %v2232 = vsel %vm1617, %v2214, 0
    %v2235 = vsel %vm1617, %v2215, 0
    %2237 = vmatprep.subr.bf16.mxu0 %v2219
    %2238 = vmatpush1.bf16.msra.mxu0 %v2225
    %2239 = vmatprep.subr.bf16.mxu0 %v2223
    %2240 = vmatpush1.bf16.msra.mxu0 %v2226
    %2241 = vmatprep.subr.bf16.mxu0 0
    %2242 = vmatpush1.bf16.msra.mxu0 0
    %2243 = vmatprep.subr.bf16.mxu0 0
    %2244 = vmatpush1.bf16.msra.mxu0 0
    %2245 = vmatprep.subr.bf16.mxu0 0
    %2246 = vmatpush1.bf16.msra.mxu0 0
    %2247 = vmatprep.subr.bf16.mxu0 0
    %2248 = vmatpush1.bf16.msra.mxu0 0
    %2249 = vmatprep.subr.bf16.mxu0 0
    %2250 = vmatpush1.bf16.msra.mxu0 0
    %2251 = vmatprep.subr.bf16.mxu0 0
    %2252 = vmatpush1.bf16.msra.mxu0 0
    %2253 = vmatprep.subr.bf16.mxu0 0
    %2254 = vmatpush1.bf16.msra.mxu0 0
    %2255 = vmatprep.subr.bf16.mxu0 0
    %2256 = vmatpush1.bf16.msra.mxu0 0
    %2257 = vmatprep.subr.bf16.mxu0 0
    %2258 = vmatpush1.bf16.msra.mxu0 0
    %2259 = vmatprep.subr.bf16.mxu0 0
    %2260 = vmatpush1.bf16.msra.mxu0 0
    %2261 = vmatprep.subr.bf16.mxu0 0
    %2262 = vmatpush1.bf16.msra.mxu0 0
    %2263 = vmatprep.subr.bf16.mxu0 0
    %2264 = vmatpush1.bf16.msra.mxu0 0
    %2265 = vmatprep.subr.bf16.mxu0 0
    %2266 = vmatpush1.bf16.msra.mxu0 0
    %2267 = vmatprep.subr.bf16.mxu0 0
    %2268 = vmatpush1.bf16.msra.mxu0 0
    %2269 = vmatprep.mubr.bf16.mxu0 0
    %2270 = vmatmul.mubr.bf16.gmra.mrb[0].mxu0 %v2232
    %v2271 = vpop.f32.mrb[0].mxu0
    %v2272 = vadd.f32 0.0, %v2271
    %v2273 = vpop.f32.mrb[0].mxu0
    %v2274 = vadd.f32 0.0, %v2273
    %v2275 = vpop.f32.mrb[0].mxu0
    %v2276 = vadd.f32 0.0, %v2275
    %v2277 = vpop.f32.mrb[0].mxu0
    %v2278 = vadd.f32 0.0, %v2277
    %2279 = vmatprep.mubr.bf16.mxu0 0
    %2280 = vmatmul.mubr.bf16.gmra.mrb[0].mxu0 %v2235
    %v2281 = vpop.f32.mrb[0].mxu0
    %v2282 = vadd.f32 0.0, %v2281
    %v2283 = vpop.f32.mrb[0].mxu0
    %v2284 = vadd.f32 0.0, %v2283
    %v2285 = vpop.f32.mrb[0].mxu0
    %v2286 = vadd.f32 0.0, %v2285
    %v2287 = vpop.f32.mrb[0].mxu0
    %v2288 = vadd.f32 0.0, %v2287
    %2289 = vdwg.mxu0
    %v2290 = vadd.f32 %v2198, %v2272
    %v2291 = vadd.f32 %v2199, %v2274
    %v2292 = vadd.f32 %v2200, %v2276
    %v2293 = vadd.f32 %v2201, %v2278
    %v2294 = vadd.f32 %v2202, %v2282
    %v2295 = vadd.f32 %v2203, %v2284
    %v2296 = vadd.f32 %v2204, %v2286
    %v2297 = vadd.f32 %v2205, %v2288
    %v2302 = vunpack.c.l.b16 %v74
    %v2303 = vunpack.c.l.b16 %v75
    %v2304 = vunpack.c.l.b16 %v76
    %v2305 = vunpack.c.l.b16 %v77
    %v2306 = vpack.c.b16 %v2303, %v2302
    %v2307 = vpack.c.b16 %v2305, %v2304
    %2308 = vrot.lane.b32.xlu0 %v1584, 120
    %v2309 = vpop.permute.xlu0 %2308
    %2310 = vrot.lane.b32.xlu0 %v1585, 120
    %v2311 = vpop.permute.xlu0 %2310
    %2312 = vrot.lane.b32.xlu0 %v1586, 120
    %v2313 = vpop.permute.xlu0 %2312
    %2314 = vrot.lane.b32.xlu0 %v1587, 120
    %v2315 = vpop.permute.xlu0 %2314
    %vm2316 = vcmask 982016
    %v2317 = vsel %vm2316, %v2309, %v2311
    %v2318 = vsel %vm2316, %v2313, %v2315
    %v2324 = vsel %vm1617, %v2306, 0
    %v2327 = vsel %vm1617, %v2307, 0
    %2329 = vmatprep.subr.bf16.mxu0 %v2311
    %2330 = vmatpush1.bf16.msra.mxu0 %v2317
    %2331 = vmatprep.subr.bf16.mxu0 %v2315
    %2332 = vmatpush1.bf16.msra.mxu0 %v2318
    %2333 = vmatprep.subr.bf16.mxu0 0
    %2334 = vmatpush1.bf16.msra.mxu0 0
    %2335 = vmatprep.subr.bf16.mxu0 0
    %2336 = vmatpush1.bf16.msra.mxu0 0
    %2337 = vmatprep.subr.bf16.mxu0 0
    %2338 = vmatpush1.bf16.msra.mxu0 0
    %2339 = vmatprep.subr.bf16.mxu0 0
    %2340 = vmatpush1.bf16.msra.mxu0 0
    %2341 = vmatprep.subr.bf16.mxu0 0
    %2342 = vmatpush1.bf16.msra.mxu0 0
    %2343 = vmatprep.subr.bf16.mxu0 0
    %2344 = vmatpush1.bf16.msra.mxu0 0
    %2345 = vmatprep.subr.bf16.mxu0 0
    %2346 = vmatpush1.bf16.msra.mxu0 0
    %2347 = vmatprep.subr.bf16.mxu0 0
    %2348 = vmatpush1.bf16.msra.mxu0 0
    %2349 = vmatprep.subr.bf16.mxu0 0
    %2350 = vmatpush1.bf16.msra.mxu0 0
    %2351 = vmatprep.subr.bf16.mxu0 0
    %2352 = vmatpush1.bf16.msra.mxu0 0
    %2353 = vmatprep.subr.bf16.mxu0 0
    %2354 = vmatpush1.bf16.msra.mxu0 0
    %2355 = vmatprep.subr.bf16.mxu0 0
    %2356 = vmatpush1.bf16.msra.mxu0 0
    %2357 = vmatprep.subr.bf16.mxu0 0
    %2358 = vmatpush1.bf16.msra.mxu0 0
    %2359 = vmatprep.subr.bf16.mxu0 0
    %2360 = vmatpush1.bf16.msra.mxu0 0
    %2361 = vmatprep.mubr.bf16.mxu0 0
    %2362 = vmatmul.mubr.bf16.gmra.mrb[0].mxu0 %v2324
    %v2363 = vpop.f32.mrb[0].mxu0
    %v2364 = vadd.f32 0.0, %v2363
    %v2365 = vpop.f32.mrb[0].mxu0
    %v2366 = vadd.f32 0.0, %v2365
    %v2367 = vpop.f32.mrb[0].mxu0
    %v2368 = vadd.f32 0.0, %v2367
    %v2369 = vpop.f32.mrb[0].mxu0
    %v2370 = vadd.f32 0.0, %v2369
    %2371 = vmatprep.mubr.bf16.mxu0 0
    %2372 = vmatmul.mubr.bf16.gmra.mrb[0].mxu0 %v2327
    %v2373 = vpop.f32.mrb[0].mxu0
    %v2374 = vadd.f32 0.0, %v2373
    %v2375 = vpop.f32.mrb[0].mxu0
    %v2376 = vadd.f32 0.0, %v2375
    %v2377 = vpop.f32.mrb[0].mxu0
    %v2378 = vadd.f32 0.0, %v2377
    %v2379 = vpop.f32.mrb[0].mxu0
    %v2380 = vadd.f32 0.0, %v2379
    %2381 = vdwg.mxu0
    %v2382 = vadd.f32 %v2290, %v2364
    %v2383 = vadd.f32 %v2291, %v2366
    %v2384 = vadd.f32 %v2292, %v2368
    %v2385 = vadd.f32 %v2293, %v2370
    %v2386 = vadd.f32 %v2294, %v2374
    %v2387 = vadd.f32 %v2295, %v2376
    %v2388 = vadd.f32 %v2296, %v2378
    %v2389 = vadd.f32 %v2297, %v2380
    %v2394 = vunpack.c.l.b16 %v78
    %v2395 = vunpack.c.l.b16 %v79
    %v2396 = vunpack.c.l.b16 %v80
    %v2397 = vunpack.c.l.b16 %v81
    %v2398 = vpack.c.b16 %v2395, %v2394
    %v2399 = vpack.c.b16 %v2397, %v2396
    %2400 = vrot.lane.b32.xlu0 %v1584, 119
    %v2401 = vpop.permute.xlu0 %2400
    %2402 = vrot.lane.b32.xlu0 %v1585, 119
    %v2403 = vpop.permute.xlu0 %2402
    %2404 = vrot.lane.b32.xlu0 %v1586, 119
    %v2405 = vpop.permute.xlu0 %2404
    %2406 = vrot.lane.b32.xlu0 %v1587, 119
    %v2407 = vpop.permute.xlu0 %2406
    %vm2408 = vcmask 973824
    %v2409 = vsel %vm2408, %v2401, %v2403
    %v2410 = vsel %vm2408, %v2405, %v2407
    %v2416 = vsel %vm1617, %v2398, 0
    %v2419 = vsel %vm1617, %v2399, 0
    %2421 = vmatprep.subr.bf16.mxu0 %v2403
    %2422 = vmatpush1.bf16.msra.mxu0 %v2409
    %2423 = vmatprep.subr.bf16.mxu0 %v2407
    %2424 = vmatpush1.bf16.msra.mxu0 %v2410
    %2425 = vmatprep.subr.bf16.mxu0 0
    %2426 = vmatpush1.bf16.msra.mxu0 0
    %2427 = vmatprep.subr.bf16.mxu0 0
    %2428 = vmatpush1.bf16.msra.mxu0 0
    %2429 = vmatprep.subr.bf16.mxu0 0
    %2430 = vmatpush1.bf16.msra.mxu0 0
    %2431 = vmatprep.subr.bf16.mxu0 0
    %2432 = vmatpush1.bf16.msra.mxu0 0
    %2433 = vmatprep.subr.bf16.mxu0 0
    %2434 = vmatpush1.bf16.msra.mxu0 0
    %2435 = vmatprep.subr.bf16.mxu0 0
    %2436 = vmatpush1.bf16.msra.mxu0 0
    %2437 = vmatprep.subr.bf16.mxu0 0
    %2438 = vmatpush1.bf16.msra.mxu0 0
    %2439 = vmatprep.subr.bf16.mxu0 0
    %2440 = vmatpush1.bf16.msra.mxu0 0
    %2441 = vmatprep.subr.bf16.mxu0 0
    %2442 = vmatpush1.bf16.msra.mxu0 0
    %2443 = vmatprep.subr.bf16.mxu0 0
    %2444 = vmatpush1.bf16.msra.mxu0 0
    %2445 = vmatprep.subr.bf16.mxu0 0
    %2446 = vmatpush1.bf16.msra.mxu0 0
    %2447 = vmatprep.subr.bf16.mxu0 0
    %2448 = vmatpush1.bf16.msra.mxu0 0
    %2449 = vmatprep.subr.bf16.mxu0 0
    %2450 = vmatpush1.bf16.msra.mxu0 0
    %2451 = vmatprep.subr.bf16.mxu0 0
    %2452 = vmatpush1.bf16.msra.mxu0 0
    %2453 = vmatprep.mubr.bf16.mxu0 0
    %2454 = vmatmul.mubr.bf16.gmra.mrb[0].mxu0 %v2416
    %v2455 = vpop.f32.mrb[0].mxu0
    %v2456 = vadd.f32 0.0, %v2455
    %v2457 = vpop.f32.mrb[0].mxu0
    %v2458 = vadd.f32 0.0, %v2457
    %v2459 = vpop.f32.mrb[0].mxu0
    %v2460 = vadd.f32 0.0, %v2459
    %v2461 = vpop.f32.mrb[0].mxu0
    %v2462 = vadd.f32 0.0, %v2461
    %2463 = vmatprep.mubr.bf16.mxu0 0
    %2464 = vmatmul.mubr.bf16.gmra.mrb[0].mxu0 %v2419
    %v2465 = vpop.f32.mrb[0].mxu0
    %v2466 = vadd.f32 0.0, %v2465
    %v2467 = vpop.f32.mrb[0].mxu0
    %v2468 = vadd.f32 0.0, %v2467
    %v2469 = vpop.f32.mrb[0].mxu0
    %v2470 = vadd.f32 0.0, %v2469
    %v2471 = vpop.f32.mrb[0].mxu0
    %v2472 = vadd.f32 0.0, %v2471
    %2473 = vdwg.mxu0
    %v2474 = vadd.f32 %v2382, %v2456
    %v2475 = vadd.f32 %v2383, %v2458
    %v2476 = vadd.f32 %v2384, %v2460
    %v2477 = vadd.f32 %v2385, %v2462
    %v2478 = vadd.f32 %v2386, %v2466
    %v2479 = vadd.f32 %v2387, %v2468
    %v2480 = vadd.f32 %v2388, %v2470
    %v2481 = vadd.f32 %v2389, %v2472
    %v2486 = vunpack.c.l.b16 %v82
    %v2487 = vunpack.c.l.b16 %v83
    %v2488 = vunpack.c.l.b16 %v84
    %v2489 = vunpack.c.l.b16 %v85
    %v2490 = vpack.c.b16 %v2487, %v2486
    %v2491 = vpack.c.b16 %v2489, %v2488
    %2492 = vrot.lane.b32.xlu0 %v1584, 118
    %v2493 = vpop.permute.xlu0 %2492
    %2494 = vrot.lane.b32.xlu0 %v1585, 118
    %v2495 = vpop.permute.xlu0 %2494
    %2496 = vrot.lane.b32.xlu0 %v1586, 118
    %v2497 = vpop.permute.xlu0 %2496
    %2498 = vrot.lane.b32.xlu0 %v1587, 118
    %v2499 = vpop.permute.xlu0 %2498
    %vm2500 = vcmask 965632
    %v2501 = vsel %vm2500, %v2493, %v2495
    %v2502 = vsel %vm2500, %v2497, %v2499
    %v2508 = vsel %vm1617, %v2490, 0
    %v2511 = vsel %vm1617, %v2491, 0
    %2513 = vmatprep.subr.bf16.mxu0 %v2495
    %2514 = vmatpush1.bf16.msra.mxu0 %v2501
    %2515 = vmatprep.subr.bf16.mxu0 %v2499
    %2516 = vmatpush1.bf16.msra.mxu0 %v2502
    %2517 = vmatprep.subr.bf16.mxu0 0
    %2518 = vmatpush1.bf16.msra.mxu0 0
    %2519 = vmatprep.subr.bf16.mxu0 0
    %2520 = vmatpush1.bf16.msra.mxu0 0
    %2521 = vmatprep.subr.bf16.mxu0 0
    %2522 = vmatpush1.bf16.msra.mxu0 0
    %2523 = vmatprep.subr.bf16.mxu0 0
    %2524 = vmatpush1.bf16.msra.mxu0 0
    %2525 = vmatprep.subr.bf16.mxu0 0
    %2526 = vmatpush1.bf16.msra.mxu0 0
    %2527 = vmatprep.subr.bf16.mxu0 0
    %2528 = vmatpush1.bf16.msra.mxu0 0
    %2529 = vmatprep.subr.bf16.mxu0 0
    %2530 = vmatpush1.bf16.msra.mxu0 0
    %2531 = vmatprep.subr.bf16.mxu0 0
    %2532 = vmatpush1.bf16.msra.mxu0 0
    %2533 = vmatprep.subr.bf16.mxu0 0
    %2534 = vmatpush1.bf16.msra.mxu0 0
    %2535 = vmatprep.subr.bf16.mxu0 0
    %2536 = vmatpush1.bf16.msra.mxu0 0
    %2537 = vmatprep.subr.bf16.mxu0 0
    %2538 = vmatpush1.bf16.msra.mxu0 0
    %2539 = vmatprep.subr.bf16.mxu0 0
    %2540 = vmatpush1.bf16.msra.mxu0 0
    %2541 = vmatprep.subr.bf16.mxu0 0
    %2542 = vmatpush1.bf16.msra.mxu0 0
    %2543 = vmatprep.subr.bf16.mxu0 0
    %2544 = vmatpush1.bf16.msra.mxu0 0
    %2545 = vmatprep.mubr.bf16.mxu0 0
    %2546 = vmatmul.mubr.bf16.gmra.mrb[0].mxu0 %v2508
    %v2547 = vpop.f32.mrb[0].mxu0
    %v2548 = vadd.f32 0.0, %v2547
    %v2549 = vpop.f32.mrb[0].mxu0
    %v2550 = vadd.f32 0.0, %v2549
    %v2551 = vpop.f32.mrb[0].mxu0
    %v2552 = vadd.f32 0.0, %v2551
    %v2553 = vpop.f32.mrb[0].mxu0
    %v2554 = vadd.f32 0.0, %v2553
    %2555 = vmatprep.mubr.bf16.mxu0 0
    %2556 = vmatmul.mubr.bf16.gmra.mrb[0].mxu0 %v2511
    %v2557 = vpop.f32.mrb[0].mxu0
    %v2558 = vadd.f32 0.0, %v2557
    %v2559 = vpop.f32.mrb[0].mxu0
    %v2560 = vadd.f32 0.0, %v2559
    %v2561 = vpop.f32.mrb[0].mxu0
    %v2562 = vadd.f32 0.0, %v2561
    %v2563 = vpop.f32.mrb[0].mxu0
    %v2564 = vadd.f32 0.0, %v2563
    %2565 = vdwg.mxu0
    %v2566 = vadd.f32 %v2474, %v2548
    %v2567 = vadd.f32 %v2475, %v2550
    %v2568 = vadd.f32 %v2476, %v2552
    %v2569 = vadd.f32 %v2477, %v2554
    %v2570 = vadd.f32 %v2478, %v2558
    %v2571 = vadd.f32 %v2479, %v2560
    %v2572 = vadd.f32 %v2480, %v2562
    %v2573 = vadd.f32 %v2481, %v2564
    %v2578 = vunpack.c.l.b16 %v86
    %v2579 = vunpack.c.l.b16 %v87
    %v2580 = vunpack.c.l.b16 %v88
    %v2581 = vunpack.c.l.b16 %v89
    %v2582 = vpack.c.b16 %v2579, %v2578
    %v2583 = vpack.c.b16 %v2581, %v2580
    %2584 = vrot.lane.b32.xlu0 %v1584, 117
    %v2585 = vpop.permute.xlu0 %2584
    %2586 = vrot.lane.b32.xlu0 %v1585, 117
    %v2587 = vpop.permute.xlu0 %2586
    %2588 = vrot.lane.b32.xlu0 %v1586, 117
    %v2589 = vpop.permute.xlu0 %2588
    %2590 = vrot.lane.b32.xlu0 %v1587, 117
    %v2591 = vpop.permute.xlu0 %2590
    %vm2592 = vcmask 957440
    %v2593 = vsel %vm2592, %v2585, %v2587
    %v2594 = vsel %vm2592, %v2589, %v2591
    %v2600 = vsel %vm1617, %v2582, 0
    %v2603 = vsel %vm1617, %v2583, 0
    %2605 = vmatprep.subr.bf16.mxu0 %v2587
    %2606 = vmatpush1.bf16.msra.mxu0 %v2593
    %2607 = vmatprep.subr.bf16.mxu0 %v2591
    %2608 = vmatpush1.bf16.msra.mxu0 %v2594
    %2609 = vmatprep.subr.bf16.mxu0 0
    %2610 = vmatpush1.bf16.msra.mxu0 0
    %2611 = vmatprep.subr.bf16.mxu0 0
    %2612 = vmatpush1.bf16.msra.mxu0 0
    %2613 = vmatprep.subr.bf16.mxu0 0
    %2614 = vmatpush1.bf16.msra.mxu0 0
    %2615 = vmatprep.subr.bf16.mxu0 0
    %2616 = vmatpush1.bf16.msra.mxu0 0
    %2617 = vmatprep.subr.bf16.mxu0 0
    %2618 = vmatpush1.bf16.msra.mxu0 0
    %2619 = vmatprep.subr.bf16.mxu0 0
    %2620 = vmatpush1.bf16.msra.mxu0 0
    %2621 = vmatprep.subr.bf16.mxu0 0
    %2622 = vmatpush1.bf16.msra.mxu0 0
    %2623 = vmatprep.subr.bf16.mxu0 0
    %2624 = vmatpush1.bf16.msra.mxu0 0
    %2625 = vmatprep.subr.bf16.mxu0 0
    %2626 = vmatpush1.bf16.msra.mxu0 0
    %2627 = vmatprep.subr.bf16.mxu0 0
    %2628 = vmatpush1.bf16.msra.mxu0 0
    %2629 = vmatprep.subr.bf16.mxu0 0
    %2630 = vmatpush1.bf16.msra.mxu0 0
    %2631 = vmatprep.subr.bf16.mxu0 0
    %2632 = vmatpush1.bf16.msra.mxu0 0
    %2633 = vmatprep.subr.bf16.mxu0 0
    %2634 = vmatpush1.bf16.msra.mxu0 0
    %2635 = vmatprep.subr.bf16.mxu0 0
    %2636 = vmatpush1.bf16.msra.mxu0 0
    %2637 = vmatprep.mubr.bf16.mxu0 0
    %2638 = vmatmul.mubr.bf16.gmra.mrb[0].mxu0 %v2600
    %v2639 = vpop.f32.mrb[0].mxu0
    %v2640 = vadd.f32 0.0, %v2639
    %v2641 = vpop.f32.mrb[0].mxu0
    %v2642 = vadd.f32 0.0, %v2641
    %v2643 = vpop.f32.mrb[0].mxu0
    %v2644 = vadd.f32 0.0, %v2643
    %v2645 = vpop.f32.mrb[0].mxu0
    %v2646 = vadd.f32 0.0, %v2645
    %2647 = vmatprep.mubr.bf16.mxu0 0
    %2648 = vmatmul.mubr.bf16.gmra.mrb[0].mxu0 %v2603
    %v2649 = vpop.f32.mrb[0].mxu0
    %v2650 = vadd.f32 0.0, %v2649
    %v2651 = vpop.f32.mrb[0].mxu0
    %v2652 = vadd.f32 0.0, %v2651
    %v2653 = vpop.f32.mrb[0].mxu0
    %v2654 = vadd.f32 0.0, %v2653
    %v2655 = vpop.f32.mrb[0].mxu0
    %v2656 = vadd.f32 0.0, %v2655
    %2657 = vdwg.mxu0
    %v2658 = vadd.f32 %v2566, %v2640
    %v2659 = vadd.f32 %v2567, %v2642
    %v2660 = vadd.f32 %v2568, %v2644
    %v2661 = vadd.f32 %v2569, %v2646
    %v2662 = vadd.f32 %v2570, %v2650
    %v2663 = vadd.f32 %v2571, %v2652
    %v2664 = vadd.f32 %v2572, %v2654
    %v2665 = vadd.f32 %v2573, %v2656
    %v2670 = vunpack.c.l.b16 %v90
    %v2671 = vunpack.c.l.b16 %v91
    %v2672 = vunpack.c.l.b16 %v92
    %v2673 = vunpack.c.l.b16 %v93
    %v2674 = vpack.c.b16 %v2671, %v2670
    %v2675 = vpack.c.b16 %v2673, %v2672
    %2676 = vrot.lane.b32.xlu0 %v1584, 116
    %v2677 = vpop.permute.xlu0 %2676
    %2678 = vrot.lane.b32.xlu0 %v1585, 116
    %v2679 = vpop.permute.xlu0 %2678
    %2680 = vrot.lane.b32.xlu0 %v1586, 116
    %v2681 = vpop.permute.xlu0 %2680
    %2682 = vrot.lane.b32.xlu0 %v1587, 116
    %v2683 = vpop.permute.xlu0 %2682
    %vm2684 = vcmask 949248
    %v2685 = vsel %vm2684, %v2677, %v2679
    %v2686 = vsel %vm2684, %v2681, %v2683
    %v2692 = vsel %vm1617, %v2674, 0
    %v2695 = vsel %vm1617, %v2675, 0
    %2697 = vmatprep.subr.bf16.mxu0 %v2679
    %2698 = vmatpush1.bf16.msra.mxu0 %v2685
    %2699 = vmatprep.subr.bf16.mxu0 %v2683
    %2700 = vmatpush1.bf16.msra.mxu0 %v2686
    %2701 = vmatprep.subr.bf16.mxu0 0
    %2702 = vmatpush1.bf16.msra.mxu0 0
    %2703 = vmatprep.subr.bf16.mxu0 0
    %2704 = vmatpush1.bf16.msra.mxu0 0
    %2705 = vmatprep.subr.bf16.mxu0 0
    %2706 = vmatpush1.bf16.msra.mxu0 0
    %2707 = vmatprep.subr.bf16.mxu0 0
    %2708 = vmatpush1.bf16.msra.mxu0 0
    %2709 = vmatprep.subr.bf16.mxu0 0
    %2710 = vmatpush1.bf16.msra.mxu0 0
    %2711 = vmatprep.subr.bf16.mxu0 0
    %2712 = vmatpush1.bf16.msra.mxu0 0
    %2713 = vmatprep.subr.bf16.mxu0 0
    %2714 = vmatpush1.bf16.msra.mxu0 0
    %2715 = vmatprep.subr.bf16.mxu0 0
    %2716 = vmatpush1.bf16.msra.mxu0 0
    %2717 = vmatprep.subr.bf16.mxu0 0
    %2718 = vmatpush1.bf16.msra.mxu0 0
    %2719 = vmatprep.subr.bf16.mxu0 0
    %2720 = vmatpush1.bf16.msra.mxu0 0
    %2721 = vmatprep.subr.bf16.mxu0 0
    %2722 = vmatpush1.bf16.msra.mxu0 0
    %2723 = vmatprep.subr.bf16.mxu0 0
    %2724 = vmatpush1.bf16.msra.mxu0 0
    %2725 = vmatprep.subr.bf16.mxu0 0
    %2726 = vmatpush1.bf16.msra.mxu0 0
    %2727 = vmatprep.subr.bf16.mxu0 0
    %2728 = vmatpush1.bf16.msra.mxu0 0
    %2729 = vmatprep.mubr.bf16.mxu0 0
    %2730 = vmatmul.mubr.bf16.gmra.mrb[0].mxu0 %v2692
    %v2731 = vpop.f32.mrb[0].mxu0
    %v2732 = vadd.f32 0.0, %v2731
    %v2733 = vpop.f32.mrb[0].mxu0
    %v2734 = vadd.f32 0.0, %v2733
    %v2735 = vpop.f32.mrb[0].mxu0
    %v2736 = vadd.f32 0.0, %v2735
    %v2737 = vpop.f32.mrb[0].mxu0
    %v2738 = vadd.f32 0.0, %v2737
    %2739 = vmatprep.mubr.bf16.mxu0 0
    %2740 = vmatmul.mubr.bf16.gmra.mrb[0].mxu0 %v2695
    %v2741 = vpop.f32.mrb[0].mxu0
    %v2742 = vadd.f32 0.0, %v2741
    %v2743 = vpop.f32.mrb[0].mxu0
    %v2744 = vadd.f32 0.0, %v2743
    %v2745 = vpop.f32.mrb[0].mxu0
    %v2746 = vadd.f32 0.0, %v2745
    %v2747 = vpop.f32.mrb[0].mxu0
    %v2748 = vadd.f32 0.0, %v2747
    %2749 = vdwg.mxu0
    %v2750 = vadd.f32 %v2658, %v2732
    %v2751 = vadd.f32 %v2659, %v2734
    %v2752 = vadd.f32 %v2660, %v2736
    %v2753 = vadd.f32 %v2661, %v2738
    %v2754 = vadd.f32 %v2662, %v2742
    %v2755 = vadd.f32 %v2663, %v2744
    %v2756 = vadd.f32 %v2664, %v2746
    %v2757 = vadd.f32 %v2665, %v2748
    %v2762 = vunpack.c.l.b16 %v94
    %v2763 = vunpack.c.l.b16 %v95
    %v2764 = vunpack.c.l.b16 %v96
    %v2765 = vunpack.c.l.b16 %v97
    %v2766 = vpack.c.b16 %v2763, %v2762
    %v2767 = vpack.c.b16 %v2765, %v2764
    %2768 = vrot.lane.b32.xlu0 %v1584, 115
    %v2769 = vpop.permute.xlu0 %2768
    %2770 = vrot.lane.b32.xlu0 %v1585, 115
    %v2771 = vpop.permute.xlu0 %2770
    %2772 = vrot.lane.b32.xlu0 %v1586, 115
    %v2773 = vpop.permute.xlu0 %2772
    %2774 = vrot.lane.b32.xlu0 %v1587, 115
    %v2775 = vpop.permute.xlu0 %2774
    %vm2776 = vcmask 941056
    %v2777 = vsel %vm2776, %v2769, %v2771
    %v2778 = vsel %vm2776, %v2773, %v2775
    %v2784 = vsel %vm1617, %v2766, 0
    %v2787 = vsel %vm1617, %v2767, 0
    %2789 = vmatprep.subr.bf16.mxu0 %v2771
    %2790 = vmatpush1.bf16.msra.mxu0 %v2777
    %2791 = vmatprep.subr.bf16.mxu0 %v2775
    %2792 = vmatpush1.bf16.msra.mxu0 %v2778
    %2793 = vmatprep.subr.bf16.mxu0 0
    %2794 = vmatpush1.bf16.msra.mxu0 0
    %2795 = vmatprep.subr.bf16.mxu0 0
    %2796 = vmatpush1.bf16.msra.mxu0 0
    %2797 = vmatprep.subr.bf16.mxu0 0
    %2798 = vmatpush1.bf16.msra.mxu0 0
    %2799 = vmatprep.subr.bf16.mxu0 0
    %2800 = vmatpush1.bf16.msra.mxu0 0
    %2801 = vmatprep.subr.bf16.mxu0 0
    %2802 = vmatpush1.bf16.msra.mxu0 0
    %2803 = vmatprep.subr.bf16.mxu0 0
    %2804 = vmatpush1.bf16.msra.mxu0 0
    %2805 = vmatprep.subr.bf16.mxu0 0
    %2806 = vmatpush1.bf16.msra.mxu0 0
    %2807 = vmatprep.subr.bf16.mxu0 0
    %2808 = vmatpush1.bf16.msra.mxu0 0
    %2809 = vmatprep.subr.bf16.mxu0 0
    %2810 = vmatpush1.bf16.msra.mxu0 0
    %2811 = vmatprep.subr.bf16.mxu0 0
    %2812 = vmatpush1.bf16.msra.mxu0 0
    %2813 = vmatprep.subr.bf16.mxu0 0
    %2814 = vmatpush1.bf16.msra.mxu0 0
    %2815 = vmatprep.subr.bf16.mxu0 0
    %2816 = vmatpush1.bf16.msra.mxu0 0
    %2817 = vmatprep.subr.bf16.mxu0 0
    %2818 = vmatpush1.bf16.msra.mxu0 0
    %2819 = vmatprep.subr.bf16.mxu0 0
    %2820 = vmatpush1.bf16.msra.mxu0 0
    %2821 = vmatprep.mubr.bf16.mxu0 0
    %2822 = vmatmul.mubr.bf16.gmra.mrb[0].mxu0 %v2784
    %v2823 = vpop.f32.mrb[0].mxu0
    %v2824 = vadd.f32 0.0, %v2823
    %v2825 = vpop.f32.mrb[0].mxu0
    %v2826 = vadd.f32 0.0, %v2825
    %v2827 = vpop.f32.mrb[0].mxu0
    %v2828 = vadd.f32 0.0, %v2827
    %v2829 = vpop.f32.mrb[0].mxu0
    %v2830 = vadd.f32 0.0, %v2829
    %2831 = vmatprep.mubr.bf16.mxu0 0
    %2832 = vmatmul.mubr.bf16.gmra.mrb[0].mxu0 %v2787
    %v2833 = vpop.f32.mrb[0].mxu0
    %v2834 = vadd.f32 0.0, %v2833
    %v2835 = vpop.f32.mrb[0].mxu0
    %v2836 = vadd.f32 0.0, %v2835
    %v2837 = vpop.f32.mrb[0].mxu0
    %v2838 = vadd.f32 0.0, %v2837
    %v2839 = vpop.f32.mrb[0].mxu0
    %v2840 = vadd.f32 0.0, %v2839
    %2841 = vdwg.mxu0
    %v2842 = vadd.f32 %v2750, %v2824
    %v2843 = vadd.f32 %v2751, %v2826
    %v2844 = vadd.f32 %v2752, %v2828
    %v2845 = vadd.f32 %v2753, %v2830
    %v2846 = vadd.f32 %v2754, %v2834
    %v2847 = vadd.f32 %v2755, %v2836
    %v2848 = vadd.f32 %v2756, %v2838
    %v2849 = vadd.f32 %v2757, %v2840
    %v2854 = vunpack.c.l.b16 %v98
    %v2855 = vunpack.c.l.b16 %v99
    %v2856 = vunpack.c.l.b16 %v100
    %v2857 = vunpack.c.l.b16 %v101
    %v2858 = vpack.c.b16 %v2855, %v2854
    %v2859 = vpack.c.b16 %v2857, %v2856
    %2860 = vrot.lane.b32.xlu0 %v1584, 114
    %v2861 = vpop.permute.xlu0 %2860
    %2862 = vrot.lane.b32.xlu0 %v1585, 114
    %v2863 = vpop.permute.xlu0 %2862
    %2864 = vrot.lane.b32.xlu0 %v1586, 114
    %v2865 = vpop.permute.xlu0 %2864
    %2866 = vrot.lane.b32.xlu0 %v1587, 114
    %v2867 = vpop.permute.xlu0 %2866
    %vm2868 = vcmask 932864
    %v2869 = vsel %vm2868, %v2861, %v2863
    %v2870 = vsel %vm2868, %v2865, %v2867
    %v2876 = vsel %vm1617, %v2858, 0
    %v2879 = vsel %vm1617, %v2859, 0
    %2881 = vmatprep.subr.bf16.mxu0 %v2863
    %2882 = vmatpush1.bf16.msra.mxu0 %v2869
    %2883 = vmatprep.subr.bf16.mxu0 %v2867
    %2884 = vmatpush1.bf16.msra.mxu0 %v2870
    %2885 = vmatprep.subr.bf16.mxu0 0
    %2886 = vmatpush1.bf16.msra.mxu0 0
    %2887 = vmatprep.subr.bf16.mxu0 0
    %2888 = vmatpush1.bf16.msra.mxu0 0
    %2889 = vmatprep.subr.bf16.mxu0 0
    %2890 = vmatpush1.bf16.msra.mxu0 0
    %2891 = vmatprep.subr.bf16.mxu0 0
    %2892 = vmatpush1.bf16.msra.mxu0 0
    %2893 = vmatprep.subr.bf16.mxu0 0
    %2894 = vmatpush1.bf16.msra.mxu0 0
    %2895 = vmatprep.subr.bf16.mxu0 0
    %2896 = vmatpush1.bf16.msra.mxu0 0
    %2897 = vmatprep.subr.bf16.mxu0 0
    %2898 = vmatpush1.bf16.msra.mxu0 0
    %2899 = vmatprep.subr.bf16.mxu0 0
    %2900 = vmatpush1.bf16.msra.mxu0 0
    %2901 = vmatprep.subr.bf16.mxu0 0
    %2902 = vmatpush1.bf16.msra.mxu0 0
    %2903 = vmatprep.subr.bf16.mxu0 0
    %2904 = vmatpush1.bf16.msra.mxu0 0
    %2905 = vmatprep.subr.bf16.mxu0 0
    %2906 = vmatpush1.bf16.msra.mxu0 0
    %2907 = vmatprep.subr.bf16.mxu0 0
    %2908 = vmatpush1.bf16.msra.mxu0 0
    %2909 = vmatprep.subr.bf16.mxu0 0
    %2910 = vmatpush1.bf16.msra.mxu0 0
    %2911 = vmatprep.subr.bf16.mxu0 0
    %2912 = vmatpush1.bf16.msra.mxu0 0
    %2913 = vmatprep.mubr.bf16.mxu0 0
    %2914 = vmatmul.mubr.bf16.gmra.mrb[0].mxu0 %v2876
    %v2915 = vpop.f32.mrb[0].mxu0
    %v2916 = vadd.f32 0.0, %v2915
    %v2917 = vpop.f32.mrb[0].mxu0
    %v2918 = vadd.f32 0.0, %v2917
    %v2919 = vpop.f32.mrb[0].mxu0
    %v2920 = vadd.f32 0.0, %v2919
    %v2921 = vpop.f32.mrb[0].mxu0
    %v2922 = vadd.f32 0.0, %v2921
    %2923 = vmatprep.mubr.bf16.mxu0 0
    %2924 = vmatmul.mubr.bf16.gmra.mrb[0].mxu0 %v2879
    %v2925 = vpop.f32.mrb[0].mxu0
    %v2926 = vadd.f32 0.0, %v2925
    %v2927 = vpop.f32.mrb[0].mxu0
    %v2928 = vadd.f32 0.0, %v2927
    %v2929 = vpop.f32.mrb[0].mxu0
    %v2930 = vadd.f32 0.0, %v2929
    %v2931 = vpop.f32.mrb[0].mxu0
    %v2932 = vadd.f32 0.0, %v2931
    %2933 = vdwg.mxu0
    %v2934 = vadd.f32 %v2842, %v2916
    %v2935 = vadd.f32 %v2843, %v2918
    %v2936 = vadd.f32 %v2844, %v2920
    %v2937 = vadd.f32 %v2845, %v2922
    %v2938 = vadd.f32 %v2846, %v2926
    %v2939 = vadd.f32 %v2847, %v2928
    %v2940 = vadd.f32 %v2848, %v2930
    %v2941 = vadd.f32 %v2849, %v2932
    %2943 = vset.pattern.permute.xlu0 0
    %2944 = vperm.xlu0 %2943, %v102
    %v2945 = vpop.permute.xlu0 %2944
    %2948 = vset.pattern.permute.xlu0 0
    %2949 = vperm.xlu0 %2948, %v103
    %v2950 = vpop.permute.xlu0 %2949
    %2953 = vset.pattern.permute.xlu0 0
    %2954 = vperm.xlu0 %2953, %v104
    %v2955 = vpop.permute.xlu0 %2954
    %2958 = vset.pattern.permute.xlu0 0
    %2959 = vperm.xlu0 %2958, %v105
    %v2960 = vpop.permute.xlu0 %2959
    %v2962 = vadd.f32 %v2934, %v2945
    %v2963 = vadd.f32 %v2935, %v2945
    %v2964 = vadd.f32 %v2936, %v2950
    %v2965 = vadd.f32 %v2937, %v2950
    %v2966 = vadd.f32 %v2938, %v2955
    %v2967 = vadd.f32 %v2939, %v2955
    %v2968 = vadd.f32 %v2940, %v2960
    %v2969 = vadd.f32 %v2941, %v2960
    %vm2970 = vcmp.gt.f32.partialorder %v2962, 0.0
    %vm2971 = vcmp.gt.f32.partialorder %v2963, 0.0
    %vm2972 = vcmp.gt.f32.partialorder %v2964, 0.0
    %vm2973 = vcmp.gt.f32.partialorder %v2965, 0.0
    %vm2974 = vcmp.gt.f32.partialorder %v2966, 0.0
    %vm2975 = vcmp.gt.f32.partialorder %v2967, 0.0
    %vm2976 = vcmp.gt.f32.partialorder %v2968, 0.0
    %vm2977 = vcmp.gt.f32.partialorder %v2969, 0.0
    %v2978 = vmin.f32 %v2962, 0.0
    %v2979 = vmin.f32 %v2963, 0.0
    %v2980 = vmin.f32 %v2964, 0.0
    %v2981 = vmin.f32 %v2965, 0.0
    %v2982 = vmin.f32 %v2966, 0.0
    %v2983 = vmin.f32 %v2967, 0.0
    %v2984 = vmin.f32 %v2968, 0.0
    %v2985 = vmin.f32 %v2969, 0.0
    %v2986 = vmul.f32 %v2978, 1.442695
    %v2987 = vpow.pop %v2986
    %v2988 = vmul.f32 %v2979, 1.442695
    %v2989 = vpow.pop %v2988
    %v2990 = vmul.f32 %v2980, 1.442695
    %v2991 = vpow.pop %v2990
    %v2992 = vmul.f32 %v2981, 1.442695
    %v2993 = vpow.pop %v2992
    %v2994 = vmul.f32 %v2982, 1.442695
    %v2995 = vpow.pop %v2994
    %v2996 = vmul.f32 %v2983, 1.442695
    %v2997 = vpow.pop %v2996
    %v2998 = vmul.f32 %v2984, 1.442695
    %v2999 = vpow.pop %v2998
    %v3000 = vmul.f32 %v2985, 1.442695
    %v3001 = vpow.pop %v3000
    %v3002 = vsub.f32 %v2987, 1.0
    %v3003 = vsub.f32 %v2989, 1.0
    %v3004 = vsub.f32 %v2991, 1.0
    %v3005 = vsub.f32 %v2993, 1.0
    %v3006 = vsub.f32 %v2995, 1.0
    %v3007 = vsub.f32 %v2997, 1.0
    %v3008 = vsub.f32 %v2999, 1.0
    %v3009 = vsub.f32 %v3001, 1.0
    %v3010 = vsel %vm2970, %v2962, %v3002
    %v3011 = vsel %vm2971, %v2963, %v3003
    %v3012 = vsel %vm2972, %v2964, %v3004
    %v3013 = vsel %vm2973, %v2965, %v3005
    %v3014 = vsel %vm2974, %v2966, %v3006
    %v3015 = vsel %vm2975, %v2967, %v3007
    %v3016 = vsel %vm2976, %v2968, %v3008
    %v3017 = vsel %vm2977, %v2969, %v3009
    %v3018 = vpack.c.bf16 %v3012, %v3010
    %v3019 = vpack.c.bf16 %v3013, %v3011
    %v3020 = vpack.c.bf16 %v3016, %v3014
    %v3021 = vpack.c.bf16 %v3017, %v3015
    %s3022 = smul.addr %s1581, 8
    %s3023 = scalar_lea.vmem [#allocation4], %s3022
    %3024 = vst [vmem:[%s3023] sm:$0xff] %v3018
    %vm3025 = vcmask 482304
    %3026 = vst.msk [vmem:[%s3023 + $0x8] sm:$0xff] %vm3025, %v3019
    %3027 = vst [vmem:[%s3023 + $0x10] sm:$0xff] %v3020
    %3028 = vst.msk [vmem:[%s3023 + $0x18] sm:$0xff] %vm3025, %v3021
    %s3029 = smul.u32 2, 2
    %s3030 = smul.addr %s3029, 8
    %s3031 = scalar_lea.vmem [#allocation3], %s3030
    %v3032 = vld [vmem:[%s3031] sm:$0xff]
    %v3033 = vld [vmem:[%s3031 + $0x8] sm:$0xff]
    %v3034 = vld [vmem:[%s3031 + $0x10] sm:$0xff]
    %v3035 = vld [vmem:[%s3031 + $0x18] sm:$0xff]
    %3040 = vrot.lane.b32.xlu0 %v3032, 127
    %v3041 = vpop.permute.xlu0 %3040
    %3042 = vrot.lane.b32.xlu0 %v3033, 127
    %v3043 = vpop.permute.xlu0 %3042
    %3044 = vrot.lane.b32.xlu0 %v3034, 127
    %v3045 = vpop.permute.xlu0 %3044
    %3046 = vrot.lane.b32.xlu0 %v3035, 127
    %v3047 = vpop.permute.xlu0 %3046
    %v3048 = vsel %vm1610, %v3041, %v3043
    %v3049 = vsel %vm1610, %v3045, %v3047
    %3054 = vmatprep.subr.bf16.mxu0 %v3043
    %3055 = vmatpush1.bf16.msra.mxu0 %v3048
    %3056 = vmatprep.subr.bf16.mxu0 %v3047
    %3057 = vmatpush1.bf16.msra.mxu0 %v3049
    %3058 = vmatprep.subr.bf16.mxu0 0
    %3059 = vmatpush1.bf16.msra.mxu0 0
    %3060 = vmatprep.subr.bf16.mxu0 0
    %3061 = vmatpush1.bf16.msra.mxu0 0
    %3062 = vmatprep.subr.bf16.mxu0 0
    %3063 = vmatpush1.bf16.msra.mxu0 0
    %3064 = vmatprep.subr.bf16.mxu0 0
    %3065 = vmatpush1.bf16.msra.mxu0 0
    %3066 = vmatprep.subr.bf16.mxu0 0
    %3067 = vmatpush1.bf16.msra.mxu0 0
    %3068 = vmatprep.subr.bf16.mxu0 0
    %3069 = vmatpush1.bf16.msra.mxu0 0
    %3070 = vmatprep.subr.bf16.mxu0 0
    %3071 = vmatpush1.bf16.msra.mxu0 0
    %3072 = vmatprep.subr.bf16.mxu0 0
    %3073 = vmatpush1.bf16.msra.mxu0 0
    %3074 = vmatprep.subr.bf16.mxu0 0
    %3075 = vmatpush1.bf16.msra.mxu0 0
    %3076 = vmatprep.subr.bf16.mxu0 0
    %3077 = vmatpush1.bf16.msra.mxu0 0
    %3078 = vmatprep.subr.bf16.mxu0 0
    %3079 = vmatpush1.bf16.msra.mxu0 0
    %3080 = vmatprep.subr.bf16.mxu0 0
    %3081 = vmatpush1.bf16.msra.mxu0 0
    %3082 = vmatprep.subr.bf16.mxu0 0
    %3083 = vmatpush1.bf16.msra.mxu0 0
    %3084 = vmatprep.subr.bf16.mxu0 0
    %3085 = vmatpush1.bf16.msra.mxu0 0
    %3086 = vmatprep.mubr.bf16.mxu0 0
    %3087 = vmatmul.mubr.bf16.gmra.mrb[0].mxu0 %v1619
    %v3088 = vpop.f32.mrb[0].mxu0
    %v3089 = vadd.f32 0.0, %v3088
    %v3090 = vpop.f32.mrb[0].mxu0
    %v3091 = vadd.f32 0.0, %v3090
    %v3092 = vpop.f32.mrb[0].mxu0
    %v3093 = vadd.f32 0.0, %v3092
    %v3094 = vpop.f32.mrb[0].mxu0
    %v3095 = vadd.f32 0.0, %v3094
    %3096 = vmatprep.mubr.bf16.mxu0 0
    %3097 = vmatmul.mubr.bf16.gmra.mrb[0].mxu0 %v1622
    %v3098 = vpop.f32.mrb[0].mxu0
    %v3099 = vadd.f32 0.0, %v3098
    %v3100 = vpop.f32.mrb[0].mxu0
    %v3101 = vadd.f32 0.0, %v3100
    %v3102 = vpop.f32.mrb[0].mxu0
    %v3103 = vadd.f32 0.0, %v3102
    %v3104 = vpop.f32.mrb[0].mxu0
    %v3105 = vadd.f32 0.0, %v3104
    %3106 = vdwg.mxu0
    %3107 = vmatprep.subr.bf16.mxu0 %v3033
    %3108 = vmatpush1.bf16.msra.mxu0 %v3032
    %3109 = vmatprep.subr.bf16.mxu0 %v3035
    %3110 = vmatpush1.bf16.msra.mxu0 %v3034
    %3111 = vmatprep.subr.bf16.mxu0 0
    %3112 = vmatpush1.bf16.msra.mxu0 0
    %3113 = vmatprep.subr.bf16.mxu0 0
    %3114 = vmatpush1.bf16.msra.mxu0 0
    %3115 = vmatprep.subr.bf16.mxu0 0
    %3116 = vmatpush1.bf16.msra.mxu0 0
    %3117 = vmatprep.subr.bf16.mxu0 0
    %3118 = vmatpush1.bf16.msra.mxu0 0
    %3119 = vmatprep.subr.bf16.mxu0 0
    %3120 = vmatpush1.bf16.msra.mxu0 0
    %3121 = vmatprep.subr.bf16.mxu0 0
    %3122 = vmatpush1.bf16.msra.mxu0 0
    %3123 = vmatprep.subr.bf16.mxu0 0
    %3124 = vmatpush1.bf16.msra.mxu0 0
    %3125 = vmatprep.subr.bf16.mxu0 0
    %3126 = vmatpush1.bf16.msra.mxu0 0
    %3127 = vmatprep.subr.bf16.mxu0 0
    %3128 = vmatpush1.bf16.msra.mxu0 0
    %3129 = vmatprep.subr.bf16.mxu0 0
    %3130 = vmatpush1.bf16.msra.mxu0 0
    %3131 = vmatprep.subr.bf16.mxu0 0
    %3132 = vmatpush1.bf16.msra.mxu0 0
    %3133 = vmatprep.subr.bf16.mxu0 0
    %3134 = vmatpush1.bf16.msra.mxu0 0
    %3135 = vmatprep.subr.bf16.mxu0 0
    %3136 = vmatpush1.bf16.msra.mxu0 0
    %3137 = vmatprep.subr.bf16.mxu0 0
    %3138 = vmatpush1.bf16.msra.mxu0 0
    %3139 = vmatprep.mubr.bf16.mxu0 0
    %3140 = vmatmul.mubr.bf16.gmra.mrb[0].mxu0 %v1688
    %v3141 = vpop.f32.mrb[0].mxu0
    %v3142 = vadd.f32 %v3089, %v3141
    %v3143 = vpop.f32.mrb[0].mxu0
    %v3144 = vadd.f32 %v3091, %v3143
    %v3145 = vpop.f32.mrb[0].mxu0
    %v3146 = vadd.f32 %v3093, %v3145
    %v3147 = vpop.f32.mrb[0].mxu0
    %v3148 = vadd.f32 %v3095, %v3147
    %3149 = vmatprep.mubr.bf16.mxu0 0
    %3150 = vmatmul.mubr.bf16.gmra.mrb[0].mxu0 %v1691
    %v3151 = vpop.f32.mrb[0].mxu0
    %v3152 = vadd.f32 %v3099, %v3151
    %v3153 = vpop.f32.mrb[0].mxu0
    %v3154 = vadd.f32 %v3101, %v3153
    %v3155 = vpop.f32.mrb[0].mxu0
    %v3156 = vadd.f32 %v3103, %v3155
    %v3157 = vpop.f32.mrb[0].mxu0
    %v3158 = vadd.f32 %v3105, %v3157
    %3159 = vdwg.mxu0
    %3160 = vrot.lane.b32.xlu0 %v3032, 126
    %v3161 = vpop.permute.xlu0 %3160
    %3162 = vrot.lane.b32.xlu0 %v3033, 126
    %v3163 = vpop.permute.xlu0 %3162
    %3164 = vrot.lane.b32.xlu0 %v3034, 126
    %v3165 = vpop.permute.xlu0 %3164
    %3166 = vrot.lane.b32.xlu0 %v3035, 126
    %v3167 = vpop.permute.xlu0 %3166
    %v3168 = vsel %vm1764, %v3161, %v3163
    %v3169 = vsel %vm1764, %v3165, %v3167
    %3174 = vmatprep.subr.bf16.mxu0 %v3163
    %3175 = vmatpush1.bf16.msra.mxu0 %v3168
    %3176 = vmatprep.subr.bf16.mxu0 %v3167
    %3177 = vmatpush1.bf16.msra.mxu0 %v3169
    %3178 = vmatprep.subr.bf16.mxu0 0
    %3179 = vmatpush1.bf16.msra.mxu0 0
    %3180 = vmatprep.subr.bf16.mxu0 0
    %3181 = vmatpush1.bf16.msra.mxu0 0
    %3182 = vmatprep.subr.bf16.mxu0 0
    %3183 = vmatpush1.bf16.msra.mxu0 0
    %3184 = vmatprep.subr.bf16.mxu0 0
    %3185 = vmatpush1.bf16.msra.mxu0 0
    %3186 = vmatprep.subr.bf16.mxu0 0
    %3187 = vmatpush1.bf16.msra.mxu0 0
    %3188 = vmatprep.subr.bf16.mxu0 0
    %3189 = vmatpush1.bf16.msra.mxu0 0
    %3190 = vmatprep.subr.bf16.mxu0 0
    %3191 = vmatpush1.bf16.msra.mxu0 0
    %3192 = vmatprep.subr.bf16.mxu0 0
    %3193 = vmatpush1.bf16.msra.mxu0 0
    %3194 = vmatprep.subr.bf16.mxu0 0
    %3195 = vmatpush1.bf16.msra.mxu0 0
    %3196 = vmatprep.subr.bf16.mxu0 0
    %3197 = vmatpush1.bf16.msra.mxu0 0
    %3198 = vmatprep.subr.bf16.mxu0 0
    %3199 = vmatpush1.bf16.msra.mxu0 0
    %3200 = vmatprep.subr.bf16.mxu0 0
    %3201 = vmatpush1.bf16.msra.mxu0 0
    %3202 = vmatprep.subr.bf16.mxu0 0
    %3203 = vmatpush1.bf16.msra.mxu0 0
    %3204 = vmatprep.subr.bf16.mxu0 0
    %3205 = vmatpush1.bf16.msra.mxu0 0
    %3206 = vmatprep.mubr.bf16.mxu0 0
    %3207 = vmatmul.mubr.bf16.gmra.mrb[0].mxu0 %v1772
    %v3208 = vpop.f32.mrb[0].mxu0
    %v3209 = vadd.f32 0.0, %v3208
    %v3210 = vpop.f32.mrb[0].mxu0
    %v3211 = vadd.f32 0.0, %v3210
    %v3212 = vpop.f32.mrb[0].mxu0
    %v3213 = vadd.f32 0.0, %v3212
    %v3214 = vpop.f32.mrb[0].mxu0
    %v3215 = vadd.f32 0.0, %v3214
    %3216 = vmatprep.mubr.bf16.mxu0 0
    %3217 = vmatmul.mubr.bf16.gmra.mrb[0].mxu0 %v1775
    %v3218 = vpop.f32.mrb[0].mxu0
    %v3219 = vadd.f32 0.0, %v3218
    %v3220 = vpop.f32.mrb[0].mxu0
    %v3221 = vadd.f32 0.0, %v3220
    %v3222 = vpop.f32.mrb[0].mxu0
    %v3223 = vadd.f32 0.0, %v3222
    %v3224 = vpop.f32.mrb[0].mxu0
    %v3225 = vadd.f32 0.0, %v3224
    %3226 = vdwg.mxu0
    %v3227 = vadd.f32 %v3142, %v3209
    %v3228 = vadd.f32 %v3144, %v3211
    %v3229 = vadd.f32 %v3146, %v3213
    %v3230 = vadd.f32 %v3148, %v3215
    %v3231 = vadd.f32 %v3152, %v3219
    %v3232 = vadd.f32 %v3154, %v3221
    %v3233 = vadd.f32 %v3156, %v3223
    %v3234 = vadd.f32 %v3158, %v3225
    %3235 = vrot.lane.b32.xlu0 %v3032, 125
    %v3236 = vpop.permute.xlu0 %3235
    %3237 = vrot.lane.b32.xlu0 %v3033, 125
    %v3238 = vpop.permute.xlu0 %3237
    %3239 = vrot.lane.b32.xlu0 %v3034, 125
    %v3240 = vpop.permute.xlu0 %3239
    %3241 = vrot.lane.b32.xlu0 %v3035, 125
    %v3242 = vpop.permute.xlu0 %3241
    %v3243 = vsel %vm1856, %v3236, %v3238
    %v3244 = vsel %vm1856, %v3240, %v3242
    %3249 = vmatprep.subr.bf16.mxu0 %v3238
    %3250 = vmatpush1.bf16.msra.mxu0 %v3243
    %3251 = vmatprep.subr.bf16.mxu0 %v3242
    %3252 = vmatpush1.bf16.msra.mxu0 %v3244
    %3253 = vmatprep.subr.bf16.mxu0 0
    %3254 = vmatpush1.bf16.msra.mxu0 0
    %3255 = vmatprep.subr.bf16.mxu0 0
    %3256 = vmatpush1.bf16.msra.mxu0 0
    %3257 = vmatprep.subr.bf16.mxu0 0
    %3258 = vmatpush1.bf16.msra.mxu0 0
    %3259 = vmatprep.subr.bf16.mxu0 0
    %3260 = vmatpush1.bf16.msra.mxu0 0
    %3261 = vmatprep.subr.bf16.mxu0 0
    %3262 = vmatpush1.bf16.msra.mxu0 0
    %3263 = vmatprep.subr.bf16.mxu0 0
    %3264 = vmatpush1.bf16.msra.mxu0 0
    %3265 = vmatprep.subr.bf16.mxu0 0
    %3266 = vmatpush1.bf16.msra.mxu0 0
    %3267 = vmatprep.subr.bf16.mxu0 0
    %3268 = vmatpush1.bf16.msra.mxu0 0
    %3269 = vmatprep.subr.bf16.mxu0 0
    %3270 = vmatpush1.bf16.msra.mxu0 0
    %3271 = vmatprep.subr.bf16.mxu0 0
    %3272 = vmatpush1.bf16.msra.mxu0 0
    %3273 = vmatprep.subr.bf16.mxu0 0
    %3274 = vmatpush1.bf16.msra.mxu0 0
    %3275 = vmatprep.subr.bf16.mxu0 0
    %3276 = vmatpush1.bf16.msra.mxu0 0
    %3277 = vmatprep.subr.bf16.mxu0 0
    %3278 = vmatpush1.bf16.msra.mxu0 0
    %3279 = vmatprep.subr.bf16.mxu0 0
    %3280 = vmatpush1.bf16.msra.mxu0 0
    %3281 = vmatprep.mubr.bf16.mxu0 0
    %3282 = vmatmul.mubr.bf16.gmra.mrb[0].mxu0 %v1864
    %v3283 = vpop.f32.mrb[0].mxu0
    %v3284 = vadd.f32 0.0, %v3283
    %v3285 = vpop.f32.mrb[0].mxu0
    %v3286 = vadd.f32 0.0, %v3285
    %v3287 = vpop.f32.mrb[0].mxu0
    %v3288 = vadd.f32 0.0, %v3287
    %v3289 = vpop.f32.mrb[0].mxu0
    %v3290 = vadd.f32 0.0, %v3289
    %3291 = vmatprep.mubr.bf16.mxu0 0
    %3292 = vmatmul.mubr.bf16.gmra.mrb[0].mxu0 %v1867
    %v3293 = vpop.f32.mrb[0].mxu0
    %v3294 = vadd.f32 0.0, %v3293
    %v3295 = vpop.f32.mrb[0].mxu0
    %v3296 = vadd.f32 0.0, %v3295
    %v3297 = vpop.f32.mrb[0].mxu0
    %v3298 = vadd.f32 0.0, %v3297
    %v3299 = vpop.f32.mrb[0].mxu0
    %v3300 = vadd.f32 0.0, %v3299
    %3301 = vdwg.mxu0
    %v3302 = vadd.f32 %v3227, %v3284
    %v3303 = vadd.f32 %v3228, %v3286
    %v3304 = vadd.f32 %v3229, %v3288
    %v3305 = vadd.f32 %v3230, %v3290
    %v3306 = vadd.f32 %v3231, %v3294
    %v3307 = vadd.f32 %v3232, %v3296
    %v3308 = vadd.f32 %v3233, %v3298
    %v3309 = vadd.f32 %v3234, %v3300
    %3310 = vrot.lane.b32.xlu0 %v3032, 124
    %v3311 = vpop.permute.xlu0 %3310
    %3312 = vrot.lane.b32.xlu0 %v3033, 124
    %v3313 = vpop.permute.xlu0 %3312
    %3314 = vrot.lane.b32.xlu0 %v3034, 124
    %v3315 = vpop.permute.xlu0 %3314
    %3316 = vrot.lane.b32.xlu0 %v3035, 124
    %v3317 = vpop.permute.xlu0 %3316
    %v3318 = vsel %vm1948, %v3311, %v3313
    %v3319 = vsel %vm1948, %v3315, %v3317
    %3324 = vmatprep.subr.bf16.mxu0 %v3313
    %3325 = vmatpush1.bf16.msra.mxu0 %v3318
    %3326 = vmatprep.subr.bf16.mxu0 %v3317
    %3327 = vmatpush1.bf16.msra.mxu0 %v3319
    %3328 = vmatprep.subr.bf16.mxu0 0
    %3329 = vmatpush1.bf16.msra.mxu0 0
    %3330 = vmatprep.subr.bf16.mxu0 0
    %3331 = vmatpush1.bf16.msra.mxu0 0
    %3332 = vmatprep.subr.bf16.mxu0 0
    %3333 = vmatpush1.bf16.msra.mxu0 0
    %3334 = vmatprep.subr.bf16.mxu0 0
    %3335 = vmatpush1.bf16.msra.mxu0 0
    %3336 = vmatprep.subr.bf16.mxu0 0
    %3337 = vmatpush1.bf16.msra.mxu0 0
    %3338 = vmatprep.subr.bf16.mxu0 0
    %3339 = vmatpush1.bf16.msra.mxu0 0
    %3340 = vmatprep.subr.bf16.mxu0 0
    %3341 = vmatpush1.bf16.msra.mxu0 0
    %3342 = vmatprep.subr.bf16.mxu0 0
    %3343 = vmatpush1.bf16.msra.mxu0 0
    %3344 = vmatprep.subr.bf16.mxu0 0
    %3345 = vmatpush1.bf16.msra.mxu0 0
    %3346 = vmatprep.subr.bf16.mxu0 0
    %3347 = vmatpush1.bf16.msra.mxu0 0
    %3348 = vmatprep.subr.bf16.mxu0 0
    %3349 = vmatpush1.bf16.msra.mxu0 0
    %3350 = vmatprep.subr.bf16.mxu0 0
    %3351 = vmatpush1.bf16.msra.mxu0 0
    %3352 = vmatprep.subr.bf16.mxu0 0
    %3353 = vmatpush1.bf16.msra.mxu0 0
    %3354 = vmatprep.subr.bf16.mxu0 0
    %3355 = vmatpush1.bf16.msra.mxu0 0
    %3356 = vmatprep.mubr.bf16.mxu0 0
    %3357 = vmatmul.mubr.bf16.gmra.mrb[0].mxu0 %v1956
    %v3358 = vpop.f32.mrb[0].mxu0
    %v3359 = vadd.f32 0.0, %v3358
    %v3360 = vpop.f32.mrb[0].mxu0
    %v3361 = vadd.f32 0.0, %v3360
    %v3362 = vpop.f32.mrb[0].mxu0
    %v3363 = vadd.f32 0.0, %v3362
    %v3364 = vpop.f32.mrb[0].mxu0
    %v3365 = vadd.f32 0.0, %v3364
    %3366 = vmatprep.mubr.bf16.mxu0 0
    %3367 = vmatmul.mubr.bf16.gmra.mrb[0].mxu0 %v1959
    %v3368 = vpop.f32.mrb[0].mxu0
    %v3369 = vadd.f32 0.0, %v3368
    %v3370 = vpop.f32.mrb[0].mxu0
    %v3371 = vadd.f32 0.0, %v3370
    %v3372 = vpop.f32.mrb[0].mxu0
    %v3373 = vadd.f32 0.0, %v3372
    %v3374 = vpop.f32.mrb[0].mxu0
    %v3375 = vadd.f32 0.0, %v3374
    %3376 = vdwg.mxu0
    %v3377 = vadd.f32 %v3302, %v3359
    %v3378 = vadd.f32 %v3303, %v3361
    %v3379 = vadd.f32 %v3304, %v3363
    %v3380 = vadd.f32 %v3305, %v3365
    %v3381 = vadd.f32 %v3306, %v3369
    %v3382 = vadd.f32 %v3307, %v3371
    %v3383 = vadd.f32 %v3308, %v3373
    %v3384 = vadd.f32 %v3309, %v3375
    %3385 = vrot.lane.b32.xlu0 %v3032, 123
    %v3386 = vpop.permute.xlu0 %3385
    %3387 = vrot.lane.b32.xlu0 %v3033, 123
    %v3388 = vpop.permute.xlu0 %3387
    %3389 = vrot.lane.b32.xlu0 %v3034, 123
    %v3390 = vpop.permute.xlu0 %3389
    %3391 = vrot.lane.b32.xlu0 %v3035, 123
    %v3392 = vpop.permute.xlu0 %3391
    %v3393 = vsel %vm2040, %v3386, %v3388
    %v3394 = vsel %vm2040, %v3390, %v3392
    %3399 = vmatprep.subr.bf16.mxu0 %v3388
    %3400 = vmatpush1.bf16.msra.mxu0 %v3393
    %3401 = vmatprep.subr.bf16.mxu0 %v3392
    %3402 = vmatpush1.bf16.msra.mxu0 %v3394
    %3403 = vmatprep.subr.bf16.mxu0 0
    %3404 = vmatpush1.bf16.msra.mxu0 0
    %3405 = vmatprep.subr.bf16.mxu0 0
    %3406 = vmatpush1.bf16.msra.mxu0 0
    %3407 = vmatprep.subr.bf16.mxu0 0
    %3408 = vmatpush1.bf16.msra.mxu0 0
    %3409 = vmatprep.subr.bf16.mxu0 0
    %3410 = vmatpush1.bf16.msra.mxu0 0
    %3411 = vmatprep.subr.bf16.mxu0 0
    %3412 = vmatpush1.bf16.msra.mxu0 0
    %3413 = vmatprep.subr.bf16.mxu0 0
    %3414 = vmatpush1.bf16.msra.mxu0 0
    %3415 = vmatprep.subr.bf16.mxu0 0
    %3416 = vmatpush1.bf16.msra.mxu0 0
    %3417 = vmatprep.subr.bf16.mxu0 0
    %3418 = vmatpush1.bf16.msra.mxu0 0
    %3419 = vmatprep.subr.bf16.mxu0 0
    %3420 = vmatpush1.bf16.msra.mxu0 0
    %3421 = vmatprep.subr.bf16.mxu0 0
    %3422 = vmatpush1.bf16.msra.mxu0 0
    %3423 = vmatprep.subr.bf16.mxu0 0
    %3424 = vmatpush1.bf16.msra.mxu0 0
    %3425 = vmatprep.subr.bf16.mxu0 0
    %3426 = vmatpush1.bf16.msra.mxu0 0
    %3427 = vmatprep.subr.bf16.mxu0 0
    %3428 = vmatpush1.bf16.msra.mxu0 0
    %3429 = vmatprep.subr.bf16.mxu0 0
    %3430 = vmatpush1.bf16.msra.mxu0 0
    %3431 = vmatprep.mubr.bf16.mxu0 0
    %3432 = vmatmul.mubr.bf16.gmra.mrb[0].mxu0 %v2048
    %v3433 = vpop.f32.mrb[0].mxu0
    %v3434 = vadd.f32 0.0, %v3433
    %v3435 = vpop.f32.mrb[0].mxu0
    %v3436 = vadd.f32 0.0, %v3435
    %v3437 = vpop.f32.mrb[0].mxu0
    %v3438 = vadd.f32 0.0, %v3437
    %v3439 = vpop.f32.mrb[0].mxu0
    %v3440 = vadd.f32 0.0, %v3439
    %3441 = vmatprep.mubr.bf16.mxu0 0
    %3442 = vmatmul.mubr.bf16.gmra.mrb[0].mxu0 %v2051
    %v3443 = vpop.f32.mrb[0].mxu0
    %v3444 = vadd.f32 0.0, %v3443
    %v3445 = vpop.f32.mrb[0].mxu0
    %v3446 = vadd.f32 0.0, %v3445
    %v3447 = vpop.f32.mrb[0].mxu0
    %v3448 = vadd.f32 0.0, %v3447
    %v3449 = vpop.f32.mrb[0].mxu0
    %v3450 = vadd.f32 0.0, %v3449
    %3451 = vdwg.mxu0
    %v3452 = vadd.f32 %v3377, %v3434
    %v3453 = vadd.f32 %v3378, %v3436
    %v3454 = vadd.f32 %v3379, %v3438
    %v3455 = vadd.f32 %v3380, %v3440
    %v3456 = vadd.f32 %v3381, %v3444
    %v3457 = vadd.f32 %v3382, %v3446
    %v3458 = vadd.f32 %v3383, %v3448
    %v3459 = vadd.f32 %v3384, %v3450
    %3460 = vrot.lane.b32.xlu0 %v3032, 122
    %v3461 = vpop.permute.xlu0 %3460
    %3462 = vrot.lane.b32.xlu0 %v3033, 122
    %v3463 = vpop.permute.xlu0 %3462
    %3464 = vrot.lane.b32.xlu0 %v3034, 122
    %v3465 = vpop.permute.xlu0 %3464
    %3466 = vrot.lane.b32.xlu0 %v3035, 122
    %v3467 = vpop.permute.xlu0 %3466
    %v3468 = vsel %vm2132, %v3461, %v3463
    %v3469 = vsel %vm2132, %v3465, %v3467
    %3474 = vmatprep.subr.bf16.mxu0 %v3463
    %3475 = vmatpush1.bf16.msra.mxu0 %v3468
    %3476 = vmatprep.subr.bf16.mxu0 %v3467
    %3477 = vmatpush1.bf16.msra.mxu0 %v3469
    %3478 = vmatprep.subr.bf16.mxu0 0
    %3479 = vmatpush1.bf16.msra.mxu0 0
    %3480 = vmatprep.subr.bf16.mxu0 0
    %3481 = vmatpush1.bf16.msra.mxu0 0
    %3482 = vmatprep.subr.bf16.mxu0 0
    %3483 = vmatpush1.bf16.msra.mxu0 0
    %3484 = vmatprep.subr.bf16.mxu0 0
    %3485 = vmatpush1.bf16.msra.mxu0 0
    %3486 = vmatprep.subr.bf16.mxu0 0
    %3487 = vmatpush1.bf16.msra.mxu0 0
    %3488 = vmatprep.subr.bf16.mxu0 0
    %3489 = vmatpush1.bf16.msra.mxu0 0
    %3490 = vmatprep.subr.bf16.mxu0 0
    %3491 = vmatpush1.bf16.msra.mxu0 0
    %3492 = vmatprep.subr.bf16.mxu0 0
    %3493 = vmatpush1.bf16.msra.mxu0 0
    %3494 = vmatprep.subr.bf16.mxu0 0
    %3495 = vmatpush1.bf16.msra.mxu0 0
    %3496 = vmatprep.subr.bf16.mxu0 0
    %3497 = vmatpush1.bf16.msra.mxu0 0
    %3498 = vmatprep.subr.bf16.mxu0 0
    %3499 = vmatpush1.bf16.msra.mxu0 0
    %3500 = vmatprep.subr.bf16.mxu0 0
    %3501 = vmatpush1.bf16.msra.mxu0 0
    %3502 = vmatprep.subr.bf16.mxu0 0
    %3503 = vmatpush1.bf16.msra.mxu0 0
    %3504 = vmatprep.subr.bf16.mxu0 0
    %3505 = vmatpush1.bf16.msra.mxu0 0
    %3506 = vmatprep.mubr.bf16.mxu0 0
    %3507 = vmatmul.mubr.bf16.gmra.mrb[0].mxu0 %v2140
    %v3508 = vpop.f32.mrb[0].mxu0
    %v3509 = vadd.f32 0.0, %v3508
    %v3510 = vpop.f32.mrb[0].mxu0
    %v3511 = vadd.f32 0.0, %v3510
    %v3512 = vpop.f32.mrb[0].mxu0
    %v3513 = vadd.f32 0.0, %v3512
    %v3514 = vpop.f32.mrb[0].mxu0
    %v3515 = vadd.f32 0.0, %v3514
    %3516 = vmatprep.mubr.bf16.mxu0 0
    %3517 = vmatmul.mubr.bf16.gmra.mrb[0].mxu0 %v2143
    %v3518 = vpop.f32.mrb[0].mxu0
    %v3519 = vadd.f32 0.0, %v3518
    %v3520 = vpop.f32.mrb[0].mxu0
    %v3521 = vadd.f32 0.0, %v3520
    %v3522 = vpop.f32.mrb[0].mxu0
    %v3523 = vadd.f32 0.0, %v3522
    %v3524 = vpop.f32.mrb[0].mxu0
    %v3525 = vadd.f32 0.0, %v3524
    %3526 = vdwg.mxu0
    %v3527 = vadd.f32 %v3452, %v3509
    %v3528 = vadd.f32 %v3453, %v3511
    %v3529 = vadd.f32 %v3454, %v3513
    %v3530 = vadd.f32 %v3455, %v3515
    %v3531 = vadd.f32 %v3456, %v3519
    %v3532 = vadd.f32 %v3457, %v3521
    %v3533 = vadd.f32 %v3458, %v3523
    %v3534 = vadd.f32 %v3459, %v3525
    %3535 = vrot.lane.b32.xlu0 %v3032, 121
    %v3536 = vpop.permute.xlu0 %3535
    %3537 = vrot.lane.b32.xlu0 %v3033, 121
    %v3538 = vpop.permute.xlu0 %3537
    %3539 = vrot.lane.b32.xlu0 %v3034, 121
    %v3540 = vpop.permute.xlu0 %3539
    %3541 = vrot.lane.b32.xlu0 %v3035, 121
    %v3542 = vpop.permute.xlu0 %3541
    %v3543 = vsel %vm2224, %v3536, %v3538
    %v3544 = vsel %vm2224, %v3540, %v3542
    %3549 = vmatprep.subr.bf16.mxu0 %v3538
    %3550 = vmatpush1.bf16.msra.mxu0 %v3543
    %3551 = vmatprep.subr.bf16.mxu0 %v3542
    %3552 = vmatpush1.bf16.msra.mxu0 %v3544
    %3553 = vmatprep.subr.bf16.mxu0 0
    %3554 = vmatpush1.bf16.msra.mxu0 0
    %3555 = vmatprep.subr.bf16.mxu0 0
    %3556 = vmatpush1.bf16.msra.mxu0 0
    %3557 = vmatprep.subr.bf16.mxu0 0
    %3558 = vmatpush1.bf16.msra.mxu0 0
    %3559 = vmatprep.subr.bf16.mxu0 0
    %3560 = vmatpush1.bf16.msra.mxu0 0
    %3561 = vmatprep.subr.bf16.mxu0 0
    %3562 = vmatpush1.bf16.msra.mxu0 0
    %3563 = vmatprep.subr.bf16.mxu0 0
    %3564 = vmatpush1.bf16.msra.mxu0 0
    %3565 = vmatprep.subr.bf16.mxu0 0
    %3566 = vmatpush1.bf16.msra.mxu0 0
    %3567 = vmatprep.subr.bf16.mxu0 0
    %3568 = vmatpush1.bf16.msra.mxu0 0
    %3569 = vmatprep.subr.bf16.mxu0 0
    %3570 = vmatpush1.bf16.msra.mxu0 0
    %3571 = vmatprep.subr.bf16.mxu0 0
    %3572 = vmatpush1.bf16.msra.mxu0 0
    %3573 = vmatprep.subr.bf16.mxu0 0
    %3574 = vmatpush1.bf16.msra.mxu0 0
    %3575 = vmatprep.subr.bf16.mxu0 0
    %3576 = vmatpush1.bf16.msra.mxu0 0
    %3577 = vmatprep.subr.bf16.mxu0 0
    %3578 = vmatpush1.bf16.msra.mxu0 0
    %3579 = vmatprep.subr.bf16.mxu0 0
    %3580 = vmatpush1.bf16.msra.mxu0 0
    %3581 = vmatprep.mubr.bf16.mxu0 0
    %3582 = vmatmul.mubr.bf16.gmra.mrb[0].mxu0 %v2232
    %v3583 = vpop.f32.mrb[0].mxu0
    %v3584 = vadd.f32 0.0, %v3583
    %v3585 = vpop.f32.mrb[0].mxu0
    %v3586 = vadd.f32 0.0, %v3585
    %v3587 = vpop.f32.mrb[0].mxu0
    %v3588 = vadd.f32 0.0, %v3587
    %v3589 = vpop.f32.mrb[0].mxu0
    %v3590 = vadd.f32 0.0, %v3589
    %3591 = vmatprep.mubr.bf16.mxu0 0
    %3592 = vmatmul.mubr.bf16.gmra.mrb[0].mxu0 %v2235
    %v3593 = vpop.f32.mrb[0].mxu0
    %v3594 = vadd.f32 0.0, %v3593
    %v3595 = vpop.f32.mrb[0].mxu0
    %v3596 = vadd.f32 0.0, %v3595
    %v3597 = vpop.f32.mrb[0].mxu0
    %v3598 = vadd.f32 0.0, %v3597
    %v3599 = vpop.f32.mrb[0].mxu0
    %v3600 = vadd.f32 0.0, %v3599
    %3601 = vdwg.mxu0
    %v3602 = vadd.f32 %v3527, %v3584
    %v3603 = vadd.f32 %v3528, %v3586
    %v3604 = vadd.f32 %v3529, %v3588
    %v3605 = vadd.f32 %v3530, %v3590
    %v3606 = vadd.f32 %v3531, %v3594
    %v3607 = vadd.f32 %v3532, %v3596
    %v3608 = vadd.f32 %v3533, %v3598
    %v3609 = vadd.f32 %v3534, %v3600
    %3610 = vrot.lane.b32.xlu0 %v3032, 120
    %v3611 = vpop.permute.xlu0 %3610
    %3612 = vrot.lane.b32.xlu0 %v3033, 120
    %v3613 = vpop.permute.xlu0 %3612
    %3614 = vrot.lane.b32.xlu0 %v3034, 120
    %v3615 = vpop.permute.xlu0 %3614
    %3616 = vrot.lane.b32.xlu0 %v3035, 120
    %v3617 = vpop.permute.xlu0 %3616
    %v3618 = vsel %vm2316, %v3611, %v3613
    %v3619 = vsel %vm2316, %v3615, %v3617
    %3624 = vmatprep.subr.bf16.mxu0 %v3613
    %3625 = vmatpush1.bf16.msra.mxu0 %v3618
    %3626 = vmatprep.subr.bf16.mxu0 %v3617
    %3627 = vmatpush1.bf16.msra.mxu0 %v3619
    %3628 = vmatprep.subr.bf16.mxu0 0
    %3629 = vmatpush1.bf16.msra.mxu0 0
    %3630 = vmatprep.subr.bf16.mxu0 0
    %3631 = vmatpush1.bf16.msra.mxu0 0
    %3632 = vmatprep.subr.bf16.mxu0 0
    %3633 = vmatpush1.bf16.msra.mxu0 0
    %3634 = vmatprep.subr.bf16.mxu0 0
    %3635 = vmatpush1.bf16.msra.mxu0 0
    %3636 = vmatprep.subr.bf16.mxu0 0
    %3637 = vmatpush1.bf16.msra.mxu0 0
    %3638 = vmatprep.subr.bf16.mxu0 0
    %3639 = vmatpush1.bf16.msra.mxu0 0
    %3640 = vmatprep.subr.bf16.mxu0 0
    %3641 = vmatpush1.bf16.msra.mxu0 0
    %3642 = vmatprep.subr.bf16.mxu0 0
    %3643 = vmatpush1.bf16.msra.mxu0 0
    %3644 = vmatprep.subr.bf16.mxu0 0
    %3645 = vmatpush1.bf16.msra.mxu0 0
    %3646 = vmatprep.subr.bf16.mxu0 0
    %3647 = vmatpush1.bf16.msra.mxu0 0
    %3648 = vmatprep.subr.bf16.mxu0 0
    %3649 = vmatpush1.bf16.msra.mxu0 0
    %3650 = vmatprep.subr.bf16.mxu0 0
    %3651 = vmatpush1.bf16.msra.mxu0 0
    %3652 = vmatprep.subr.bf16.mxu0 0
    %3653 = vmatpush1.bf16.msra.mxu0 0
    %3654 = vmatprep.subr.bf16.mxu0 0
    %3655 = vmatpush1.bf16.msra.mxu0 0
    %3656 = vmatprep.mubr.bf16.mxu0 0
    %3657 = vmatmul.mubr.bf16.gmra.mrb[0].mxu0 %v2324
    %v3658 = vpop.f32.mrb[0].mxu0
    %v3659 = vadd.f32 0.0, %v3658
    %v3660 = vpop.f32.mrb[0].mxu0
    %v3661 = vadd.f32 0.0, %v3660
    %v3662 = vpop.f32.mrb[0].mxu0
    %v3663 = vadd.f32 0.0, %v3662
    %v3664 = vpop.f32.mrb[0].mxu0
    %v3665 = vadd.f32 0.0, %v3664
    %3666 = vmatprep.mubr.bf16.mxu0 0
    %3667 = vmatmul.mubr.bf16.gmra.mrb[0].mxu0 %v2327
    %v3668 = vpop.f32.mrb[0].mxu0
    %v3669 = vadd.f32 0.0, %v3668
    %v3670 = vpop.f32.mrb[0].mxu0
    %v3671 = vadd.f32 0.0, %v3670
    %v3672 = vpop.f32.mrb[0].mxu0
    %v3673 = vadd.f32 0.0, %v3672
    %v3674 = vpop.f32.mrb[0].mxu0
    %v3675 = vadd.f32 0.0, %v3674
    %3676 = vdwg.mxu0
    %v3677 = vadd.f32 %v3602, %v3659
    %v3678 = vadd.f32 %v3603, %v3661
    %v3679 = vadd.f32 %v3604, %v3663
    %v3680 = vadd.f32 %v3605, %v3665
    %v3681 = vadd.f32 %v3606, %v3669
    %v3682 = vadd.f32 %v3607, %v3671
    %v3683 = vadd.f32 %v3608, %v3673
    %v3684 = vadd.f32 %v3609, %v3675
    %3685 = vrot.lane.b32.xlu0 %v3032, 119
    %v3686 = vpop.permute.xlu0 %3685
    %3687 = vrot.lane.b32.xlu0 %v3033, 119
    %v3688 = vpop.permute.xlu0 %3687
    %3689 = vrot.lane.b32.xlu0 %v3034, 119
    %v3690 = vpop.permute.xlu0 %3689
    %3691 = vrot.lane.b32.xlu0 %v3035, 119
    %v3692 = vpop.permute.xlu0 %3691
    %v3693 = vsel %vm2408, %v3686, %v3688
    %v3694 = vsel %vm2408, %v3690, %v3692
    %3699 = vmatprep.subr.bf16.mxu0 %v3688
    %3700 = vmatpush1.bf16.msra.mxu0 %v3693
    %3701 = vmatprep.subr.bf16.mxu0 %v3692
    %3702 = vmatpush1.bf16.msra.mxu0 %v3694
    %3703 = vmatprep.subr.bf16.mxu0 0
    %3704 = vmatpush1.bf16.msra.mxu0 0
    %3705 = vmatprep.subr.bf16.mxu0 0
    %3706 = vmatpush1.bf16.msra.mxu0 0
    %3707 = vmatprep.subr.bf16.mxu0 0
    %3708 = vmatpush1.bf16.msra.mxu0 0
    %3709 = vmatprep.subr.bf16.mxu0 0
    %3710 = vmatpush1.bf16.msra.mxu0 0
    %3711 = vmatprep.subr.bf16.mxu0 0
    %3712 = vmatpush1.bf16.msra.mxu0 0
    %3713 = vmatprep.subr.bf16.mxu0 0
    %3714 = vmatpush1.bf16.msra.mxu0 0
    %3715 = vmatprep.subr.bf16.mxu0 0
    %3716 = vmatpush1.bf16.msra.mxu0 0
    %3717 = vmatprep.subr.bf16.mxu0 0
    %3718 = vmatpush1.bf16.msra.mxu0 0
    %3719 = vmatprep.subr.bf16.mxu0 0
    %3720 = vmatpush1.bf16.msra.mxu0 0
    %3721 = vmatprep.subr.bf16.mxu0 0
    %3722 = vmatpush1.bf16.msra.mxu0 0
    %3723 = vmatprep.subr.bf16.mxu0 0
    %3724 = vmatpush1.bf16.msra.mxu0 0
    %3725 = vmatprep.subr.bf16.mxu0 0
    %3726 = vmatpush1.bf16.msra.mxu0 0
    %3727 = vmatprep.subr.bf16.mxu0 0
    %3728 = vmatpush1.bf16.msra.mxu0 0
    %3729 = vmatprep.subr.bf16.mxu0 0
    %3730 = vmatpush1.bf16.msra.mxu0 0
    %3731 = vmatprep.mubr.bf16.mxu0 0
    %3732 = vmatmul.mubr.bf16.gmra.mrb[0].mxu0 %v2416
    %v3733 = vpop.f32.mrb[0].mxu0
    %v3734 = vadd.f32 0.0, %v3733
    %v3735 = vpop.f32.mrb[0].mxu0
    %v3736 = vadd.f32 0.0, %v3735
    %v3737 = vpop.f32.mrb[0].mxu0
    %v3738 = vadd.f32 0.0, %v3737
    %v3739 = vpop.f32.mrb[0].mxu0
    %v3740 = vadd.f32 0.0, %v3739
    %3741 = vmatprep.mubr.bf16.mxu0 0
    %3742 = vmatmul.mubr.bf16.gmra.mrb[0].mxu0 %v2419
    %v3743 = vpop.f32.mrb[0].mxu0
    %v3744 = vadd.f32 0.0, %v3743
    %v3745 = vpop.f32.mrb[0].mxu0
    %v3746 = vadd.f32 0.0, %v3745
    %v3747 = vpop.f32.mrb[0].mxu0
    %v3748 = vadd.f32 0.0, %v3747
    %v3749 = vpop.f32.mrb[0].mxu0
    %v3750 = vadd.f32 0.0, %v3749
    %3751 = vdwg.mxu0
    %v3752 = vadd.f32 %v3677, %v3734
    %v3753 = vadd.f32 %v3678, %v3736
    %v3754 = vadd.f32 %v3679, %v3738
    %v3755 = vadd.f32 %v3680, %v3740
    %v3756 = vadd.f32 %v3681, %v3744
    %v3757 = vadd.f32 %v3682, %v3746
    %v3758 = vadd.f32 %v3683, %v3748
    %v3759 = vadd.f32 %v3684, %v3750
    %3760 = vrot.lane.b32.xlu0 %v3032, 118
    %v3761 = vpop.permute.xlu0 %3760
    %3762 = vrot.lane.b32.xlu0 %v3033, 118
    %v3763 = vpop.permute.xlu0 %3762
    %3764 = vrot.lane.b32.xlu0 %v3034, 118
    %v3765 = vpop.permute.xlu0 %3764
    %3766 = vrot.lane.b32.xlu0 %v3035, 118
    %v3767 = vpop.permute.xlu0 %3766
    %v3768 = vsel %vm2500, %v3761, %v3763
    %v3769 = vsel %vm2500, %v3765, %v3767
    %3774 = vmatprep.subr.bf16.mxu0 %v3763
    %3775 = vmatpush1.bf16.msra.mxu0 %v3768
    %3776 = vmatprep.subr.bf16.mxu0 %v3767
    %3777 = vmatpush1.bf16.msra.mxu0 %v3769
    %3778 = vmatprep.subr.bf16.mxu0 0
    %3779 = vmatpush1.bf16.msra.mxu0 0
    %3780 = vmatprep.subr.bf16.mxu0 0
    %3781 = vmatpush1.bf16.msra.mxu0 0
    %3782 = vmatprep.subr.bf16.mxu0 0
    %3783 = vmatpush1.bf16.msra.mxu0 0
    %3784 = vmatprep.subr.bf16.mxu0 0
    %3785 = vmatpush1.bf16.msra.mxu0 0
    %3786 = vmatprep.subr.bf16.mxu0 0
    %3787 = vmatpush1.bf16.msra.mxu0 0
    %3788 = vmatprep.subr.bf16.mxu0 0
    %3789 = vmatpush1.bf16.msra.mxu0 0
    %3790 = vmatprep.subr.bf16.mxu0 0
    %3791 = vmatpush1.bf16.msra.mxu0 0
    %3792 = vmatprep.subr.bf16.mxu0 0
    %3793 = vmatpush1.bf16.msra.mxu0 0
    %3794 = vmatprep.subr.bf16.mxu0 0
    %3795 = vmatpush1.bf16.msra.mxu0 0
    %3796 = vmatprep.subr.bf16.mxu0 0
    %3797 = vmatpush1.bf16.msra.mxu0 0
    %3798 = vmatprep.subr.bf16.mxu0 0
    %3799 = vmatpush1.bf16.msra.mxu0 0
    %3800 = vmatprep.subr.bf16.mxu0 0
    %3801 = vmatpush1.bf16.msra.mxu0 0
    %3802 = vmatprep.subr.bf16.mxu0 0
    %3803 = vmatpush1.bf16.msra.mxu0 0
    %3804 = vmatprep.subr.bf16.mxu0 0
    %3805 = vmatpush1.bf16.msra.mxu0 0
    %3806 = vmatprep.mubr.bf16.mxu0 0
    %3807 = vmatmul.mubr.bf16.gmra.mrb[0].mxu0 %v2508
    %v3808 = vpop.f32.mrb[0].mxu0
    %v3809 = vadd.f32 0.0, %v3808
    %v3810 = vpop.f32.mrb[0].mxu0
    %v3811 = vadd.f32 0.0, %v3810
    %v3812 = vpop.f32.mrb[0].mxu0
    %v3813 = vadd.f32 0.0, %v3812
    %v3814 = vpop.f32.mrb[0].mxu0
    %v3815 = vadd.f32 0.0, %v3814
    %3816 = vmatprep.mubr.bf16.mxu0 0
    %3817 = vmatmul.mubr.bf16.gmra.mrb[0].mxu0 %v2511
    %v3818 = vpop.f32.mrb[0].mxu0
    %v3819 = vadd.f32 0.0, %v3818
    %v3820 = vpop.f32.mrb[0].mxu0
    %v3821 = vadd.f32 0.0, %v3820
    %v3822 = vpop.f32.mrb[0].mxu0
    %v3823 = vadd.f32 0.0, %v3822
    %v3824 = vpop.f32.mrb[0].mxu0
    %v3825 = vadd.f32 0.0, %v3824
    %3826 = vdwg.mxu0
    %v3827 = vadd.f32 %v3752, %v3809
    %v3828 = vadd.f32 %v3753, %v3811
    %v3829 = vadd.f32 %v3754, %v3813
    %v3830 = vadd.f32 %v3755, %v3815
    %v3831 = vadd.f32 %v3756, %v3819
    %v3832 = vadd.f32 %v3757, %v3821
    %v3833 = vadd.f32 %v3758, %v3823
    %v3834 = vadd.f32 %v3759, %v3825
    %3835 = vrot.lane.b32.xlu0 %v3032, 117
    %v3836 = vpop.permute.xlu0 %3835
    %3837 = vrot.lane.b32.xlu0 %v3033, 117
    %v3838 = vpop.permute.xlu0 %3837
    %3839 = vrot.lane.b32.xlu0 %v3034, 117
    %v3840 = vpop.permute.xlu0 %3839
    %3841 = vrot.lane.b32.xlu0 %v3035, 117
    %v3842 = vpop.permute.xlu0 %3841
    %v3843 = vsel %vm2592, %v3836, %v3838
    %v3844 = vsel %vm2592, %v3840, %v3842
    %3849 = vmatprep.subr.bf16.mxu0 %v3838
    %3850 = vmatpush1.bf16.msra.mxu0 %v3843
    %3851 = vmatprep.subr.bf16.mxu0 %v3842
    %3852 = vmatpush1.bf16.msra.mxu0 %v3844
    %3853 = vmatprep.subr.bf16.mxu0 0
    %3854 = vmatpush1.bf16.msra.mxu0 0
    %3855 = vmatprep.subr.bf16.mxu0 0
    %3856 = vmatpush1.bf16.msra.mxu0 0
    %3857 = vmatprep.subr.bf16.mxu0 0
    %3858 = vmatpush1.bf16.msra.mxu0 0
    %3859 = vmatprep.subr.bf16.mxu0 0
    %3860 = vmatpush1.bf16.msra.mxu0 0
    %3861 = vmatprep.subr.bf16.mxu0 0
    %3862 = vmatpush1.bf16.msra.mxu0 0
    %3863 = vmatprep.subr.bf16.mxu0 0
    %3864 = vmatpush1.bf16.msra.mxu0 0
    %3865 = vmatprep.subr.bf16.mxu0 0
    %3866 = vmatpush1.bf16.msra.mxu0 0
    %3867 = vmatprep.subr.bf16.mxu0 0
    %3868 = vmatpush1.bf16.msra.mxu0 0
    %3869 = vmatprep.subr.bf16.mxu0 0
    %3870 = vmatpush1.bf16.msra.mxu0 0
    %3871 = vmatprep.subr.bf16.mxu0 0
    %3872 = vmatpush1.bf16.msra.mxu0 0
    %3873 = vmatprep.subr.bf16.mxu0 0
    %3874 = vmatpush1.bf16.msra.mxu0 0
    %3875 = vmatprep.subr.bf16.mxu0 0
    %3876 = vmatpush1.bf16.msra.mxu0 0
    %3877 = vmatprep.subr.bf16.mxu0 0
    %3878 = vmatpush1.bf16.msra.mxu0 0
    %3879 = vmatprep.subr.bf16.mxu0 0
    %3880 = vmatpush1.bf16.msra.mxu0 0
    %3881 = vmatprep.mubr.bf16.mxu0 0
    %3882 = vmatmul.mubr.bf16.gmra.mrb[0].mxu0 %v2600
    %v3883 = vpop.f32.mrb[0].mxu0
    %v3884 = vadd.f32 0.0, %v3883
    %v3885 = vpop.f32.mrb[0].mxu0
    %v3886 = vadd.f32 0.0, %v3885
    %v3887 = vpop.f32.mrb[0].mxu0
    %v3888 = vadd.f32 0.0, %v3887
    %v3889 = vpop.f32.mrb[0].mxu0
    %v3890 = vadd.f32 0.0, %v3889
    %3891 = vmatprep.mubr.bf16.mxu0 0
    %3892 = vmatmul.mubr.bf16.gmra.mrb[0].mxu0 %v2603
    %v3893 = vpop.f32.mrb[0].mxu0
    %v3894 = vadd.f32 0.0, %v3893
    %v3895 = vpop.f32.mrb[0].mxu0
    %v3896 = vadd.f32 0.0, %v3895
    %v3897 = vpop.f32.mrb[0].mxu0
    %v3898 = vadd.f32 0.0, %v3897
    %v3899 = vpop.f32.mrb[0].mxu0
    %v3900 = vadd.f32 0.0, %v3899
    %3901 = vdwg.mxu0
    %v3902 = vadd.f32 %v3827, %v3884
    %v3903 = vadd.f32 %v3828, %v3886
    %v3904 = vadd.f32 %v3829, %v3888
    %v3905 = vadd.f32 %v3830, %v3890
    %v3906 = vadd.f32 %v3831, %v3894
    %v3907 = vadd.f32 %v3832, %v3896
    %v3908 = vadd.f32 %v3833, %v3898
    %v3909 = vadd.f32 %v3834, %v3900
    %3910 = vrot.lane.b32.xlu0 %v3032, 116
    %v3911 = vpop.permute.xlu0 %3910
    %3912 = vrot.lane.b32.xlu0 %v3033, 116
    %v3913 = vpop.permute.xlu0 %3912
    %3914 = vrot.lane.b32.xlu0 %v3034, 116
    %v3915 = vpop.permute.xlu0 %3914
    %3916 = vrot.lane.b32.xlu0 %v3035, 116
    %v3917 = vpop.permute.xlu0 %3916
    %v3918 = vsel %vm2684, %v3911, %v3913
    %v3919 = vsel %vm2684, %v3915, %v3917
    %3924 = vmatprep.subr.bf16.mxu0 %v3913
    %3925 = vmatpush1.bf16.msra.mxu0 %v3918
    %3926 = vmatprep.subr.bf16.mxu0 %v3917
    %3927 = vmatpush1.bf16.msra.mxu0 %v3919
    %3928 = vmatprep.subr.bf16.mxu0 0
    %3929 = vmatpush1.bf16.msra.mxu0 0
    %3930 = vmatprep.subr.bf16.mxu0 0
    %3931 = vmatpush1.bf16.msra.mxu0 0
    %3932 = vmatprep.subr.bf16.mxu0 0
    %3933 = vmatpush1.bf16.msra.mxu0 0
    %3934 = vmatprep.subr.bf16.mxu0 0
    %3935 = vmatpush1.bf16.msra.mxu0 0
    %3936 = vmatprep.subr.bf16.mxu0 0
    %3937 = vmatpush1.bf16.msra.mxu0 0
    %3938 = vmatprep.subr.bf16.mxu0 0
    %3939 = vmatpush1.bf16.msra.mxu0 0
    %3940 = vmatprep.subr.bf16.mxu0 0
    %3941 = vmatpush1.bf16.msra.mxu0 0
    %3942 = vmatprep.subr.bf16.mxu0 0
    %3943 = vmatpush1.bf16.msra.mxu0 0
    %3944 = vmatprep.subr.bf16.mxu0 0
    %3945 = vmatpush1.bf16.msra.mxu0 0
    %3946 = vmatprep.subr.bf16.mxu0 0
    %3947 = vmatpush1.bf16.msra.mxu0 0
    %3948 = vmatprep.subr.bf16.mxu0 0
    %3949 = vmatpush1.bf16.msra.mxu0 0
    %3950 = vmatprep.subr.bf16.mxu0 0
    %3951 = vmatpush1.bf16.msra.mxu0 0
    %3952 = vmatprep.subr.bf16.mxu0 0
    %3953 = vmatpush1.bf16.msra.mxu0 0
    %3954 = vmatprep.subr.bf16.mxu0 0
    %3955 = vmatpush1.bf16.msra.mxu0 0
    %3956 = vmatprep.mubr.bf16.mxu0 0
    %3957 = vmatmul.mubr.bf16.gmra.mrb[0].mxu0 %v2692
    %v3958 = vpop.f32.mrb[0].mxu0
    %v3959 = vadd.f32 0.0, %v3958
    %v3960 = vpop.f32.mrb[0].mxu0
    %v3961 = vadd.f32 0.0, %v3960
    %v3962 = vpop.f32.mrb[0].mxu0
    %v3963 = vadd.f32 0.0, %v3962
    %v3964 = vpop.f32.mrb[0].mxu0
    %v3965 = vadd.f32 0.0, %v3964
    %3966 = vmatprep.mubr.bf16.mxu0 0
    %3967 = vmatmul.mubr.bf16.gmra.mrb[0].mxu0 %v2695
    %v3968 = vpop.f32.mrb[0].mxu0
    %v3969 = vadd.f32 0.0, %v3968
    %v3970 = vpop.f32.mrb[0].mxu0
    %v3971 = vadd.f32 0.0, %v3970
    %v3972 = vpop.f32.mrb[0].mxu0
    %v3973 = vadd.f32 0.0, %v3972
    %v3974 = vpop.f32.mrb[0].mxu0
    %v3975 = vadd.f32 0.0, %v3974
    %3976 = vdwg.mxu0
    %v3977 = vadd.f32 %v3902, %v3959
    %v3978 = vadd.f32 %v3903, %v3961
    %v3979 = vadd.f32 %v3904, %v3963
    %v3980 = vadd.f32 %v3905, %v3965
    %v3981 = vadd.f32 %v3906, %v3969
    %v3982 = vadd.f32 %v3907, %v3971
    %v3983 = vadd.f32 %v3908, %v3973
    %v3984 = vadd.f32 %v3909, %v3975
    %3985 = vrot.lane.b32.xlu0 %v3032, 115
    %v3986 = vpop.permute.xlu0 %3985
    %3987 = vrot.lane.b32.xlu0 %v3033, 115
    %v3988 = vpop.permute.xlu0 %3987
    %3989 = vrot.lane.b32.xlu0 %v3034, 115
    %v3990 = vpop.permute.xlu0 %3989
    %3991 = vrot.lane.b32.xlu0 %v3035, 115
    %v3992 = vpop.permute.xlu0 %3991
    %v3993 = vsel %vm2776, %v3986, %v3988
    %v3994 = vsel %vm2776, %v3990, %v3992
    %3999 = vmatprep.subr.bf16.mxu0 %v3988
    %4000 = vmatpush1.bf16.msra.mxu0 %v3993
    %4001 = vmatprep.subr.bf16.mxu0 %v3992
    %4002 = vmatpush1.bf16.msra.mxu0 %v3994
    %4003 = vmatprep.subr.bf16.mxu0 0
    %4004 = vmatpush1.bf16.msra.mxu0 0
    %4005 = vmatprep.subr.bf16.mxu0 0
    %4006 = vmatpush1.bf16.msra.mxu0 0
    %4007 = vmatprep.subr.bf16.mxu0 0
    %4008 = vmatpush1.bf16.msra.mxu0 0
    %4009 = vmatprep.subr.bf16.mxu0 0
    %4010 = vmatpush1.bf16.msra.mxu0 0
    %4011 = vmatprep.subr.bf16.mxu0 0
    %4012 = vmatpush1.bf16.msra.mxu0 0
    %4013 = vmatprep.subr.bf16.mxu0 0
    %4014 = vmatpush1.bf16.msra.mxu0 0
    %4015 = vmatprep.subr.bf16.mxu0 0
    %4016 = vmatpush1.bf16.msra.mxu0 0
    %4017 = vmatprep.subr.bf16.mxu0 0
    %4018 = vmatpush1.bf16.msra.mxu0 0
    %4019 = vmatprep.subr.bf16.mxu0 0
    %4020 = vmatpush1.bf16.msra.mxu0 0
    %4021 = vmatprep.subr.bf16.mxu0 0
    %4022 = vmatpush1.bf16.msra.mxu0 0
    %4023 = vmatprep.subr.bf16.mxu0 0
    %4024 = vmatpush1.bf16.msra.mxu0 0
    %4025 = vmatprep.subr.bf16.mxu0 0
    %4026 = vmatpush1.bf16.msra.mxu0 0
    %4027 = vmatprep.subr.bf16.mxu0 0
    %4028 = vmatpush1.bf16.msra.mxu0 0
    %4029 = vmatprep.subr.bf16.mxu0 0
    %4030 = vmatpush1.bf16.msra.mxu0 0
    %4031 = vmatprep.mubr.bf16.mxu0 0
    %4032 = vmatmul.mubr.bf16.gmra.mrb[0].mxu0 %v2784
    %v4033 = vpop.f32.mrb[0].mxu0
    %v4034 = vadd.f32 0.0, %v4033
    %v4035 = vpop.f32.mrb[0].mxu0
    %v4036 = vadd.f32 0.0, %v4035
    %v4037 = vpop.f32.mrb[0].mxu0
    %v4038 = vadd.f32 0.0, %v4037
    %v4039 = vpop.f32.mrb[0].mxu0
    %v4040 = vadd.f32 0.0, %v4039
    %4041 = vmatprep.mubr.bf16.mxu0 0
    %4042 = vmatmul.mubr.bf16.gmra.mrb[0].mxu0 %v2787
    %v4043 = vpop.f32.mrb[0].mxu0
    %v4044 = vadd.f32 0.0, %v4043
    %v4045 = vpop.f32.mrb[0].mxu0
    %v4046 = vadd.f32 0.0, %v4045
    %v4047 = vpop.f32.mrb[0].mxu0
    %v4048 = vadd.f32 0.0, %v4047
    %v4049 = vpop.f32.mrb[0].mxu0
    %v4050 = vadd.f32 0.0, %v4049
    %4051 = vdwg.mxu0
    %v4052 = vadd.f32 %v3977, %v4034
    %v4053 = vadd.f32 %v3978, %v4036
    %v4054 = vadd.f32 %v3979, %v4038
    %v4055 = vadd.f32 %v3980, %v4040
    %v4056 = vadd.f32 %v3981, %v4044
    %v4057 = vadd.f32 %v3982, %v4046
    %v4058 = vadd.f32 %v3983, %v4048
    %v4059 = vadd.f32 %v3984, %v4050
    %4060 = vrot.lane.b32.xlu0 %v3032, 114
    %v4061 = vpop.permute.xlu0 %4060
    %4062 = vrot.lane.b32.xlu0 %v3033, 114
    %v4063 = vpop.permute.xlu0 %4062
    %4064 = vrot.lane.b32.xlu0 %v3034, 114
    %v4065 = vpop.permute.xlu0 %4064
    %4066 = vrot.lane.b32.xlu0 %v3035, 114
    %v4067 = vpop.permute.xlu0 %4066
    %v4068 = vsel %vm2868, %v4061, %v4063
    %v4069 = vsel %vm2868, %v4065, %v4067
    %4074 = vmatprep.subr.bf16.mxu0 %v4063
    %4075 = vmatpush1.bf16.msra.mxu0 %v4068
    %4076 = vmatprep.subr.bf16.mxu0 %v4067
    %4077 = vmatpush1.bf16.msra.mxu0 %v4069
    %4078 = vmatprep.subr.bf16.mxu0 0
    %4079 = vmatpush1.bf16.msra.mxu0 0
    %4080 = vmatprep.subr.bf16.mxu0 0
    %4081 = vmatpush1.bf16.msra.mxu0 0
    %4082 = vmatprep.subr.bf16.mxu0 0
    %4083 = vmatpush1.bf16.msra.mxu0 0
    %4084 = vmatprep.subr.bf16.mxu0 0
    %4085 = vmatpush1.bf16.msra.mxu0 0
    %4086 = vmatprep.subr.bf16.mxu0 0
    %4087 = vmatpush1.bf16.msra.mxu0 0
    %4088 = vmatprep.subr.bf16.mxu0 0
    %4089 = vmatpush1.bf16.msra.mxu0 0
    %4090 = vmatprep.subr.bf16.mxu0 0
    %4091 = vmatpush1.bf16.msra.mxu0 0
    %4092 = vmatprep.subr.bf16.mxu0 0
    %4093 = vmatpush1.bf16.msra.mxu0 0
    %4094 = vmatprep.subr.bf16.mxu0 0
    %4095 = vmatpush1.bf16.msra.mxu0 0
    %4096 = vmatprep.subr.bf16.mxu0 0
    %4097 = vmatpush1.bf16.msra.mxu0 0
    %4098 = vmatprep.subr.bf16.mxu0 0
    %4099 = vmatpush1.bf16.msra.mxu0 0
    %4100 = vmatprep.subr.bf16.mxu0 0
    %4101 = vmatpush1.bf16.msra.mxu0 0
    %4102 = vmatprep.subr.bf16.mxu0 0
    %4103 = vmatpush1.bf16.msra.mxu0 0
    %4104 = vmatprep.subr.bf16.mxu0 0
    %4105 = vmatpush1.bf16.msra.mxu0 0
    %4106 = vmatprep.mubr.bf16.mxu0 0
    %4107 = vmatmul.mubr.bf16.gmra.mrb[0].mxu0 %v2876
    %v4108 = vpop.f32.mrb[0].mxu0
    %v4109 = vadd.f32 0.0, %v4108
    %v4110 = vpop.f32.mrb[0].mxu0
    %v4111 = vadd.f32 0.0, %v4110
    %v4112 = vpop.f32.mrb[0].mxu0
    %v4113 = vadd.f32 0.0, %v4112
    %v4114 = vpop.f32.mrb[0].mxu0
    %v4115 = vadd.f32 0.0, %v4114
    %4116 = vmatprep.mubr.bf16.mxu0 0
    %4117 = vmatmul.mubr.bf16.gmra.mrb[0].mxu0 %v2879
    %v4118 = vpop.f32.mrb[0].mxu0
    %v4119 = vadd.f32 0.0, %v4118
    %v4120 = vpop.f32.mrb[0].mxu0
    %v4121 = vadd.f32 0.0, %v4120
    %v4122 = vpop.f32.mrb[0].mxu0
    %v4123 = vadd.f32 0.0, %v4122
    %v4124 = vpop.f32.mrb[0].mxu0
    %v4125 = vadd.f32 0.0, %v4124
    %4126 = vdwg.mxu0
    %v4127 = vadd.f32 %v4052, %v4109
    %v4128 = vadd.f32 %v4053, %v4111
    %v4129 = vadd.f32 %v4054, %v4113
    %v4130 = vadd.f32 %v4055, %v4115
    %v4131 = vadd.f32 %v4056, %v4119
    %v4132 = vadd.f32 %v4057, %v4121
    %v4133 = vadd.f32 %v4058, %v4123
    %v4134 = vadd.f32 %v4059, %v4125
    %v4135 = vadd.f32 %v4127, %v2945
    %v4136 = vadd.f32 %v4128, %v2945
    %v4137 = vadd.f32 %v4129, %v2950
    %v4138 = vadd.f32 %v4130, %v2950
    %v4139 = vadd.f32 %v4131, %v2955
    %v4140 = vadd.f32 %v4132, %v2955
    %v4141 = vadd.f32 %v4133, %v2960
    %v4142 = vadd.f32 %v4134, %v2960
    %vm4143 = vcmp.gt.f32.partialorder %v4135, 0.0
    %vm4144 = vcmp.gt.f32.partialorder %v4136, 0.0
    %vm4145 = vcmp.gt.f32.partialorder %v4137, 0.0
    %vm4146 = vcmp.gt.f32.partialorder %v4138, 0.0
    %vm4147 = vcmp.gt.f32.partialorder %v4139, 0.0
    %vm4148 = vcmp.gt.f32.partialorder %v4140, 0.0
    %vm4149 = vcmp.gt.f32.partialorder %v4141, 0.0
    %vm4150 = vcmp.gt.f32.partialorder %v4142, 0.0
    %v4151 = vmin.f32 %v4135, 0.0
    %v4152 = vmin.f32 %v4136, 0.0
    %v4153 = vmin.f32 %v4137, 0.0
    %v4154 = vmin.f32 %v4138, 0.0
    %v4155 = vmin.f32 %v4139, 0.0
    %v4156 = vmin.f32 %v4140, 0.0
    %v4157 = vmin.f32 %v4141, 0.0
    %v4158 = vmin.f32 %v4142, 0.0
    %v4159 = vmul.f32 %v4151, 1.442695
    %v4160 = vpow.pop %v4159
    %v4161 = vmul.f32 %v4152, 1.442695
    %v4162 = vpow.pop %v4161
    %v4163 = vmul.f32 %v4153, 1.442695
    %v4164 = vpow.pop %v4163
    %v4165 = vmul.f32 %v4154, 1.442695
    %v4166 = vpow.pop %v4165
    %v4167 = vmul.f32 %v4155, 1.442695
    %v4168 = vpow.pop %v4167
    %v4169 = vmul.f32 %v4156, 1.442695
    %v4170 = vpow.pop %v4169
    %v4171 = vmul.f32 %v4157, 1.442695
    %v4172 = vpow.pop %v4171
    %v4173 = vmul.f32 %v4158, 1.442695
    %v4174 = vpow.pop %v4173
    %v4175 = vsub.f32 %v4160, 1.0
    %v4176 = vsub.f32 %v4162, 1.0
    %v4177 = vsub.f32 %v4164, 1.0
    %v4178 = vsub.f32 %v4166, 1.0
    %v4179 = vsub.f32 %v4168, 1.0
    %v4180 = vsub.f32 %v4170, 1.0
    %v4181 = vsub.f32 %v4172, 1.0
    %v4182 = vsub.f32 %v4174, 1.0
    %v4183 = vsel %vm4143, %v4135, %v4175
    %v4184 = vsel %vm4144, %v4136, %v4176
    %v4185 = vsel %vm4145, %v4137, %v4177
    %v4186 = vsel %vm4146, %v4138, %v4178
    %v4187 = vsel %vm4147, %v4139, %v4179
    %v4188 = vsel %vm4148, %v4140, %v4180
    %v4189 = vsel %vm4149, %v4141, %v4181
    %v4190 = vsel %vm4150, %v4142, %v4182
    %v4191 = vpack.c.bf16 %v4185, %v4183
    %v4192 = vpack.c.bf16 %v4186, %v4184
    %v4193 = vpack.c.bf16 %v4189, %v4187
    %v4194 = vpack.c.bf16 %v4190, %v4188
    %s4195 = smul.addr %s3029, 8
    %s4196 = scalar_lea.vmem [#allocation4], %s4195
    %4197 = vst [vmem:[%s4196] sm:$0xff] %v4191
    %4198 = vst.msk [vmem:[%s4196 + $0x8] sm:$0xff] %vm3025, %v4192
    %4199 = vst [vmem:[%s4196 + $0x10] sm:$0xff] %v4193
    %4200 = vst.msk [vmem:[%s4196 + $0x18] sm:$0xff] %vm3025, %v4194
    %v4201 = vld [vmem:[#allocation4] sm:$0xff]
    %v4202 = vld [vmem:[#allocation4 + $0x8] sm:$0xff]
    %v4203 = vld [vmem:[#allocation4 + $0x10] sm:$0xff]
    %v4204 = vld [vmem:[#allocation4 + $0x18] sm:$0xff]
    %v4205 = vld [vmem:[#allocation4 + $0x20] sm:$0xff]
    %v4206 = vld [vmem:[#allocation4 + $0x28] sm:$0xff]
    %v4207 = vld [vmem:[#allocation4 + $0x30] sm:$0xff]
    %v4208 = vld [vmem:[#allocation4 + $0x38] sm:$0xff]
    %v4209 = vld [vmem:[%s6] sm:$0xf]
    %v4210 = vld [vmem:[%s6 + $0x4] sm:$0xf]
    %v4211 = vld [vmem:[%s6 + $0x8] sm:$0xf]
    %v4212 = vld [vmem:[%s6 + $0xc] sm:$0xf]
    %v4213 = vld [vmem:[%s6 + $0x10] sm:$0xf]
    %v4214 = vld [vmem:[%s6 + $0x14] sm:$0xf]
    %v4215 = vld [vmem:[%s6 + $0x18] sm:$0xf]
    %v4216 = vld [vmem:[%s6 + $0x1c] sm:$0xf]
    %v4217 = vld [vmem:[%s6 + $0x20] sm:$0xf]
    %v4218 = vld [vmem:[%s6 + $0x24] sm:$0xf]
    %v4219 = vld [vmem:[%s6 + $0x28] sm:$0xf]
    %v4220 = vld [vmem:[%s6 + $0x2c] sm:$0xf]
    %v4221 = vld [vmem:[%s6 + $0x30] sm:$0xf]
    %v4222 = vld [vmem:[%s6 + $0x34] sm:$0xf]
    %v4223 = vld [vmem:[%s6 + $0x38] sm:$0xf]
    %v4224 = vld [vmem:[%s6 + $0x3c] sm:$0xf]
    %v4225 = vld [vmem:[%s6 + $0x40] sm:$0xf]
    %v4226 = vld [vmem:[%s6 + $0x44] sm:$0xf]
    %v4227 = vld [vmem:[%s6 + $0x48] sm:$0xf]
    %v4228 = vld [vmem:[%s6 + $0x4c] sm:$0xf]
    %v4229 = vld [vmem:[%s6 + $0x50] sm:$0xf]
    %v4230 = vld [vmem:[%s6 + $0x54] sm:$0xf]
    %v4231 = vld [vmem:[%s6 + $0x58] sm:$0xf]
    %v4232 = vld [vmem:[%s6 + $0x5c] sm:$0x3]
    %v4257 = vunpack.c.l.b16 %v4209
    %v4258 = vunpack.c.l.b16 %v4210
    %v4259 = vunpack.c.l.b16 %v4211
    %v4260 = vunpack.c.l.b16 %v4212
    %v4261 = vunpack.c.l.b16 %v4213
    %v4262 = vunpack.c.l.b16 %v4214
    %v4263 = vunpack.c.l.b16 %v4215
    %v4264 = vunpack.c.l.b16 %v4216
    %v4265 = vunpack.c.l.b16 %v4217
    %v4266 = vunpack.c.l.b16 %v4218
    %v4267 = vunpack.c.l.b16 %v4219
    %v4268 = vunpack.c.l.b16 %v4220
    %v4269 = vunpack.c.l.b16 %v4221
    %v4270 = vunpack.c.l.b16 %v4222
    %v4271 = vunpack.c.l.b16 %v4223
    %v4272 = vunpack.c.l.b16 %v4224
    %v4273 = vunpack.c.l.b16 %v4225
    %v4274 = vunpack.c.l.b16 %v4226
    %v4275 = vunpack.c.l.b16 %v4227
    %v4276 = vunpack.c.l.b16 %v4228
    %v4277 = vunpack.c.l.b16 %v4229
    %v4278 = vunpack.c.l.b16 %v4230
    %v4279 = vunpack.c.l.b16 %v4231
    %v4280 = vunpack.c.l.b16 %v4232
    %v4281 = vpack.c.b16 %v4258, %v4257
    %v4282 = vpack.c.b16 %v4260, %v4259
    %v4283 = vpack.c.b16 %v4262, %v4261
    %v4284 = vpack.c.b16 %v4264, %v4263
    %v4285 = vpack.c.b16 %v4266, %v4265
    %v4286 = vpack.c.b16 %v4268, %v4267
    %v4287 = vpack.c.b16 %v4270, %v4269
    %v4288 = vpack.c.b16 %v4272, %v4271
    %v4289 = vpack.c.b16 %v4274, %v4273
    %v4290 = vpack.c.b16 %v4276, %v4275
    %v4291 = vpack.c.b16 %v4278, %v4277
    %v4292 = vpack.c.b16 %v4280, %v4279
    %v4305 = vsel %vm3025, %v4202, 0
    %v4308 = vsel %vm3025, %v4204, 0
    %v4311 = vsel %vm3025, %v4206, 0
    %v4314 = vsel %vm3025, %v4208, 0
    %vm4316 = vcmask 1044480
    %vm4317 = vcmask 1045504
    %v4318 = vsel %vm4316, 4294967295, 65535
    %v4319 = vsel %vm4317, %v4318, 0
    %v4321 = vand.u32 %v4292, %v4319
    %4323 = vmatprep.subr.bf16.mxu0 0
    %4324 = vmatpush1.bf16.msra.mxu0 %v4281
    %4325 = vmatprep.subr.bf16.mxu0 0
    %4326 = vmatpush1.bf16.msra.mxu0 %v4282
    %4327 = vmatprep.subr.bf16.mxu0 0
    %4328 = vmatpush1.bf16.msra.mxu0 %v4283
    %4329 = vmatprep.subr.bf16.mxu0 0
    %4330 = vmatpush1.bf16.msra.mxu0 %v4284
    %4331 = vmatprep.subr.bf16.mxu0 0
    %4332 = vmatpush1.bf16.msra.mxu0 %v4285
    %4333 = vmatprep.subr.bf16.mxu0 0
    %4334 = vmatpush1.bf16.msra.mxu0 %v4286
    %4335 = vmatprep.subr.bf16.mxu0 0
    %4336 = vmatpush1.bf16.msra.mxu0 %v4287
    %4337 = vmatprep.subr.bf16.mxu0 0
    %4338 = vmatpush1.bf16.msra.mxu0 %v4288
    %4339 = vmatprep.subr.bf16.mxu0 0
    %4340 = vmatpush1.bf16.msra.mxu0 %v4289
    %4341 = vmatprep.subr.bf16.mxu0 0
    %4342 = vmatpush1.bf16.msra.mxu0 %v4290
    %4343 = vmatprep.subr.bf16.mxu0 0
    %4344 = vmatpush1.bf16.msra.mxu0 %v4291
    %4345 = vmatprep.subr.bf16.mxu0 0
    %4346 = vmatpush1.bf16.msra.mxu0 %v4321
    %4347 = vmatprep.subr.bf16.mxu0 0
    %4348 = vmatpush1.bf16.msra.mxu0 0
    %4349 = vmatprep.subr.bf16.mxu0 0
    %4350 = vmatpush1.bf16.msra.mxu0 0
    %4351 = vmatprep.subr.bf16.mxu0 0
    %4352 = vmatpush1.bf16.msra.mxu0 0
    %4353 = vmatprep.subr.bf16.mxu0 0
    %4354 = vmatpush1.bf16.msra.mxu0 0
    %4355 = vmatprep.mubr.bf16.mxu0 %v4305
    %4356 = vmatmul.mubr.bf16.gmra.mrb[0].mxu0 %v4201
    %v4357 = vpop.f32.mrb[0].mxu0
    %v4358 = vadd.f32 0.0, %v4357
    %v4359 = vpop.f32.mrb[0].mxu0
    %v4360 = vpop.f32.mrb[0].mxu0
    %v4361 = vadd.f32 0.0, %v4360
    %v4362 = vpop.f32.mrb[0].mxu0
    %4363 = vmatprep.mubr.bf16.mxu0 %v4308
    %4364 = vmatmul.mubr.bf16.gmra.mrb[0].mxu0 %v4203
    %v4365 = vpop.f32.mrb[0].mxu0
    %v4366 = vadd.f32 0.0, %v4365
    %v4367 = vpop.f32.mrb[0].mxu0
    %v4368 = vpop.f32.mrb[0].mxu0
    %v4369 = vadd.f32 0.0, %v4368
    %v4370 = vpop.f32.mrb[0].mxu0
    %4371 = vmatprep.mubr.bf16.mxu0 %v4311
    %4372 = vmatmul.mubr.bf16.gmra.mrb[0].mxu0 %v4205
    %v4373 = vpop.f32.mrb[0].mxu0
    %v4374 = vadd.f32 0.0, %v4373
    %v4375 = vpop.f32.mrb[0].mxu0
    %v4376 = vpop.f32.mrb[0].mxu0
    %v4377 = vadd.f32 0.0, %v4376
    %v4378 = vpop.f32.mrb[0].mxu0
    %4379 = vmatprep.mubr.bf16.mxu0 %v4314
    %4380 = vmatmul.mubr.bf16.gmra.mrb[0].mxu0 %v4207
    %v4381 = vpop.f32.mrb[0].mxu0
    %v4382 = vadd.f32 0.0, %v4381
    %v4383 = vpop.f32.mrb[0].mxu0
    %v4384 = vpop.f32.mrb[0].mxu0
    %v4385 = vadd.f32 0.0, %v4384
    %v4386 = vpop.f32.mrb[0].mxu0
    %4387 = vdwg.mxu0
    %v4388 = vld [vmem:[%s7] sm:$0xff]
    %v4389 = vld [vmem:[%s7 + $0x8] sm:$0xff]
    %v4390 = vld [vmem:[%s7 + $0x10] sm:$0xff]
    %v4391 = vld [vmem:[%s7 + $0x18] sm:$0xff]
    %v4392 = vld [vmem:[%s7 + $0x20] sm:$0xff]
    %v4393 = vld [vmem:[%s7 + $0x28] sm:$0xff]
    %v4394 = vld [vmem:[%s7 + $0x30] sm:$0xff]
    %v4395 = vld [vmem:[%s7 + $0x38] sm:$0xff]
    %v4396 = vmul.f32 %v4358, %v4388
    %v4397 = vmul.f32 %v4361, %v4389
    %v4398 = vmul.f32 %v4366, %v4390
    %v4399 = vmul.f32 %v4369, %v4391
    %v4400 = vmul.f32 %v4374, %v4388
    %v4401 = vmul.f32 %v4377, %v4389
    %v4402 = vmul.f32 %v4382, %v4390
    %v4403 = vmul.f32 %v4385, %v4391
    %vm4404 = vcmask 187392
    %v4405 = vsel %vm4404, %v4396, 0.0
    %4406 = vadd.xlane.f32.xlu0 %v4405
    %v4407 = vpop.xlane.xlu0 %4406
    %v4408 = vsel %vm4404, %v4397, 0.0
    %4409 = vadd.xlane.f32.xlu0 %v4408
    %v4410 = vpop.xlane.xlu0 %4409
    %v4411 = vsel %vm4404, %v4398, 0.0
    %4412 = vadd.xlane.f32.xlu0 %v4411
    %v4413 = vpop.xlane.xlu0 %4412
    %v4414 = vsel %vm4404, %v4399, 0.0
    %4415 = vadd.xlane.f32.xlu0 %v4414
    %v4416 = vpop.xlane.xlu0 %4415
    %v4417 = vsel %vm4404, %v4400, 0.0
    %4418 = vadd.xlane.f32.xlu0 %v4417
    %v4419 = vpop.xlane.xlu0 %4418
    %v4420 = vsel %vm4404, %v4401, 0.0
    %4421 = vadd.xlane.f32.xlu0 %v4420
    %v4422 = vpop.xlane.xlu0 %4421
    %v4423 = vsel %vm4404, %v4402, 0.0
    %4424 = vadd.xlane.f32.xlu0 %v4423
    %v4425 = vpop.xlane.xlu0 %4424
    %v4426 = vsel %vm4404, %v4403, 0.0
    %4427 = vadd.xlane.f32.xlu0 %v4426
    %v4428 = vpop.xlane.xlu0 %4427
    %v4429 = vadd.f32 %v4407, %v4410
    %v4430 = vadd.f32 %v4429, %v4413
    %v4431 = vadd.f32 %v4430, %v4416
    %v4432 = vrot.slane %v4431, 4
    %v4433 = vadd.f32 %v4431, %v4432
    %v4434 = vrot.slane %v4433, 2
    %v4435 = vadd.f32 %v4433, %v4434
    %v4436 = vrot.slane %v4435, 1
    %v4437 = vadd.f32 %v4435, %v4436
    %v4438 = vadd.f32 %v4419, %v4422
    %v4439 = vadd.f32 %v4438, %v4425
    %v4440 = vadd.f32 %v4439, %v4428
    %v4441 = vrot.slane %v4440, 4
    %v4442 = vadd.f32 %v4440, %v4441
    %v4443 = vrot.slane %v4442, 2
    %v4444 = vadd.f32 %v4442, %v4443
    %v4445 = vrot.slane %v4444, 1
    %v4446 = vadd.f32 %v4444, %v4445
    %v4447 = vmul.f32 %v4358, %v4392
    %v4448 = vmul.f32 %v4361, %v4393
    %v4449 = vmul.f32 %v4366, %v4394
    %v4450 = vmul.f32 %v4369, %v4395
    %v4451 = vmul.f32 %v4374, %v4392
    %v4452 = vmul.f32 %v4377, %v4393
    %v4453 = vmul.f32 %v4382, %v4394
    %v4454 = vmul.f32 %v4385, %v4395
    %v4455 = vsel %vm4404, %v4447, 0.0
    %4456 = vadd.xlane.f32.xlu0 %v4455
    %v4457 = vpop.xlane.xlu0 %4456
    %v4458 = vsel %vm4404, %v4448, 0.0
    %4459 = vadd.xlane.f32.xlu0 %v4458
    %v4460 = vpop.xlane.xlu0 %4459
    %v4461 = vsel %vm4404, %v4449, 0.0
    %4462 = vadd.xlane.f32.xlu0 %v4461
    %v4463 = vpop.xlane.xlu0 %4462
    %v4464 = vsel %vm4404, %v4450, 0.0
    %4465 = vadd.xlane.f32.xlu0 %v4464
    %v4466 = vpop.xlane.xlu0 %4465
    %v4467 = vsel %vm4404, %v4451, 0.0
    %4468 = vadd.xlane.f32.xlu0 %v4467
    %v4469 = vpop.xlane.xlu0 %4468
    %v4470 = vsel %vm4404, %v4452, 0.0
    %4471 = vadd.xlane.f32.xlu0 %v4470
    %v4472 = vpop.xlane.xlu0 %4471
    %v4473 = vsel %vm4404, %v4453, 0.0
    %4474 = vadd.xlane.f32.xlu0 %v4473
    %v4475 = vpop.xlane.xlu0 %4474
    %v4476 = vsel %vm4404, %v4454, 0.0
    %4477 = vadd.xlane.f32.xlu0 %v4476
    %v4478 = vpop.xlane.xlu0 %4477
    %v4479 = vadd.f32 %v4457, %v4460
    %v4480 = vadd.f32 %v4479, %v4463
    %v4481 = vadd.f32 %v4480, %v4466
    %v4482 = vrot.slane %v4481, 4
    %v4483 = vadd.f32 %v4481, %v4482
    %v4484 = vrot.slane %v4483, 2
    %v4485 = vadd.f32 %v4483, %v4484
    %v4486 = vrot.slane %v4485, 1
    %v4487 = vadd.f32 %v4485, %v4486
    %v4488 = vadd.f32 %v4469, %v4472
    %v4489 = vadd.f32 %v4488, %v4475
    %v4490 = vadd.f32 %v4489, %v4478
    %v4491 = vrot.slane %v4490, 4
    %v4492 = vadd.f32 %v4490, %v4491
    %v4493 = vrot.slane %v4492, 2
    %v4494 = vadd.f32 %v4492, %v4493
    %v4495 = vrot.slane %v4494, 1
    %v4496 = vadd.f32 %v4494, %v4495
    %vm4499 = vcmask 1041409
    %v4500 = vsel %vm4499, %v4446, %v4437
    %v4504 = vsel %vm4499, %v4496, %v4487
    %vm4506 = vcmask 7168
    %v4507 = vsel %vm4506, %v4500, %v4504
    %v4508 = vld [vmem:[%s8] sm:$0x1]
    %v4510 = vlaneseq
    %v4511 = vshrl.u32 %v4510, 7
    %v4512 = vsub.s32 0, %v4511
    %v4513 = vrot.slane %v4508, %v4512
    %v4515 = vadd.f32 %v4507, %v4513
    %vm4516 = vcmask 9216
    %4517 = vst.msk [vmem:[#allocation5] sm:$0x3] %vm4516, %v4515
    // Predicated region
    $region45: #{eeg_elu_forward.1} parent=1 // pred_check
      _
    $region46: #{eeg_elu_forward.1} parent=1 // pred_check_branch
      %4519 = sbr.rel (0) target = $region48
    $region47: #{eeg_elu_forward.1} parent=1 // pred_region
      %s4521 = ssub.s32 32, 32
      %4522 = vsyncadd [#allocation6], %s4521
      %s4524 = sshll.u32 [#allocation5], 4
      %s4525 = int_to_ptr.vmem [resolvable:$true] %s4524
      %4527 = dma.vmem_to_hbm [thread:$0]  %s4525, 32, %s9, [#allocation6]
    $region48: #{eeg_elu_forward.1} parent=1 // pred_fallthru
      _
    // Predicated region
    $region49: #{eeg_elu_forward.1} parent=1 // pred_check
      _
    $region50: #{eeg_elu_forward.1} parent=1 // pred_check_branch
      %4529 = sbr.rel (0) target = $region52
    $region51: #{eeg_elu_forward.1} parent=1 // pred_region
      %4530 = dma.done [#allocation6], 32
    $region52: #{eeg_elu_forward.1} parent=1 // pred_fallthru
      _
    %4531 = vsyncpa [#allocation6], 1

</llo_original>
